<compile_context>
chip_gen: v7x
topology: tpu7x:2x2x1
jax: 0.10.0
libtpu: 0.0.40
codegen_flags: <defaults>
</compile_context>

<pallas_src>
from functools import partial

import jax
import jax.numpy as jnp
from jax.experimental import pallas as pl
from jax.experimental.pallas import tpu as pltpu


def _act_kernel(x, act):
    # f32 elementwise activation inside the kernel.
    if act == "silu":
        # x * sigmoid(x); reciprocal on the EUP slot.
        return x * pl.reciprocal(1.0 + jnp.exp(-x), approx=True)
    if act == "relu":
        return jnp.maximum(x, 0.0)
    if act == "relu6":
        return jnp.clip(x, 0.0, 6.0)
    if act in (None, "identity"):
        return x
    raise ValueError(f"unsupported act: {act}")


def _act_ref(x, act):
    if act == "silu":
        return x * jax.nn.sigmoid(x)
    if act == "relu":
        return jnp.maximum(x, 0.0)
    if act == "relu6":
        return jnp.clip(x, 0.0, 6.0)
    if act in (None, "identity"):
        return x
    raise ValueError(f"unsupported act: {act}")


def _base_block2d_kernel(x_ref, w_ref, gamma_ref, beta_ref, mult_ref, add_ref,
                         out_ref, pad_ref, *, H, W, C_in, C_out, kH, kW, Nb,
                         eps, act):
    # x_ref:     (Nb, H, W, C_in)          NHWC tile (Nb batch elements)
    # w_ref:     (C_out, kH*kW*C_in)       bf16 im2col weight slab
    # gamma_ref: (W, C_in)                 LN weight, pre-broadcast over C_in
    # beta_ref:  (W, C_in)                 LN bias,   pre-broadcast over C_in
    # mult_ref:  (C_out, Nb)               folded scale-shift multiplier (f32)
    # add_ref:   (C_out, Nb)               folded scale-shift additive (f32)
    # out_ref:   (Nb, C_out, H*W)          lane-dense output tile
    # pad_ref:   (Nb, H+2pH, W+2pW, C_in)  f32 VMEM pad scratch
    pH, pW = (kH - 1) // 2, (kW - 1) // 2
    HW = H * W

    x = x_ref[...].astype(jnp.float32)                       # (Nb,H,W,C_in)

    # --- LayerNorm over the W axis (axis=2), var = E[x^2] - mean^2 ---
    mean = jnp.mean(x, axis=2, keepdims=True)                # (Nb,H,1,C_in)
    mean2 = jnp.mean(x * x, axis=2, keepdims=True)
    var = mean2 - mean * mean
    inv = jax.lax.rsqrt(var + eps)                           # EUP
    g = gamma_ref[...].astype(jnp.float32)[None, None, :, :]  # (1,1,W,C_in)
    b = beta_ref[...].astype(jnp.float32)[None, None, :, :]
    y = (x - mean) * inv * g + b

    # --- Dropout(p=0.0) == identity; activation ---
    a = _act_kernel(y, act)                                   # (Nb,H,W,C_in)

    # --- write activated tile into the zero-padded VMEM scratch (one pass) ---
    pad_ref[...] = jnp.zeros(pad_ref.shape, pad_ref.dtype)
    pad_ref[:, pH:pH + H, pW:pW + W, :] = a

    # --- im2col: kH*kW shifted slabs -> one K=kH*kW*C_in bf16 MXU contraction ---
    slabs = []
    for kh in range(kH):
        for kw in range(kW):
            s = pad_ref[:, kh:kh + H, kw:kw + W, :]           # (Nb,H,W,C_in)
            slabs.append(s.reshape(Nb * HW, C_in))
    patches = jnp.concatenate(slabs, axis=-1).astype(jnp.bfloat16)  # (Nb*HW, K)

    # out[co, m] = sum_k w[co,k] * patches[m,k]   (f32 accumulation)
    acc = jax.lax.dot_general(
        w_ref[...], patches,
        dimension_numbers=(((1,), (1,)), ((), ())),
        preferred_element_type=jnp.float32)                   # (C_out, Nb*HW)

    # --- folded scale/shift embedding, per batch element (lane-aligned slices) ---
    mult = mult_ref[...]                                       # (C_out, Nb) f32
    add = add_ref[...]
    for n in range(Nb):
        seg = acc[:, n * HW:(n + 1) * HW]                      # (C_out, HW)
        out_ref[n] = (seg * mult[:, n:n + 1] + add[:, n:n + 1]).astype(out_ref.dtype)


def _pick_block_n(N, H, W, C_in, budget_bytes=8 * 1024 * 1024):
    # Rough per-element VMEM footprint (lane padding of C_in to 128 included):
    # x tile + activation + pad scratch + patch matrix.
    lane_c = max(C_in, 128)
    per_elem = H * W * lane_c * 4 * 4
    nb = max(1, min(N, budget_bytes // max(per_elem, 1)))
    while N % nb:
        nb -= 1
    return nb


def base_block_2d(x, conv_weight, ln_gamma, ln_beta, scale_shift_list=None, *,
                  act="silu", eps=1e-5, scale_bias=1.0, block_n=None):
    """Fused Pallas implementation of BaseBlock2D.forward.

    x:           [N, C_in, H, W]  (W must equal in_channels: nn.LayerNorm(in_channels)
                                   applied directly to NCHW normalizes the W axis)
    conv_weight: [C_out, C_in, kH, kW], stride 1, 'same' padding, no bias
    ln_gamma/ln_beta: [in_channels] LayerNorm affine params
    scale_shift_list: optional list of (scale, shift), each reshapeable to [N, C_out];
                      out = out * (scale_bias + scale) + shift, applied sequentially
    returns [N, C_out, H, W]
    """
    N, C_in, H, W = x.shape
    C_out, C_in_w, kH, kW = conv_weight.shape
    assert C_in_w == C_in, "groups != 1 not supported"
    assert kH % 2 == 1 and kW % 2 == 1, "'same' padding needs odd kernel"
    assert ln_gamma.shape == (W,) and ln_beta.shape == (W,), \
        "LayerNorm(in_channels) on NCHW input requires W == in_channels"

    if block_n is None:
        block_n = _pick_block_n(N, H, W, C_in)
    assert N % block_n == 0, "block_n must divide N"

    pH, pW = (kH - 1) // 2, (kW - 1) // 2
    K = kH * kW * C_in
    HW = H * W

    # Fold the (possibly multi-entry) scale_shift_list into one affine, in f32.
    mult = jnp.ones((N, C_out), jnp.float32)
    add = jnp.zeros((N, C_out), jnp.float32)
    if scale_shift_list is not None:
        for scale, shift in scale_shift_list:
            s = jnp.asarray(scale, jnp.float32).reshape(N, C_out)
            t = jnp.asarray(shift, jnp.float32).reshape(N, C_out)
            mult = mult * (scale_bias + s)
            add = add * (scale_bias + s) + t
    mult_t = mult.T                                            # (C_out, N)
    add_t = add.T

    # Wrapper-side layout plumbing (cheap XLA ops).
    x_nhwc = jnp.transpose(x, (0, 2, 3, 1))                    # [N,H,W,C_in]
    # w2d[co, (kh*kW+kw)*C_in + ci] = conv_weight[co, ci, kh, kw]; bf16 operands.
    w2d = jnp.transpose(conv_weight, (0, 2, 3, 1)).reshape(C_out, K).astype(jnp.bfloat16)
    gamma_b = jnp.broadcast_to(ln_gamma.astype(jnp.float32)[:, None], (W, C_in))
    beta_b = jnp.broadcast_to(ln_beta.astype(jnp.float32)[:, None], (W, C_in))

    kernel = partial(_base_block2d_kernel, H=H, W=W, C_in=C_in, C_out=C_out,
                     kH=kH, kW=kW, Nb=block_n, eps=eps, act=act)

    out = pl.pallas_call(
        kernel,
        out_shape=jax.ShapeDtypeStruct((N, C_out, HW), x.dtype),
        grid=(N // block_n,),
        in_specs=[
            pl.BlockSpec((block_n, H, W, C_in), lambda i: (i, 0, 0, 0)),
            pl.BlockSpec((C_out, K), lambda i: (0, 0)),
            pl.BlockSpec((W, C_in), lambda i: (0, 0)),
            pl.BlockSpec((W, C_in), lambda i: (0, 0)),
            pl.BlockSpec((C_out, block_n), lambda i: (0, i)),
            pl.BlockSpec((C_out, block_n), lambda i: (0, i)),
        ],
        out_specs=pl.BlockSpec((block_n, C_out, HW), lambda i: (i, 0, 0)),
        scratch_shapes=[
            pltpu.VMEM((block_n, H + 2 * pH, W + 2 * pW, C_in), jnp.float32),
        ],
        compiler_params=pltpu.CompilerParams(
            dimension_semantics=("parallel",)),
        cost_estimate=pl.CostEstimate(
            flops=2 * N * K * C_out * HW,
            transcendentals=2 * N * H * W * C_in,
            bytes_accessed=4 * (N * H * W * C_in + N * C_out * HW)
                           + 2 * C_out * K + 8 * (W * C_in + N * C_out),
        ),
    )(x_nhwc, w2d, gamma_b, beta_b, mult_t, add_t)

    return out.reshape(N, C_out, H, W)


def _reference(x, conv_weight, ln_gamma, ln_beta, scale_shift_list=None, *,
               act="silu", eps=1e-5, scale_bias=1.0):
    """Pure-JAX f32 reference mirroring the PyTorch module."""
    mean = x.mean(axis=-1, keepdims=True)
    var = jnp.square(x - mean).mean(axis=-1, keepdims=True)
    y = (x - mean) / jnp.sqrt(var + eps) * ln_gamma + ln_beta
    a = _act_ref(y, act)                                      # dropout(p=0) = id
    conv = jax.lax.conv_general_dilated(
        a, conv_weight, window_strides=(1, 1), padding="SAME",
        dimension_numbers=("NCHW", "OIHW", "NCHW"))
    if scale_shift_list is not None:
        for scale, shift in scale_shift_list:
            conv = conv * (scale_bias + scale) + shift
    return conv


if __name__ == "__main__":
    # Small shapes consistent with the module. nn.LayerNorm(in_channels) applied
    # directly to an NCHW tensor requires W == in_channels.
    N, C_in, H, W = 2, 16, 16, 16
    C_out, ksz = 32, 3

    key = jax.random.PRNGKey(0)
    k1, k2, k3, k4, k5, k6 = jax.random.split(key, 6)
    x = jax.random.normal(k1, (N, C_in, H, W), jnp.float32)
    w = 0.1 * jax.random.normal(k2, (C_out, C_in, ksz, ksz), jnp.float32)
    gamma = 1.0 + 0.1 * jax.random.normal(k3, (C_in,), jnp.float32)
    beta = 0.1 * jax.random.normal(k4, (C_in,), jnp.float32)
    scale = 0.1 * jax.random.normal(k5, (N, C_out, 1, 1), jnp.float32)
    shift = 0.1 * jax.random.normal(k6, (N, C_out, 1, 1), jnp.float32)
    scale_shift_list = [(scale, shift)]

    out = base_block_2d(x, w, gamma, beta, scale_shift_list)
    out = jax.block_until_ready(out)

    ref = _reference(x, w, gamma, beta, scale_shift_list)
    assert out.shape == (N, C_out, H, W)
    err = float(jnp.max(jnp.abs(out - ref)))
    # Tolerance loosened for bf16 MXU operands (f32 accumulation) + approx reciprocal.
    assert jnp.allclose(out, ref, atol=5e-2, rtol=5e-2), f"max abs err {err}"

    print("KERNEL_OK")
</pallas_src>

<mosaic_0001>
module attributes {stable_mosaic.version = 11 : i64} {
  func.func @_base_block2d_kernel(%arg0: i32, %arg1: memref<2x16x16x16xf32, #tpu.memory_space<vmem>>, %arg2: memref<32x144xbf16, #tpu.memory_space<vmem>>, %arg3: memref<16x16xf32, #tpu.memory_space<vmem>>, %arg4: memref<16x16xf32, #tpu.memory_space<vmem>>, %arg5: memref<32x2xf32, #tpu.memory_space<vmem>>, %arg6: memref<32x2xf32, #tpu.memory_space<vmem>>, %arg7: memref<2x32x256xf32, #tpu.memory_space<vmem>>, %arg8: memref<2x18x18x16xf32, #tpu.memory_space<vmem>>) attributes {dimension_semantics = [#tpu.dimension_semantics<parallel>], iteration_bounds = array<i64: 1>, scalar_prefetch = 0 : i64, scratch_operands = 1 : i64, tpu.core_type = #tpu.core_type<tc>, window_params = [{transform_indices = @transform_0, window_bounds = array<i64: 2, 16, 16, 16>}, {pipeline_mode = #tpu.pipeline_mode<synchronous>, transform_indices = @transform_1, window_bounds = array<i64: 32, 144>}, {pipeline_mode = #tpu.pipeline_mode<synchronous>, transform_indices = @transform_2, window_bounds = array<i64: 16, 16>}, {pipeline_mode = #tpu.pipeline_mode<synchronous>, transform_indices = @transform_3, window_bounds = array<i64: 16, 16>}, {transform_indices = @transform_4, window_bounds = array<i64: 32, 2>}, {transform_indices = @transform_5, window_bounds = array<i64: 32, 2>}, {transform_indices = @transform_6, window_bounds = array<i64: 2, 32, 256>}]} {
    %c0 = arith.constant 0 : index
    %c0_0 = arith.constant 0 : index
    %c0_1 = arith.constant 0 : index
    %c0_2 = arith.constant 0 : index
    %0 = vector.load %arg1[%c0, %c0_0, %c0_1, %c0_2] : memref<2x16x16x16xf32, #tpu.memory_space<vmem>>, vector<2x16x16x16xf32>
    %cst = arith.constant dense<0.000000e+00> : vector<2x16x16xf32>
    %1 = vector.multi_reduction <add>, %0, %cst [2] : vector<2x16x16x16xf32> to vector<2x16x16xf32>
    %2 = vector.shape_cast %1 : vector<2x16x16xf32> to vector<2x16x1x16xf32>
    %cst_3 = arith.constant 1.600000e+01 : f32
    %3 = vector.broadcast %cst_3 : f32 to vector<2x16x1x16xf32>
    %4 = arith.divf %2, %3 : vector<2x16x1x16xf32>
    %5 = arith.mulf %0, %0 : vector<2x16x16x16xf32>
    %cst_4 = arith.constant dense<0.000000e+00> : vector<2x16x16xf32>
    %6 = vector.multi_reduction <add>, %5, %cst_4 [2] : vector<2x16x16x16xf32> to vector<2x16x16xf32>
    %7 = vector.shape_cast %6 : vector<2x16x16xf32> to vector<2x16x1x16xf32>
    %cst_5 = arith.constant 1.600000e+01 : f32
    %8 = vector.broadcast %cst_5 : f32 to vector<2x16x1x16xf32>
    %9 = arith.divf %7, %8 : vector<2x16x1x16xf32>
    %10 = arith.mulf %4, %4 : vector<2x16x1x16xf32>
    %11 = arith.subf %9, %10 : vector<2x16x1x16xf32>
    %cst_6 = arith.constant 9.99999974E-6 : f32
    %12 = vector.broadcast %cst_6 : f32 to vector<2x16x1x16xf32>
    %13 = arith.addf %11, %12 : vector<2x16x1x16xf32>
    %14 = math.rsqrt %13 : vector<2x16x1x16xf32>
    %c0_7 = arith.constant 0 : index
    %c0_8 = arith.constant 0 : index
    %15 = vector.load %arg3[%c0_7, %c0_8] : memref<16x16xf32, #tpu.memory_space<vmem>>, vector<16x16xf32>
    %16 = vector.shape_cast %15 : vector<16x16xf32> to vector<1x1x16x16xf32>
    %c0_9 = arith.constant 0 : index
    %c0_10 = arith.constant 0 : index
    %17 = vector.load %arg4[%c0_9, %c0_10] : memref<16x16xf32, #tpu.memory_space<vmem>>, vector<16x16xf32>
    %18 = vector.shape_cast %17 : vector<16x16xf32> to vector<1x1x16x16xf32>
    %19 = vector.broadcast %4 : vector<2x16x1x16xf32> to vector<2x16x16x16xf32>
    %20 = arith.subf %0, %19 : vector<2x16x16x16xf32>
    %21 = vector.broadcast %14 : vector<2x16x1x16xf32> to vector<2x16x16x16xf32>
    %22 = arith.mulf %20, %21 : vector<2x16x16x16xf32>
    %23 = vector.broadcast %16 : vector<1x1x16x16xf32> to vector<2x16x16x16xf32>
    %24 = arith.mulf %22, %23 : vector<2x16x16x16xf32>
    %25 = vector.broadcast %18 : vector<1x1x16x16xf32> to vector<2x16x16x16xf32>
    %26 = arith.addf %24, %25 : vector<2x16x16x16xf32>
    %cst_11 = arith.constant 0.000000e+00 : f32
    %27 = vector.broadcast %cst_11 : f32 to vector<2x16x16x16xf32>
    %28 = arith.subf %27, %26 : vector<2x16x16x16xf32>
    %29 = math.exp %28 : vector<2x16x16x16xf32>
    %cst_12 = arith.constant 1.000000e+00 : f32
    %30 = vector.broadcast %cst_12 : f32 to vector<2x16x16x16xf32>
    %31 = arith.addf %30, %29 : vector<2x16x16x16xf32>
    %32 = tpu.reciprocal %31 {approx = true} : vector<2x16x16x16xf32> -> vector<2x16x16x16xf32>
    %33 = arith.mulf %26, %32 : vector<2x16x16x16xf32>
    %cst_13 = arith.constant 0.000000e+00 : f32
    %34 = vector.broadcast %cst_13 : f32 to vector<2x18x18x16xf32>
    %c0_14 = arith.constant 0 : index
    %c0_15 = arith.constant 0 : index
    %c0_16 = arith.constant 0 : index
    %c0_17 = arith.constant 0 : index
    %35 = vector.load %arg8[%c0_14, %c0_15, %c0_16, %c0_17] : memref<2x18x18x16xf32, #tpu.memory_space<vmem>>, vector<2x18x18x16xf32>
    tpu.vector_store %arg8[%c0_14, %c0_15, %c0_16, %c0_17], %34 {strides = array<i32>} : memref<2x18x18x16xf32, #tpu.memory_space<vmem>>, vector<2x18x18x16xf32>,
    %c0_18 = arith.constant 0 : index
    %c1 = arith.constant 1 : index
    %c1_19 = arith.constant 1 : index
    %c0_20 = arith.constant 0 : index
    %36 = vector.load %arg8[%c0_18, %c1, %c1_19, %c0_20] : memref<2x18x18x16xf32, #tpu.memory_space<vmem>>, vector<2x16x16x16xf32>
    tpu.vector_store %arg8[%c0_18, %c1, %c1_19, %c0_20], %33 {strides = array<i32>} : memref<2x18x18x16xf32, #tpu.memory_space<vmem>>, vector<2x16x16x16xf32>,
    %c0_21 = arith.constant 0 : index
    %c0_22 = arith.constant 0 : index
    %c0_23 = arith.constant 0 : index
    %c0_24 = arith.constant 0 : index
    %37 = vector.load %arg8[%c0_21, %c0_22, %c0_23, %c0_24] : memref<2x18x18x16xf32, #tpu.memory_space<vmem>>, vector<2x16x16x16xf32>
    %38 = vector.shape_cast %37 : vector<2x16x16x16xf32> to vector<512x16xf32>
    %c0_25 = arith.constant 0 : index
    %c0_26 = arith.constant 0 : index
    %c1_27 = arith.constant 1 : index
    %c0_28 = arith.constant 0 : index
    %39 = vector.load %arg8[%c0_25, %c0_26, %c1_27, %c0_28] : memref<2x18x18x16xf32, #tpu.memory_space<vmem>>, vector<2x16x16x16xf32>
    %40 = vector.shape_cast %39 : vector<2x16x16x16xf32> to vector<512x16xf32>
    %c0_29 = arith.constant 0 : index
    %c0_30 = arith.constant 0 : index
    %c2 = arith.constant 2 : index
    %c0_31 = arith.constant 0 : index
    %41 = vector.load %arg8[%c0_29, %c0_30, %c2, %c0_31] : memref<2x18x18x16xf32, #tpu.memory_space<vmem>>, vector<2x16x16x16xf32>
    %42 = vector.shape_cast %41 : vector<2x16x16x16xf32> to vector<512x16xf32>
    %c0_32 = arith.constant 0 : index
    %c1_33 = arith.constant 1 : index
    %c0_34 = arith.constant 0 : index
    %c0_35 = arith.constant 0 : index
    %43 = vector.load %arg8[%c0_32, %c1_33, %c0_34, %c0_35] : memref<2x18x18x16xf32, #tpu.memory_space<vmem>>, vector<2x16x16x16xf32>
    %44 = vector.shape_cast %43 : vector<2x16x16x16xf32> to vector<512x16xf32>
    %c0_36 = arith.constant 0 : index
    %c1_37 = arith.constant 1 : index
    %c1_38 = arith.constant 1 : index
    %c0_39 = arith.constant 0 : index
    %45 = vector.load %arg8[%c0_36, %c1_37, %c1_38, %c0_39] : memref<2x18x18x16xf32, #tpu.memory_space<vmem>>, vector<2x16x16x16xf32>
    %46 = vector.shape_cast %45 : vector<2x16x16x16xf32> to vector<512x16xf32>
    %c0_40 = arith.constant 0 : index
    %c1_41 = arith.constant 1 : index
    %c2_42 = arith.constant 2 : index
    %c0_43 = arith.constant 0 : index
    %47 = vector.load %arg8[%c0_40, %c1_41, %c2_42, %c0_43] : memref<2x18x18x16xf32, #tpu.memory_space<vmem>>, vector<2x16x16x16xf32>
    %48 = vector.shape_cast %47 : vector<2x16x16x16xf32> to vector<512x16xf32>
    %c0_44 = arith.constant 0 : index
    %c2_45 = arith.constant 2 : index
    %c0_46 = arith.constant 0 : index
    %c0_47 = arith.constant 0 : index
    %49 = vector.load %arg8[%c0_44, %c2_45, %c0_46, %c0_47] : memref<2x18x18x16xf32, #tpu.memory_space<vmem>>, vector<2x16x16x16xf32>
    %50 = vector.shape_cast %49 : vector<2x16x16x16xf32> to vector<512x16xf32>
    %c0_48 = arith.constant 0 : index
    %c2_49 = arith.constant 2 : index
    %c1_50 = arith.constant 1 : index
    %c0_51 = arith.constant 0 : index
    %51 = vector.load %arg8[%c0_48, %c2_49, %c1_50, %c0_51] : memref<2x18x18x16xf32, #tpu.memory_space<vmem>>, vector<2x16x16x16xf32>
    %52 = vector.shape_cast %51 : vector<2x16x16x16xf32> to vector<512x16xf32>
    %c0_52 = arith.constant 0 : index
    %c2_53 = arith.constant 2 : index
    %c2_54 = arith.constant 2 : index
    %c0_55 = arith.constant 0 : index
    %53 = vector.load %arg8[%c0_52, %c2_53, %c2_54, %c0_55] : memref<2x18x18x16xf32, #tpu.memory_space<vmem>>, vector<2x16x16x16xf32>
    %54 = vector.shape_cast %53 : vector<2x16x16x16xf32> to vector<512x16xf32>
    %55 = tpu.concatenate %38, %40, %42, %44, %46, %48, %50, %52, %54 in 1 : vector<512x16xf32>, vector<512x16xf32>, vector<512x16xf32>, vector<512x16xf32>, vector<512x16xf32>, vector<512x16xf32>, vector<512x16xf32>, vector<512x16xf32>, vector<512x16xf32> -> vector<512x144xf32>
    %56 = arith.truncf %55 : vector<512x144xf32> to vector<512x144xbf16>
    %c0_56 = arith.constant 0 : index
    %c0_57 = arith.constant 0 : index
    %57 = vector.load %arg2[%c0_56, %c0_57] : memref<32x144xbf16, #tpu.memory_space<vmem>>, vector<32x144xbf16>
    %cst_58 = arith.constant dense<0.000000e+00> : vector<32x512xf32>
    %58 = tpu.matmul %57, %56, %cst_58 {dimension_numbers = #tpu.dot_dimension_numbers<[1], [1], [0], [0], [0, 0, 1, 0], [], []>} : vector<32x144xbf16>, vector<512x144xbf16>, vector<32x512xf32> -> vector<32x512xf32>
    %c0_59 = arith.constant 0 : index
    %c0_60 = arith.constant 0 : index
    %59 = vector.load %arg5[%c0_59, %c0_60] : memref<32x2xf32, #tpu.memory_space<vmem>>, vector<32x2xf32>
    %c0_61 = arith.constant 0 : index
    %c0_62 = arith.constant 0 : index
    %60 = vector.load %arg6[%c0_61, %c0_62] : memref<32x2xf32, #tpu.memory_space<vmem>>, vector<32x2xf32>
    %61 = vector.extract_strided_slice %58 {offsets = [0, 0], sizes = [32, 256], strides = [1, 1]} : vector<32x512xf32> to vector<32x256xf32>
    %62 = vector.extract_strided_slice %59 {offsets = [0, 0], sizes = [32, 1], strides = [1, 1]} : vector<32x2xf32> to vector<32x1xf32>
    %63 = vector.broadcast %62 : vector<32x1xf32> to vector<32x256xf32>
    %64 = arith.mulf %61, %63 : vector<32x256xf32>
    %65 = vector.extract_strided_slice %60 {offsets = [0, 0], sizes = [32, 1], strides = [1, 1]} : vector<32x2xf32> to vector<32x1xf32>
    %66 = vector.broadcast %65 : vector<32x1xf32> to vector<32x256xf32>
    %67 = arith.addf %64, %66 : vector<32x256xf32>
    %c0_63 = arith.constant 0 : index
    %c0_64 = arith.constant 0 : index
    %c0_65 = arith.constant 0 : index
    %68 = vector.load %arg7[%c0_63, %c0_64, %c0_65] : memref<2x32x256xf32, #tpu.memory_space<vmem>>, vector<1x32x256xf32>
    %69 = vector.shape_cast %68 : vector<1x32x256xf32> to vector<32x256xf32>
    %70 = vector.shape_cast %67 : vector<32x256xf32> to vector<1x32x256xf32>
    tpu.vector_store %arg7[%c0_63, %c0_64, %c0_65], %70 {strides = array<i32>} : memref<2x32x256xf32, #tpu.memory_space<vmem>>, vector<1x32x256xf32>,
    %71 = vector.extract_strided_slice %58 {offsets = [0, 256], sizes = [32, 256], strides = [1, 1]} : vector<32x512xf32> to vector<32x256xf32>
    %72 = vector.extract_strided_slice %59 {offsets = [0, 1], sizes = [32, 1], strides = [1, 1]} : vector<32x2xf32> to vector<32x1xf32>
    %73 = vector.broadcast %72 : vector<32x1xf32> to vector<32x256xf32>
    %74 = arith.mulf %71, %73 : vector<32x256xf32>
    %75 = vector.extract_strided_slice %60 {offsets = [0, 1], sizes = [32, 1], strides = [1, 1]} : vector<32x2xf32> to vector<32x1xf32>
    %76 = vector.broadcast %75 : vector<32x1xf32> to vector<32x256xf32>
    %77 = arith.addf %74, %76 : vector<32x256xf32>
    %c1_66 = arith.constant 1 : index
    %c0_67 = arith.constant 0 : index
    %c0_68 = arith.constant 0 : index
    %78 = vector.load %arg7[%c1_66, %c0_67, %c0_68] : memref<2x32x256xf32, #tpu.memory_space<vmem>>, vector<1x32x256xf32>
    %79 = vector.shape_cast %78 : vector<1x32x256xf32> to vector<32x256xf32>
    %80 = vector.shape_cast %77 : vector<32x256xf32> to vector<1x32x256xf32>
    tpu.vector_store %arg7[%c1_66, %c0_67, %c0_68], %80 {strides = array<i32>} : memref<2x32x256xf32, #tpu.memory_space<vmem>>, vector<1x32x256xf32>,
    return
  }
  func.func @transform_0(%arg0: i32) -> (i32, i32, i32, i32) {
    %c0_i32 = arith.constant 0 : i32
    %c0_i32_0 = arith.constant 0 : i32
    %c0_i32_1 = arith.constant 0 : i32
    %c0_i32_2 = arith.constant 0 : i32
    return %arg0, %c0_i32, %c0_i32_0, %c0_i32_1 : i32, i32, i32, i32
  }
  func.func @transform_1(%arg0: i32) -> (i32, i32) {
    %c0_i32 = arith.constant 0 : i32
    %c0_i32_0 = arith.constant 0 : i32
    %c0_i32_1 = arith.constant 0 : i32
    return %c0_i32, %c0_i32_0 : i32, i32
  }
  func.func @transform_2(%arg0: i32) -> (i32, i32) {
    %c0_i32 = arith.constant 0 : i32
    %c0_i32_0 = arith.constant 0 : i32
    %c0_i32_1 = arith.constant 0 : i32
    return %c0_i32, %c0_i32_0 : i32, i32
  }
  func.func @transform_3(%arg0: i32) -> (i32, i32) {
    %c0_i32 = arith.constant 0 : i32
    %c0_i32_0 = arith.constant 0 : i32
    %c0_i32_1 = arith.constant 0 : i32
    return %c0_i32, %c0_i32_0 : i32, i32
  }
  func.func @transform_4(%arg0: i32) -> (i32, i32) {
    %c0_i32 = arith.constant 0 : i32
    %c0_i32_0 = arith.constant 0 : i32
    return %c0_i32, %arg0 : i32, i32
  }
  func.func @transform_5(%arg0: i32) -> (i32, i32) {
    %c0_i32 = arith.constant 0 : i32
    %c0_i32_0 = arith.constant 0 : i32
    return %c0_i32, %arg0 : i32, i32
  }
  func.func @transform_6(%arg0: i32) -> (i32, i32, i32) {
    %c0_i32 = arith.constant 0 : i32
    %c0_i32_0 = arith.constant 0 : i32
    %c0_i32_1 = arith.constant 0 : i32
    return %arg0, %c0_i32, %c0_i32_0 : i32, i32, i32
  }
}

</mosaic_0001>

<llo_original>
// kernel: tpu_custom_call.1
$region0: #{tpu_custom_call.1}
  #allocation0 [shape = 'u32[]', space=smem, size = 0x4, offset = 0x4, fixed_abs, tag = 'smem constant byte address 0x4 - core index']
  #allocation1 [shape = 'u32[144,128]{1,0:T(1,128)}', space=vmem, size = 0x12000, scoped, tag = 'internal scratch']
  #allocation2 [shape = 'f32[2,18,18,16]{3,2,1,0:T(8,128)}', space=vmem, size = 0x6c000, scoped, tag = 'scratch operand']
  %s0 = inlined_call_operand.hbm [shape: f32[2,16,16,16], index: 0, kind: input, shape index: {}]
  %s1 = inlined_call_operand.vmem [shape: bf16[32,144], index: 1, kind: input, shape index: {}]
  %s2 = inlined_call_operand.vmem [shape: f32[16,16], index: 2, kind: input, shape index: {}]
  %s3 = inlined_call_operand.vmem [shape: f32[16,16], index: 3, kind: input, shape index: {}]
  %s4 = inlined_call_operand.vmem [shape: f32[32,2], index: 4, kind: input, shape index: {}]
  %s5 = inlined_call_operand.vmem [shape: f32[32,2], index: 5, kind: input, shape index: {}]
  %s6 = inlined_call_operand.hbm [shape: f32[2,32,256], index: 6, kind: output, shape index: {}]
  %s7 = sld [smem:[#allocation0]]
  $region38: #{tpu_custom_call.1} parent=0
    _
  %s9 = ssub.s32 1, %s7
  %s10 = scalar_select 0, %s9, %s7
  $region1: #{tpu_custom_call.1} parent=0
    #allocation3 [shape = 'u8[262144]{0}', space=vmem, size = 0x40000, scoped, tag = 'input window, operand 0, single buffered']
    #allocation4 [shape = 's32[1]{0}', space=sflag, size = 0x4, scoped, tag = 'scoped memory for tpu_custom_call.1']
    #allocation5 [shape = 's32[1]{0}', space=sflag, size = 0x4, scoped, tag = 'scoped memory for tpu_custom_call.1']
    #allocation6 [shape = 'u8[65536]{0}', space=vmem, size = 0x10000, scoped, tag = 'output window, operand 0, single buffered']
    %11 = vsyncpa [#allocation4], 0
    %12 = vsyncpa [#allocation5], 0
    // Predicated region
    $region2: #{tpu_custom_call.1} parent=1 // pred_check
      _
    $region3: #{tpu_custom_call.1} parent=1 // pred_check_branch
      %14 = sbr.rel (0) target = $region5
    $region4: #{tpu_custom_call.1} parent=1 // pred_region
      %s16 = ssub.s32 8192, 8192
      %17 = vsyncadd [#allocation4], %s16
      %s18 = sshll.u32 [#allocation3], 4
      %s19 = int_to_ptr.vmem [resolvable:$true] %s18
      %24 = dma.hbm_to_vmem [thread:$0]  %s0, 8192, %s19, [#allocation4], 128, 128, 8
    $region5: #{tpu_custom_call.1} parent=1 // pred_fallthru
      _
    // Predicated region
    $region6: #{tpu_custom_call.1} parent=1 // pred_check
      _
    $region7: #{tpu_custom_call.1} parent=1 // pred_check_branch
      %26 = sbr.rel (0) target = $region9
    $region8: #{tpu_custom_call.1} parent=1 // pred_region
      _
    $region9: #{tpu_custom_call.1} parent=1 // pred_fallthru
      _
    // Predicated region
    $region10: #{tpu_custom_call.1} parent=1 // pred_check
      _
    $region11: #{tpu_custom_call.1} parent=1 // pred_check_branch
      %28 = sbr.rel (0) target = $region13
    $region12: #{tpu_custom_call.1} parent=1 // pred_region
      _
    $region13: #{tpu_custom_call.1} parent=1 // pred_fallthru
      _
    // Predicated region
    $region14: #{tpu_custom_call.1} parent=1 // pred_check
      _
    $region15: #{tpu_custom_call.1} parent=1 // pred_check_branch
      %30 = sbr.rel (0) target = $region17
    $region16: #{tpu_custom_call.1} parent=1 // pred_region
      _
    $region17: #{tpu_custom_call.1} parent=1 // pred_fallthru
      _
    // Predicated region
    $region18: #{tpu_custom_call.1} parent=1 // pred_check
      _
    $region19: #{tpu_custom_call.1} parent=1 // pred_check_branch
      %32 = sbr.rel (0) target = $region21
    $region20: #{tpu_custom_call.1} parent=1 // pred_region
      _
    $region21: #{tpu_custom_call.1} parent=1 // pred_fallthru
      _
    // Predicated region
    $region22: #{tpu_custom_call.1} parent=1 // pred_check
      _
    $region23: #{tpu_custom_call.1} parent=1 // pred_check_branch
      %34 = sbr.rel (0) target = $region25
    $region24: #{tpu_custom_call.1} parent=1 // pred_region
      _
    $region25: #{tpu_custom_call.1} parent=1 // pred_fallthru
      _
    // Predicated region
    $region26: #{tpu_custom_call.1} parent=1 // pred_check
      _
    $region27: #{tpu_custom_call.1} parent=1 // pred_check_branch
      %36 = sbr.rel (0) target = $region29
    $region28: #{tpu_custom_call.1} parent=1 // pred_region
      %37 = dma.done [#allocation4], 8192
    $region29: #{tpu_custom_call.1} parent=1 // pred_fallthru
      _
    %v38 = vld [vmem:[#allocation3] sm:$0xff]
    %v39 = vld [vmem:[#allocation3 + $0x8] sm:$0xff]
    %v40 = vld [vmem:[#allocation3 + $0x10] sm:$0xff]
    %v41 = vld [vmem:[#allocation3 + $0x18] sm:$0xff]
    %v42 = vld [vmem:[#allocation3 + $0x20] sm:$0xff]
    %v43 = vld [vmem:[#allocation3 + $0x28] sm:$0xff]
    %v44 = vld [vmem:[#allocation3 + $0x30] sm:$0xff]
    %v45 = vld [vmem:[#allocation3 + $0x38] sm:$0xff]
    %v46 = vld [vmem:[#allocation3 + $0x40] sm:$0xff]
    %v47 = vld [vmem:[#allocation3 + $0x48] sm:$0xff]
    %v48 = vld [vmem:[#allocation3 + $0x50] sm:$0xff]
    %v49 = vld [vmem:[#allocation3 + $0x58] sm:$0xff]
    %v50 = vld [vmem:[#allocation3 + $0x60] sm:$0xff]
    %v51 = vld [vmem:[#allocation3 + $0x68] sm:$0xff]
    %v52 = vld [vmem:[#allocation3 + $0x70] sm:$0xff]
    %v53 = vld [vmem:[#allocation3 + $0x78] sm:$0xff]
    %v54 = vld [vmem:[#allocation3 + $0x80] sm:$0xff]
    %v55 = vld [vmem:[#allocation3 + $0x88] sm:$0xff]
    %v56 = vld [vmem:[#allocation3 + $0x90] sm:$0xff]
    %v57 = vld [vmem:[#allocation3 + $0x98] sm:$0xff]
    %v58 = vld [vmem:[#allocation3 + $0xa0] sm:$0xff]
    %v59 = vld [vmem:[#allocation3 + $0xa8] sm:$0xff]
    %v60 = vld [vmem:[#allocation3 + $0xb0] sm:$0xff]
    %v61 = vld [vmem:[#allocation3 + $0xb8] sm:$0xff]
    %v62 = vld [vmem:[#allocation3 + $0xc0] sm:$0xff]
    %v63 = vld [vmem:[#allocation3 + $0xc8] sm:$0xff]
    %v64 = vld [vmem:[#allocation3 + $0xd0] sm:$0xff]
    %v65 = vld [vmem:[#allocation3 + $0xd8] sm:$0xff]
    %v66 = vld [vmem:[#allocation3 + $0xe0] sm:$0xff]
    %v67 = vld [vmem:[#allocation3 + $0xe8] sm:$0xff]
    %v68 = vld [vmem:[#allocation3 + $0xf0] sm:$0xff]
    %v69 = vld [vmem:[#allocation3 + $0xf8] sm:$0xff]
    %v70 = vld [vmem:[#allocation3 + $0x100] sm:$0xff]
    %v71 = vld [vmem:[#allocation3 + $0x108] sm:$0xff]
    %v72 = vld [vmem:[#allocation3 + $0x110] sm:$0xff]
    %v73 = vld [vmem:[#allocation3 + $0x118] sm:$0xff]
    %v74 = vld [vmem:[#allocation3 + $0x120] sm:$0xff]
    %v75 = vld [vmem:[#allocation3 + $0x128] sm:$0xff]
    %v76 = vld [vmem:[#allocation3 + $0x130] sm:$0xff]
    %v77 = vld [vmem:[#allocation3 + $0x138] sm:$0xff]
    %v78 = vld [vmem:[#allocation3 + $0x140] sm:$0xff]
    %v79 = vld [vmem:[#allocation3 + $0x148] sm:$0xff]
    %v80 = vld [vmem:[#allocation3 + $0x150] sm:$0xff]
    %v81 = vld [vmem:[#allocation3 + $0x158] sm:$0xff]
    %v82 = vld [vmem:[#allocation3 + $0x160] sm:$0xff]
    %v83 = vld [vmem:[#allocation3 + $0x168] sm:$0xff]
    %v84 = vld [vmem:[#allocation3 + $0x170] sm:$0xff]
    %v85 = vld [vmem:[#allocation3 + $0x178] sm:$0xff]
    %v86 = vld [vmem:[#allocation3 + $0x180] sm:$0xff]
    %v87 = vld [vmem:[#allocation3 + $0x188] sm:$0xff]
    %v88 = vld [vmem:[#allocation3 + $0x190] sm:$0xff]
    %v89 = vld [vmem:[#allocation3 + $0x198] sm:$0xff]
    %v90 = vld [vmem:[#allocation3 + $0x1a0] sm:$0xff]
    %v91 = vld [vmem:[#allocation3 + $0x1a8] sm:$0xff]
    %v92 = vld [vmem:[#allocation3 + $0x1b0] sm:$0xff]
    %v93 = vld [vmem:[#allocation3 + $0x1b8] sm:$0xff]
    %v94 = vld [vmem:[#allocation3 + $0x1c0] sm:$0xff]
    %v95 = vld [vmem:[#allocation3 + $0x1c8] sm:$0xff]
    %v96 = vld [vmem:[#allocation3 + $0x1d0] sm:$0xff]
    %v97 = vld [vmem:[#allocation3 + $0x1d8] sm:$0xff]
    %v98 = vld [vmem:[#allocation3 + $0x1e0] sm:$0xff]
    %v99 = vld [vmem:[#allocation3 + $0x1e8] sm:$0xff]
    %v100 = vld [vmem:[#allocation3 + $0x1f0] sm:$0xff]
    %v101 = vld [vmem:[#allocation3 + $0x1f8] sm:$0xff]
    %vm102 = vcmask 130048
    %v103 = vsel %vm102, %v38, 0.0
    %v104 = vsel %vm102, %v39, 0.0
    %v105 = vadd.f32 %v103, %v104
    %v106 = vrot.slane %v105, 4
    %v107 = vadd.f32 %v105, %v106
    %v108 = vrot.slane %v107, 2
    %v109 = vadd.f32 %v107, %v108
    %v110 = vrot.slane %v109, 1
    %v111 = vadd.f32 %v109, %v110
    %v112 = vsel %vm102, %v40, 0.0
    %v113 = vsel %vm102, %v41, 0.0
    %v114 = vadd.f32 %v112, %v113
    %v115 = vrot.slane %v114, 4
    %v116 = vadd.f32 %v114, %v115
    %v117 = vrot.slane %v116, 2
    %v118 = vadd.f32 %v116, %v117
    %v119 = vrot.slane %v118, 1
    %v120 = vadd.f32 %v118, %v119
    %v121 = vsel %vm102, %v42, 0.0
    %v122 = vsel %vm102, %v43, 0.0
    %v123 = vadd.f32 %v121, %v122
    %v124 = vrot.slane %v123, 4
    %v125 = vadd.f32 %v123, %v124
    %v126 = vrot.slane %v125, 2
    %v127 = vadd.f32 %v125, %v126
    %v128 = vrot.slane %v127, 1
    %v129 = vadd.f32 %v127, %v128
    %v130 = vsel %vm102, %v44, 0.0
    %v131 = vsel %vm102, %v45, 0.0
    %v132 = vadd.f32 %v130, %v131
    %v133 = vrot.slane %v132, 4
    %v134 = vadd.f32 %v132, %v133
    %v135 = vrot.slane %v134, 2
    %v136 = vadd.f32 %v134, %v135
    %v137 = vrot.slane %v136, 1
    %v138 = vadd.f32 %v136, %v137
    %v139 = vsel %vm102, %v46, 0.0
    %v140 = vsel %vm102, %v47, 0.0
    %v141 = vadd.f32 %v139, %v140
    %v142 = vrot.slane %v141, 4
    %v143 = vadd.f32 %v141, %v142
    %v144 = vrot.slane %v143, 2
    %v145 = vadd.f32 %v143, %v144
    %v146 = vrot.slane %v145, 1
    %v147 = vadd.f32 %v145, %v146
    %v148 = vsel %vm102, %v48, 0.0
    %v149 = vsel %vm102, %v49, 0.0
    %v150 = vadd.f32 %v148, %v149
    %v151 = vrot.slane %v150, 4
    %v152 = vadd.f32 %v150, %v151
    %v153 = vrot.slane %v152, 2
    %v154 = vadd.f32 %v152, %v153
    %v155 = vrot.slane %v154, 1
    %v156 = vadd.f32 %v154, %v155
    %v157 = vsel %vm102, %v50, 0.0
    %v158 = vsel %vm102, %v51, 0.0
    %v159 = vadd.f32 %v157, %v158
    %v160 = vrot.slane %v159, 4
    %v161 = vadd.f32 %v159, %v160
    %v162 = vrot.slane %v161, 2
    %v163 = vadd.f32 %v161, %v162
    %v164 = vrot.slane %v163, 1
    %v165 = vadd.f32 %v163, %v164
    %v166 = vsel %vm102, %v52, 0.0
    %v167 = vsel %vm102, %v53, 0.0
    %v168 = vadd.f32 %v166, %v167
    %v169 = vrot.slane %v168, 4
    %v170 = vadd.f32 %v168, %v169
    %v171 = vrot.slane %v170, 2
    %v172 = vadd.f32 %v170, %v171
    %v173 = vrot.slane %v172, 1
    %v174 = vadd.f32 %v172, %v173
    %v175 = vsel %vm102, %v54, 0.0
    %v176 = vsel %vm102, %v55, 0.0
    %v177 = vadd.f32 %v175, %v176
    %v178 = vrot.slane %v177, 4
    %v179 = vadd.f32 %v177, %v178
    %v180 = vrot.slane %v179, 2
    %v181 = vadd.f32 %v179, %v180
    %v182 = vrot.slane %v181, 1
    %v183 = vadd.f32 %v181, %v182
    %v184 = vsel %vm102, %v56, 0.0
    %v185 = vsel %vm102, %v57, 0.0
    %v186 = vadd.f32 %v184, %v185
    %v187 = vrot.slane %v186, 4
    %v188 = vadd.f32 %v186, %v187
    %v189 = vrot.slane %v188, 2
    %v190 = vadd.f32 %v188, %v189
    %v191 = vrot.slane %v190, 1
    %v192 = vadd.f32 %v190, %v191
    %v193 = vsel %vm102, %v58, 0.0
    %v194 = vsel %vm102, %v59, 0.0
    %v195 = vadd.f32 %v193, %v194
    %v196 = vrot.slane %v195, 4
    %v197 = vadd.f32 %v195, %v196
    %v198 = vrot.slane %v197, 2
    %v199 = vadd.f32 %v197, %v198
    %v200 = vrot.slane %v199, 1
    %v201 = vadd.f32 %v199, %v200
    %v202 = vsel %vm102, %v60, 0.0
    %v203 = vsel %vm102, %v61, 0.0
    %v204 = vadd.f32 %v202, %v203
    %v205 = vrot.slane %v204, 4
    %v206 = vadd.f32 %v204, %v205
    %v207 = vrot.slane %v206, 2
    %v208 = vadd.f32 %v206, %v207
    %v209 = vrot.slane %v208, 1
    %v210 = vadd.f32 %v208, %v209
    %v211 = vsel %vm102, %v62, 0.0
    %v212 = vsel %vm102, %v63, 0.0
    %v213 = vadd.f32 %v211, %v212
    %v214 = vrot.slane %v213, 4
    %v215 = vadd.f32 %v213, %v214
    %v216 = vrot.slane %v215, 2
    %v217 = vadd.f32 %v215, %v216
    %v218 = vrot.slane %v217, 1
    %v219 = vadd.f32 %v217, %v218
    %v220 = vsel %vm102, %v64, 0.0
    %v221 = vsel %vm102, %v65, 0.0
    %v222 = vadd.f32 %v220, %v221
    %v223 = vrot.slane %v222, 4
    %v224 = vadd.f32 %v222, %v223
    %v225 = vrot.slane %v224, 2
    %v226 = vadd.f32 %v224, %v225
    %v227 = vrot.slane %v226, 1
    %v228 = vadd.f32 %v226, %v227
    %v229 = vsel %vm102, %v66, 0.0
    %v230 = vsel %vm102, %v67, 0.0
    %v231 = vadd.f32 %v229, %v230
    %v232 = vrot.slane %v231, 4
    %v233 = vadd.f32 %v231, %v232
    %v234 = vrot.slane %v233, 2
    %v235 = vadd.f32 %v233, %v234
    %v236 = vrot.slane %v235, 1
    %v237 = vadd.f32 %v235, %v236
    %v238 = vsel %vm102, %v68, 0.0
    %v239 = vsel %vm102, %v69, 0.0
    %v240 = vadd.f32 %v238, %v239
    %v241 = vrot.slane %v240, 4
    %v242 = vadd.f32 %v240, %v241
    %v243 = vrot.slane %v242, 2
    %v244 = vadd.f32 %v242, %v243
    %v245 = vrot.slane %v244, 1
    %v246 = vadd.f32 %v244, %v245
    %v247 = vsel %vm102, %v70, 0.0
    %v248 = vsel %vm102, %v71, 0.0
    %v249 = vadd.f32 %v247, %v248
    %v250 = vrot.slane %v249, 4
    %v251 = vadd.f32 %v249, %v250
    %v252 = vrot.slane %v251, 2
    %v253 = vadd.f32 %v251, %v252
    %v254 = vrot.slane %v253, 1
    %v255 = vadd.f32 %v253, %v254
    %v256 = vsel %vm102, %v72, 0.0
    %v257 = vsel %vm102, %v73, 0.0
    %v258 = vadd.f32 %v256, %v257
    %v259 = vrot.slane %v258, 4
    %v260 = vadd.f32 %v258, %v259
    %v261 = vrot.slane %v260, 2
    %v262 = vadd.f32 %v260, %v261
    %v263 = vrot.slane %v262, 1
    %v264 = vadd.f32 %v262, %v263
    %v265 = vsel %vm102, %v74, 0.0
    %v266 = vsel %vm102, %v75, 0.0
    %v267 = vadd.f32 %v265, %v266
    %v268 = vrot.slane %v267, 4
    %v269 = vadd.f32 %v267, %v268
    %v270 = vrot.slane %v269, 2
    %v271 = vadd.f32 %v269, %v270
    %v272 = vrot.slane %v271, 1
    %v273 = vadd.f32 %v271, %v272
    %v274 = vsel %vm102, %v76, 0.0
    %v275 = vsel %vm102, %v77, 0.0
    %v276 = vadd.f32 %v274, %v275
    %v277 = vrot.slane %v276, 4
    %v278 = vadd.f32 %v276, %v277
    %v279 = vrot.slane %v278, 2
    %v280 = vadd.f32 %v278, %v279
    %v281 = vrot.slane %v280, 1
    %v282 = vadd.f32 %v280, %v281
    %v283 = vsel %vm102, %v78, 0.0
    %v284 = vsel %vm102, %v79, 0.0
    %v285 = vadd.f32 %v283, %v284
    %v286 = vrot.slane %v285, 4
    %v287 = vadd.f32 %v285, %v286
    %v288 = vrot.slane %v287, 2
    %v289 = vadd.f32 %v287, %v288
    %v290 = vrot.slane %v289, 1
    %v291 = vadd.f32 %v289, %v290
    %v292 = vsel %vm102, %v80, 0.0
    %v293 = vsel %vm102, %v81, 0.0
    %v294 = vadd.f32 %v292, %v293
    %v295 = vrot.slane %v294, 4
    %v296 = vadd.f32 %v294, %v295
    %v297 = vrot.slane %v296, 2
    %v298 = vadd.f32 %v296, %v297
    %v299 = vrot.slane %v298, 1
    %v300 = vadd.f32 %v298, %v299
    %v301 = vsel %vm102, %v82, 0.0
    %v302 = vsel %vm102, %v83, 0.0
    %v303 = vadd.f32 %v301, %v302
    %v304 = vrot.slane %v303, 4
    %v305 = vadd.f32 %v303, %v304
    %v306 = vrot.slane %v305, 2
    %v307 = vadd.f32 %v305, %v306
    %v308 = vrot.slane %v307, 1
    %v309 = vadd.f32 %v307, %v308
    %v310 = vsel %vm102, %v84, 0.0
    %v311 = vsel %vm102, %v85, 0.0
    %v312 = vadd.f32 %v310, %v311
    %v313 = vrot.slane %v312, 4
    %v314 = vadd.f32 %v312, %v313
    %v315 = vrot.slane %v314, 2
    %v316 = vadd.f32 %v314, %v315
    %v317 = vrot.slane %v316, 1
    %v318 = vadd.f32 %v316, %v317
    %v319 = vsel %vm102, %v86, 0.0
    %v320 = vsel %vm102, %v87, 0.0
    %v321 = vadd.f32 %v319, %v320
    %v322 = vrot.slane %v321, 4
    %v323 = vadd.f32 %v321, %v322
    %v324 = vrot.slane %v323, 2
    %v325 = vadd.f32 %v323, %v324
    %v326 = vrot.slane %v325, 1
    %v327 = vadd.f32 %v325, %v326
    %v328 = vsel %vm102, %v88, 0.0
    %v329 = vsel %vm102, %v89, 0.0
    %v330 = vadd.f32 %v328, %v329
    %v331 = vrot.slane %v330, 4
    %v332 = vadd.f32 %v330, %v331
    %v333 = vrot.slane %v332, 2
    %v334 = vadd.f32 %v332, %v333
    %v335 = vrot.slane %v334, 1
    %v336 = vadd.f32 %v334, %v335
    %v337 = vsel %vm102, %v90, 0.0
    %v338 = vsel %vm102, %v91, 0.0
    %v339 = vadd.f32 %v337, %v338
    %v340 = vrot.slane %v339, 4
    %v341 = vadd.f32 %v339, %v340
    %v342 = vrot.slane %v341, 2
    %v343 = vadd.f32 %v341, %v342
    %v344 = vrot.slane %v343, 1
    %v345 = vadd.f32 %v343, %v344
    %v346 = vsel %vm102, %v92, 0.0
    %v347 = vsel %vm102, %v93, 0.0
    %v348 = vadd.f32 %v346, %v347
    %v349 = vrot.slane %v348, 4
    %v350 = vadd.f32 %v348, %v349
    %v351 = vrot.slane %v350, 2
    %v352 = vadd.f32 %v350, %v351
    %v353 = vrot.slane %v352, 1
    %v354 = vadd.f32 %v352, %v353
    %v355 = vsel %vm102, %v94, 0.0
    %v356 = vsel %vm102, %v95, 0.0
    %v357 = vadd.f32 %v355, %v356
    %v358 = vrot.slane %v357, 4
    %v359 = vadd.f32 %v357, %v358
    %v360 = vrot.slane %v359, 2
    %v361 = vadd.f32 %v359, %v360
    %v362 = vrot.slane %v361, 1
    %v363 = vadd.f32 %v361, %v362
    %v364 = vsel %vm102, %v96, 0.0
    %v365 = vsel %vm102, %v97, 0.0
    %v366 = vadd.f32 %v364, %v365
    %v367 = vrot.slane %v366, 4
    %v368 = vadd.f32 %v366, %v367
    %v369 = vrot.slane %v368, 2
    %v370 = vadd.f32 %v368, %v369
    %v371 = vrot.slane %v370, 1
    %v372 = vadd.f32 %v370, %v371
    %v373 = vsel %vm102, %v98, 0.0
    %v374 = vsel %vm102, %v99, 0.0
    %v375 = vadd.f32 %v373, %v374
    %v376 = vrot.slane %v375, 4
    %v377 = vadd.f32 %v375, %v376
    %v378 = vrot.slane %v377, 2
    %v379 = vadd.f32 %v377, %v378
    %v380 = vrot.slane %v379, 1
    %v381 = vadd.f32 %v379, %v380
    %v382 = vsel %vm102, %v100, 0.0
    %v383 = vsel %vm102, %v101, 0.0
    %v384 = vadd.f32 %v382, %v383
    %v385 = vrot.slane %v384, 4
    %v386 = vadd.f32 %v384, %v385
    %v387 = vrot.slane %v386, 2
    %v388 = vadd.f32 %v386, %v387
    %v389 = vrot.slane %v388, 1
    %v390 = vadd.f32 %v388, %v389
    %v391 = vrcp.pop 16.0
    %v392 = vmul.f32 %v111, %v391
    %v393 = vmul.f32 %v120, %v391
    %v394 = vmul.f32 %v129, %v391
    %v395 = vmul.f32 %v138, %v391
    %v396 = vmul.f32 %v147, %v391
    %v397 = vmul.f32 %v156, %v391
    %v398 = vmul.f32 %v165, %v391
    %v399 = vmul.f32 %v174, %v391
    %v400 = vmul.f32 %v183, %v391
    %v401 = vmul.f32 %v192, %v391
    %v402 = vmul.f32 %v201, %v391
    %v403 = vmul.f32 %v210, %v391
    %v404 = vmul.f32 %v219, %v391
    %v405 = vmul.f32 %v228, %v391
    %v406 = vmul.f32 %v237, %v391
    %v407 = vmul.f32 %v246, %v391
    %v408 = vmul.f32 %v255, %v391
    %v409 = vmul.f32 %v264, %v391
    %v410 = vmul.f32 %v273, %v391
    %v411 = vmul.f32 %v282, %v391
    %v412 = vmul.f32 %v291, %v391
    %v413 = vmul.f32 %v300, %v391
    %v414 = vmul.f32 %v309, %v391
    %v415 = vmul.f32 %v318, %v391
    %v416 = vmul.f32 %v327, %v391
    %v417 = vmul.f32 %v336, %v391
    %v418 = vmul.f32 %v345, %v391
    %v419 = vmul.f32 %v354, %v391
    %v420 = vmul.f32 %v363, %v391
    %v421 = vmul.f32 %v372, %v391
    %v422 = vmul.f32 %v381, %v391
    %v423 = vmul.f32 %v390, %v391
    %v424 = vmul.f32 %v38, %v38
    %v425 = vmul.f32 %v39, %v39
    %v426 = vmul.f32 %v40, %v40
    %v427 = vmul.f32 %v41, %v41
    %v428 = vmul.f32 %v42, %v42
    %v429 = vmul.f32 %v43, %v43
    %v430 = vmul.f32 %v44, %v44
    %v431 = vmul.f32 %v45, %v45
    %v432 = vmul.f32 %v46, %v46
    %v433 = vmul.f32 %v47, %v47
    %v434 = vmul.f32 %v48, %v48
    %v435 = vmul.f32 %v49, %v49
    %v436 = vmul.f32 %v50, %v50
    %v437 = vmul.f32 %v51, %v51
    %v438 = vmul.f32 %v52, %v52
    %v439 = vmul.f32 %v53, %v53
    %v440 = vmul.f32 %v54, %v54
    %v441 = vmul.f32 %v55, %v55
    %v442 = vmul.f32 %v56, %v56
    %v443 = vmul.f32 %v57, %v57
    %v444 = vmul.f32 %v58, %v58
    %v445 = vmul.f32 %v59, %v59
    %v446 = vmul.f32 %v60, %v60
    %v447 = vmul.f32 %v61, %v61
    %v448 = vmul.f32 %v62, %v62
    %v449 = vmul.f32 %v63, %v63
    %v450 = vmul.f32 %v64, %v64
    %v451 = vmul.f32 %v65, %v65
    %v452 = vmul.f32 %v66, %v66
    %v453 = vmul.f32 %v67, %v67
    %v454 = vmul.f32 %v68, %v68
    %v455 = vmul.f32 %v69, %v69
    %v456 = vmul.f32 %v70, %v70
    %v457 = vmul.f32 %v71, %v71
    %v458 = vmul.f32 %v72, %v72
    %v459 = vmul.f32 %v73, %v73
    %v460 = vmul.f32 %v74, %v74
    %v461 = vmul.f32 %v75, %v75
    %v462 = vmul.f32 %v76, %v76
    %v463 = vmul.f32 %v77, %v77
    %v464 = vmul.f32 %v78, %v78
    %v465 = vmul.f32 %v79, %v79
    %v466 = vmul.f32 %v80, %v80
    %v467 = vmul.f32 %v81, %v81
    %v468 = vmul.f32 %v82, %v82
    %v469 = vmul.f32 %v83, %v83
    %v470 = vmul.f32 %v84, %v84
    %v471 = vmul.f32 %v85, %v85
    %v472 = vmul.f32 %v86, %v86
    %v473 = vmul.f32 %v87, %v87
    %v474 = vmul.f32 %v88, %v88
    %v475 = vmul.f32 %v89, %v89
    %v476 = vmul.f32 %v90, %v90
    %v477 = vmul.f32 %v91, %v91
    %v478 = vmul.f32 %v92, %v92
    %v479 = vmul.f32 %v93, %v93
    %v480 = vmul.f32 %v94, %v94
    %v481 = vmul.f32 %v95, %v95
    %v482 = vmul.f32 %v96, %v96
    %v483 = vmul.f32 %v97, %v97
    %v484 = vmul.f32 %v98, %v98
    %v485 = vmul.f32 %v99, %v99
    %v486 = vmul.f32 %v100, %v100
    %v487 = vmul.f32 %v101, %v101
    %v488 = vsel %vm102, %v424, 0.0
    %v489 = vsel %vm102, %v425, 0.0
    %v490 = vadd.f32 %v488, %v489
    %v491 = vrot.slane %v490, 4
    %v492 = vadd.f32 %v490, %v491
    %v493 = vrot.slane %v492, 2
    %v494 = vadd.f32 %v492, %v493
    %v495 = vrot.slane %v494, 1
    %v496 = vadd.f32 %v494, %v495
    %v497 = vsel %vm102, %v426, 0.0
    %v498 = vsel %vm102, %v427, 0.0
    %v499 = vadd.f32 %v497, %v498
    %v500 = vrot.slane %v499, 4
    %v501 = vadd.f32 %v499, %v500
    %v502 = vrot.slane %v501, 2
    %v503 = vadd.f32 %v501, %v502
    %v504 = vrot.slane %v503, 1
    %v505 = vadd.f32 %v503, %v504
    %v506 = vsel %vm102, %v428, 0.0
    %v507 = vsel %vm102, %v429, 0.0
    %v508 = vadd.f32 %v506, %v507
    %v509 = vrot.slane %v508, 4
    %v510 = vadd.f32 %v508, %v509
    %v511 = vrot.slane %v510, 2
    %v512 = vadd.f32 %v510, %v511
    %v513 = vrot.slane %v512, 1
    %v514 = vadd.f32 %v512, %v513
    %v515 = vsel %vm102, %v430, 0.0
    %v516 = vsel %vm102, %v431, 0.0
    %v517 = vadd.f32 %v515, %v516
    %v518 = vrot.slane %v517, 4
    %v519 = vadd.f32 %v517, %v518
    %v520 = vrot.slane %v519, 2
    %v521 = vadd.f32 %v519, %v520
    %v522 = vrot.slane %v521, 1
    %v523 = vadd.f32 %v521, %v522
    %v524 = vsel %vm102, %v432, 0.0
    %v525 = vsel %vm102, %v433, 0.0
    %v526 = vadd.f32 %v524, %v525
    %v527 = vrot.slane %v526, 4
    %v528 = vadd.f32 %v526, %v527
    %v529 = vrot.slane %v528, 2
    %v530 = vadd.f32 %v528, %v529
    %v531 = vrot.slane %v530, 1
    %v532 = vadd.f32 %v530, %v531
    %v533 = vsel %vm102, %v434, 0.0
    %v534 = vsel %vm102, %v435, 0.0
    %v535 = vadd.f32 %v533, %v534
    %v536 = vrot.slane %v535, 4
    %v537 = vadd.f32 %v535, %v536
    %v538 = vrot.slane %v537, 2
    %v539 = vadd.f32 %v537, %v538
    %v540 = vrot.slane %v539, 1
    %v541 = vadd.f32 %v539, %v540
    %v542 = vsel %vm102, %v436, 0.0
    %v543 = vsel %vm102, %v437, 0.0
    %v544 = vadd.f32 %v542, %v543
    %v545 = vrot.slane %v544, 4
    %v546 = vadd.f32 %v544, %v545
    %v547 = vrot.slane %v546, 2
    %v548 = vadd.f32 %v546, %v547
    %v549 = vrot.slane %v548, 1
    %v550 = vadd.f32 %v548, %v549
    %v551 = vsel %vm102, %v438, 0.0
    %v552 = vsel %vm102, %v439, 0.0
    %v553 = vadd.f32 %v551, %v552
    %v554 = vrot.slane %v553, 4
    %v555 = vadd.f32 %v553, %v554
    %v556 = vrot.slane %v555, 2
    %v557 = vadd.f32 %v555, %v556
    %v558 = vrot.slane %v557, 1
    %v559 = vadd.f32 %v557, %v558
    %v560 = vsel %vm102, %v440, 0.0
    %v561 = vsel %vm102, %v441, 0.0
    %v562 = vadd.f32 %v560, %v561
    %v563 = vrot.slane %v562, 4
    %v564 = vadd.f32 %v562, %v563
    %v565 = vrot.slane %v564, 2
    %v566 = vadd.f32 %v564, %v565
    %v567 = vrot.slane %v566, 1
    %v568 = vadd.f32 %v566, %v567
    %v569 = vsel %vm102, %v442, 0.0
    %v570 = vsel %vm102, %v443, 0.0
    %v571 = vadd.f32 %v569, %v570
    %v572 = vrot.slane %v571, 4
    %v573 = vadd.f32 %v571, %v572
    %v574 = vrot.slane %v573, 2
    %v575 = vadd.f32 %v573, %v574
    %v576 = vrot.slane %v575, 1
    %v577 = vadd.f32 %v575, %v576
    %v578 = vsel %vm102, %v444, 0.0
    %v579 = vsel %vm102, %v445, 0.0
    %v580 = vadd.f32 %v578, %v579
    %v581 = vrot.slane %v580, 4
    %v582 = vadd.f32 %v580, %v581
    %v583 = vrot.slane %v582, 2
    %v584 = vadd.f32 %v582, %v583
    %v585 = vrot.slane %v584, 1
    %v586 = vadd.f32 %v584, %v585
    %v587 = vsel %vm102, %v446, 0.0
    %v588 = vsel %vm102, %v447, 0.0
    %v589 = vadd.f32 %v587, %v588
    %v590 = vrot.slane %v589, 4
    %v591 = vadd.f32 %v589, %v590
    %v592 = vrot.slane %v591, 2
    %v593 = vadd.f32 %v591, %v592
    %v594 = vrot.slane %v593, 1
    %v595 = vadd.f32 %v593, %v594
    %v596 = vsel %vm102, %v448, 0.0
    %v597 = vsel %vm102, %v449, 0.0
    %v598 = vadd.f32 %v596, %v597
    %v599 = vrot.slane %v598, 4
    %v600 = vadd.f32 %v598, %v599
    %v601 = vrot.slane %v600, 2
    %v602 = vadd.f32 %v600, %v601
    %v603 = vrot.slane %v602, 1
    %v604 = vadd.f32 %v602, %v603
    %v605 = vsel %vm102, %v450, 0.0
    %v606 = vsel %vm102, %v451, 0.0
    %v607 = vadd.f32 %v605, %v606
    %v608 = vrot.slane %v607, 4
    %v609 = vadd.f32 %v607, %v608
    %v610 = vrot.slane %v609, 2
    %v611 = vadd.f32 %v609, %v610
    %v612 = vrot.slane %v611, 1
    %v613 = vadd.f32 %v611, %v612
    %v614 = vsel %vm102, %v452, 0.0
    %v615 = vsel %vm102, %v453, 0.0
    %v616 = vadd.f32 %v614, %v615
    %v617 = vrot.slane %v616, 4
    %v618 = vadd.f32 %v616, %v617
    %v619 = vrot.slane %v618, 2
    %v620 = vadd.f32 %v618, %v619
    %v621 = vrot.slane %v620, 1
    %v622 = vadd.f32 %v620, %v621
    %v623 = vsel %vm102, %v454, 0.0
    %v624 = vsel %vm102, %v455, 0.0
    %v625 = vadd.f32 %v623, %v624
    %v626 = vrot.slane %v625, 4
    %v627 = vadd.f32 %v625, %v626
    %v628 = vrot.slane %v627, 2
    %v629 = vadd.f32 %v627, %v628
    %v630 = vrot.slane %v629, 1
    %v631 = vadd.f32 %v629, %v630
    %v632 = vsel %vm102, %v456, 0.0
    %v633 = vsel %vm102, %v457, 0.0
    %v634 = vadd.f32 %v632, %v633
    %v635 = vrot.slane %v634, 4
    %v636 = vadd.f32 %v634, %v635
    %v637 = vrot.slane %v636, 2
    %v638 = vadd.f32 %v636, %v637
    %v639 = vrot.slane %v638, 1
    %v640 = vadd.f32 %v638, %v639
    %v641 = vsel %vm102, %v458, 0.0
    %v642 = vsel %vm102, %v459, 0.0
    %v643 = vadd.f32 %v641, %v642
    %v644 = vrot.slane %v643, 4
    %v645 = vadd.f32 %v643, %v644
    %v646 = vrot.slane %v645, 2
    %v647 = vadd.f32 %v645, %v646
    %v648 = vrot.slane %v647, 1
    %v649 = vadd.f32 %v647, %v648
    %v650 = vsel %vm102, %v460, 0.0
    %v651 = vsel %vm102, %v461, 0.0
    %v652 = vadd.f32 %v650, %v651
    %v653 = vrot.slane %v652, 4
    %v654 = vadd.f32 %v652, %v653
    %v655 = vrot.slane %v654, 2
    %v656 = vadd.f32 %v654, %v655
    %v657 = vrot.slane %v656, 1
    %v658 = vadd.f32 %v656, %v657
    %v659 = vsel %vm102, %v462, 0.0
    %v660 = vsel %vm102, %v463, 0.0
    %v661 = vadd.f32 %v659, %v660
    %v662 = vrot.slane %v661, 4
    %v663 = vadd.f32 %v661, %v662
    %v664 = vrot.slane %v663, 2
    %v665 = vadd.f32 %v663, %v664
    %v666 = vrot.slane %v665, 1
    %v667 = vadd.f32 %v665, %v666
    %v668 = vsel %vm102, %v464, 0.0
    %v669 = vsel %vm102, %v465, 0.0
    %v670 = vadd.f32 %v668, %v669
    %v671 = vrot.slane %v670, 4
    %v672 = vadd.f32 %v670, %v671
    %v673 = vrot.slane %v672, 2
    %v674 = vadd.f32 %v672, %v673
    %v675 = vrot.slane %v674, 1
    %v676 = vadd.f32 %v674, %v675
    %v677 = vsel %vm102, %v466, 0.0
    %v678 = vsel %vm102, %v467, 0.0
    %v679 = vadd.f32 %v677, %v678
    %v680 = vrot.slane %v679, 4
    %v681 = vadd.f32 %v679, %v680
    %v682 = vrot.slane %v681, 2
    %v683 = vadd.f32 %v681, %v682
    %v684 = vrot.slane %v683, 1
    %v685 = vadd.f32 %v683, %v684
    %v686 = vsel %vm102, %v468, 0.0
    %v687 = vsel %vm102, %v469, 0.0
    %v688 = vadd.f32 %v686, %v687
    %v689 = vrot.slane %v688, 4
    %v690 = vadd.f32 %v688, %v689
    %v691 = vrot.slane %v690, 2
    %v692 = vadd.f32 %v690, %v691
    %v693 = vrot.slane %v692, 1
    %v694 = vadd.f32 %v692, %v693
    %v695 = vsel %vm102, %v470, 0.0
    %v696 = vsel %vm102, %v471, 0.0
    %v697 = vadd.f32 %v695, %v696
    %v698 = vrot.slane %v697, 4
    %v699 = vadd.f32 %v697, %v698
    %v700 = vrot.slane %v699, 2
    %v701 = vadd.f32 %v699, %v700
    %v702 = vrot.slane %v701, 1
    %v703 = vadd.f32 %v701, %v702
    %v704 = vsel %vm102, %v472, 0.0
    %v705 = vsel %vm102, %v473, 0.0
    %v706 = vadd.f32 %v704, %v705
    %v707 = vrot.slane %v706, 4
    %v708 = vadd.f32 %v706, %v707
    %v709 = vrot.slane %v708, 2
    %v710 = vadd.f32 %v708, %v709
    %v711 = vrot.slane %v710, 1
    %v712 = vadd.f32 %v710, %v711
    %v713 = vsel %vm102, %v474, 0.0
    %v714 = vsel %vm102, %v475, 0.0
    %v715 = vadd.f32 %v713, %v714
    %v716 = vrot.slane %v715, 4
    %v717 = vadd.f32 %v715, %v716
    %v718 = vrot.slane %v717, 2
    %v719 = vadd.f32 %v717, %v718
    %v720 = vrot.slane %v719, 1
    %v721 = vadd.f32 %v719, %v720
    %v722 = vsel %vm102, %v476, 0.0
    %v723 = vsel %vm102, %v477, 0.0
    %v724 = vadd.f32 %v722, %v723
    %v725 = vrot.slane %v724, 4
    %v726 = vadd.f32 %v724, %v725
    %v727 = vrot.slane %v726, 2
    %v728 = vadd.f32 %v726, %v727
    %v729 = vrot.slane %v728, 1
    %v730 = vadd.f32 %v728, %v729
    %v731 = vsel %vm102, %v478, 0.0
    %v732 = vsel %vm102, %v479, 0.0
    %v733 = vadd.f32 %v731, %v732
    %v734 = vrot.slane %v733, 4
    %v735 = vadd.f32 %v733, %v734
    %v736 = vrot.slane %v735, 2
    %v737 = vadd.f32 %v735, %v736
    %v738 = vrot.slane %v737, 1
    %v739 = vadd.f32 %v737, %v738
    %v740 = vsel %vm102, %v480, 0.0
    %v741 = vsel %vm102, %v481, 0.0
    %v742 = vadd.f32 %v740, %v741
    %v743 = vrot.slane %v742, 4
    %v744 = vadd.f32 %v742, %v743
    %v745 = vrot.slane %v744, 2
    %v746 = vadd.f32 %v744, %v745
    %v747 = vrot.slane %v746, 1
    %v748 = vadd.f32 %v746, %v747
    %v749 = vsel %vm102, %v482, 0.0
    %v750 = vsel %vm102, %v483, 0.0
    %v751 = vadd.f32 %v749, %v750
    %v752 = vrot.slane %v751, 4
    %v753 = vadd.f32 %v751, %v752
    %v754 = vrot.slane %v753, 2
    %v755 = vadd.f32 %v753, %v754
    %v756 = vrot.slane %v755, 1
    %v757 = vadd.f32 %v755, %v756
    %v758 = vsel %vm102, %v484, 0.0
    %v759 = vsel %vm102, %v485, 0.0
    %v760 = vadd.f32 %v758, %v759
    %v761 = vrot.slane %v760, 4
    %v762 = vadd.f32 %v760, %v761
    %v763 = vrot.slane %v762, 2
    %v764 = vadd.f32 %v762, %v763
    %v765 = vrot.slane %v764, 1
    %v766 = vadd.f32 %v764, %v765
    %v767 = vsel %vm102, %v486, 0.0
    %v768 = vsel %vm102, %v487, 0.0
    %v769 = vadd.f32 %v767, %v768
    %v770 = vrot.slane %v769, 4
    %v771 = vadd.f32 %v769, %v770
    %v772 = vrot.slane %v771, 2
    %v773 = vadd.f32 %v771, %v772
    %v774 = vrot.slane %v773, 1
    %v775 = vadd.f32 %v773, %v774
    %v776 = vmul.f32 %v496, %v391
    %v777 = vmul.f32 %v505, %v391
    %v778 = vmul.f32 %v514, %v391
    %v779 = vmul.f32 %v523, %v391
    %v780 = vmul.f32 %v532, %v391
    %v781 = vmul.f32 %v541, %v391
    %v782 = vmul.f32 %v550, %v391
    %v783 = vmul.f32 %v559, %v391
    %v784 = vmul.f32 %v568, %v391
    %v785 = vmul.f32 %v577, %v391
    %v786 = vmul.f32 %v586, %v391
    %v787 = vmul.f32 %v595, %v391
    %v788 = vmul.f32 %v604, %v391
    %v789 = vmul.f32 %v613, %v391
    %v790 = vmul.f32 %v622, %v391
    %v791 = vmul.f32 %v631, %v391
    %v792 = vmul.f32 %v640, %v391
    %v793 = vmul.f32 %v649, %v391
    %v794 = vmul.f32 %v658, %v391
    %v795 = vmul.f32 %v667, %v391
    %v796 = vmul.f32 %v676, %v391
    %v797 = vmul.f32 %v685, %v391
    %v798 = vmul.f32 %v694, %v391
    %v799 = vmul.f32 %v703, %v391
    %v800 = vmul.f32 %v712, %v391
    %v801 = vmul.f32 %v721, %v391
    %v802 = vmul.f32 %v730, %v391
    %v803 = vmul.f32 %v739, %v391
    %v804 = vmul.f32 %v748, %v391
    %v805 = vmul.f32 %v757, %v391
    %v806 = vmul.f32 %v766, %v391
    %v807 = vmul.f32 %v775, %v391
    %v808 = vmul.f32 %v392, %v392
    %v809 = vmul.f32 %v393, %v393
    %v810 = vmul.f32 %v394, %v394
    %v811 = vmul.f32 %v395, %v395
    %v812 = vmul.f32 %v396, %v396
    %v813 = vmul.f32 %v397, %v397
    %v814 = vmul.f32 %v398, %v398
    %v815 = vmul.f32 %v399, %v399
    %v816 = vmul.f32 %v400, %v400
    %v817 = vmul.f32 %v401, %v401
    %v818 = vmul.f32 %v402, %v402
    %v819 = vmul.f32 %v403, %v403
    %v820 = vmul.f32 %v404, %v404
    %v821 = vmul.f32 %v405, %v405
    %v822 = vmul.f32 %v406, %v406
    %v823 = vmul.f32 %v407, %v407
    %v824 = vmul.f32 %v408, %v408
    %v825 = vmul.f32 %v409, %v409
    %v826 = vmul.f32 %v410, %v410
    %v827 = vmul.f32 %v411, %v411
    %v828 = vmul.f32 %v412, %v412
    %v829 = vmul.f32 %v413, %v413
    %v830 = vmul.f32 %v414, %v414
    %v831 = vmul.f32 %v415, %v415
    %v832 = vmul.f32 %v416, %v416
    %v833 = vmul.f32 %v417, %v417
    %v834 = vmul.f32 %v418, %v418
    %v835 = vmul.f32 %v419, %v419
    %v836 = vmul.f32 %v420, %v420
    %v837 = vmul.f32 %v421, %v421
    %v838 = vmul.f32 %v422, %v422
    %v839 = vmul.f32 %v423, %v423
    %v840 = vsub.f32 %v776, %v808
    %v841 = vsub.f32 %v777, %v809
    %v842 = vsub.f32 %v778, %v810
    %v843 = vsub.f32 %v779, %v811
    %v844 = vsub.f32 %v780, %v812
    %v845 = vsub.f32 %v781, %v813
    %v846 = vsub.f32 %v782, %v814
    %v847 = vsub.f32 %v783, %v815
    %v848 = vsub.f32 %v784, %v816
    %v849 = vsub.f32 %v785, %v817
    %v850 = vsub.f32 %v786, %v818
    %v851 = vsub.f32 %v787, %v819
    %v852 = vsub.f32 %v788, %v820
    %v853 = vsub.f32 %v789, %v821
    %v854 = vsub.f32 %v790, %v822
    %v855 = vsub.f32 %v791, %v823
    %v856 = vsub.f32 %v792, %v824
    %v857 = vsub.f32 %v793, %v825
    %v858 = vsub.f32 %v794, %v826
    %v859 = vsub.f32 %v795, %v827
    %v860 = vsub.f32 %v796, %v828
    %v861 = vsub.f32 %v797, %v829
    %v862 = vsub.f32 %v798, %v830
    %v863 = vsub.f32 %v799, %v831
    %v864 = vsub.f32 %v800, %v832
    %v865 = vsub.f32 %v801, %v833
    %v866 = vsub.f32 %v802, %v834
    %v867 = vsub.f32 %v803, %v835
    %v868 = vsub.f32 %v804, %v836
    %v869 = vsub.f32 %v805, %v837
    %v870 = vsub.f32 %v806, %v838
    %v871 = vsub.f32 %v807, %v839
    %v872 = vadd.f32 %v840, 1e-05
    %v873 = vadd.f32 %v841, 1e-05
    %v874 = vadd.f32 %v842, 1e-05
    %v875 = vadd.f32 %v843, 1e-05
    %v876 = vadd.f32 %v844, 1e-05
    %v877 = vadd.f32 %v845, 1e-05
    %v878 = vadd.f32 %v846, 1e-05
    %v879 = vadd.f32 %v847, 1e-05
    %v880 = vadd.f32 %v848, 1e-05
    %v881 = vadd.f32 %v849, 1e-05
    %v882 = vadd.f32 %v850, 1e-05
    %v883 = vadd.f32 %v851, 1e-05
    %v884 = vadd.f32 %v852, 1e-05
    %v885 = vadd.f32 %v853, 1e-05
    %v886 = vadd.f32 %v854, 1e-05
    %v887 = vadd.f32 %v855, 1e-05
    %v888 = vadd.f32 %v856, 1e-05
    %v889 = vadd.f32 %v857, 1e-05
    %v890 = vadd.f32 %v858, 1e-05
    %v891 = vadd.f32 %v859, 1e-05
    %v892 = vadd.f32 %v860, 1e-05
    %v893 = vadd.f32 %v861, 1e-05
    %v894 = vadd.f32 %v862, 1e-05
    %v895 = vadd.f32 %v863, 1e-05
    %v896 = vadd.f32 %v864, 1e-05
    %v897 = vadd.f32 %v865, 1e-05
    %v898 = vadd.f32 %v866, 1e-05
    %v899 = vadd.f32 %v867, 1e-05
    %v900 = vadd.f32 %v868, 1e-05
    %v901 = vadd.f32 %v869, 1e-05
    %v902 = vadd.f32 %v870, 1e-05
    %v903 = vadd.f32 %v871, 1e-05
    %v904 = vrsqrt.pop %v872
    %v905 = vrsqrt.pop %v873
    %v906 = vrsqrt.pop %v874
    %v907 = vrsqrt.pop %v875
    %v908 = vrsqrt.pop %v876
    %v909 = vrsqrt.pop %v877
    %v910 = vrsqrt.pop %v878
    %v911 = vrsqrt.pop %v879
    %v912 = vrsqrt.pop %v880
    %v913 = vrsqrt.pop %v881
    %v914 = vrsqrt.pop %v882
    %v915 = vrsqrt.pop %v883
    %v916 = vrsqrt.pop %v884
    %v917 = vrsqrt.pop %v885
    %v918 = vrsqrt.pop %v886
    %v919 = vrsqrt.pop %v887
    %v920 = vrsqrt.pop %v888
    %v921 = vrsqrt.pop %v889
    %v922 = vrsqrt.pop %v890
    %v923 = vrsqrt.pop %v891
    %v924 = vrsqrt.pop %v892
    %v925 = vrsqrt.pop %v893
    %v926 = vrsqrt.pop %v894
    %v927 = vrsqrt.pop %v895
    %v928 = vrsqrt.pop %v896
    %v929 = vrsqrt.pop %v897
    %v930 = vrsqrt.pop %v898
    %v931 = vrsqrt.pop %v899
    %v932 = vrsqrt.pop %v900
    %v933 = vrsqrt.pop %v901
    %v934 = vrsqrt.pop %v902
    %v935 = vrsqrt.pop %v903
    %v936 = vld [vmem:[%s2] sm:$0xff]
    %v937 = vld [vmem:[%s2 + $0x8] sm:$0xff]
    %v938 = vld [vmem:[%s3] sm:$0xff]
    %v939 = vld [vmem:[%s3 + $0x8] sm:$0xff]
    %v940 = vsub.f32 %v38, %v392
    %v941 = vsub.f32 %v39, %v392
    %v942 = vsub.f32 %v40, %v393
    %v943 = vsub.f32 %v41, %v393
    %v944 = vsub.f32 %v42, %v394
    %v945 = vsub.f32 %v43, %v394
    %v946 = vsub.f32 %v44, %v395
    %v947 = vsub.f32 %v45, %v395
    %v948 = vsub.f32 %v46, %v396
    %v949 = vsub.f32 %v47, %v396
    %v950 = vsub.f32 %v48, %v397
    %v951 = vsub.f32 %v49, %v397
    %v952 = vsub.f32 %v50, %v398
    %v953 = vsub.f32 %v51, %v398
    %v954 = vsub.f32 %v52, %v399
    %v955 = vsub.f32 %v53, %v399
    %v956 = vsub.f32 %v54, %v400
    %v957 = vsub.f32 %v55, %v400
    %v958 = vsub.f32 %v56, %v401
    %v959 = vsub.f32 %v57, %v401
    %v960 = vsub.f32 %v58, %v402
    %v961 = vsub.f32 %v59, %v402
    %v962 = vsub.f32 %v60, %v403
    %v963 = vsub.f32 %v61, %v403
    %v964 = vsub.f32 %v62, %v404
    %v965 = vsub.f32 %v63, %v404
    %v966 = vsub.f32 %v64, %v405
    %v967 = vsub.f32 %v65, %v405
    %v968 = vsub.f32 %v66, %v406
    %v969 = vsub.f32 %v67, %v406
    %v970 = vsub.f32 %v68, %v407
    %v971 = vsub.f32 %v69, %v407
    %v972 = vsub.f32 %v70, %v408
    %v973 = vsub.f32 %v71, %v408
    %v974 = vsub.f32 %v72, %v409
    %v975 = vsub.f32 %v73, %v409
    %v976 = vsub.f32 %v74, %v410
    %v977 = vsub.f32 %v75, %v410
    %v978 = vsub.f32 %v76, %v411
    %v979 = vsub.f32 %v77, %v411
    %v980 = vsub.f32 %v78, %v412
    %v981 = vsub.f32 %v79, %v412
    %v982 = vsub.f32 %v80, %v413
    %v983 = vsub.f32 %v81, %v413
    %v984 = vsub.f32 %v82, %v414
    %v985 = vsub.f32 %v83, %v414
    %v986 = vsub.f32 %v84, %v415
    %v987 = vsub.f32 %v85, %v415
    %v988 = vsub.f32 %v86, %v416
    %v989 = vsub.f32 %v87, %v416
    %v990 = vsub.f32 %v88, %v417
    %v991 = vsub.f32 %v89, %v417
    %v992 = vsub.f32 %v90, %v418
    %v993 = vsub.f32 %v91, %v418
    %v994 = vsub.f32 %v92, %v419
    %v995 = vsub.f32 %v93, %v419
    %v996 = vsub.f32 %v94, %v420
    %v997 = vsub.f32 %v95, %v420
    %v998 = vsub.f32 %v96, %v421
    %v999 = vsub.f32 %v97, %v421
    %v1000 = vsub.f32 %v98, %v422
    %v1001 = vsub.f32 %v99, %v422
    %v1002 = vsub.f32 %v100, %v423
    %v1003 = vsub.f32 %v101, %v423
    %v1004 = vmul.f32 %v940, %v904
    %v1005 = vmul.f32 %v941, %v904
    %v1006 = vmul.f32 %v942, %v905
    %v1007 = vmul.f32 %v943, %v905
    %v1008 = vmul.f32 %v944, %v906
    %v1009 = vmul.f32 %v945, %v906
    %v1010 = vmul.f32 %v946, %v907
    %v1011 = vmul.f32 %v947, %v907
    %v1012 = vmul.f32 %v948, %v908
    %v1013 = vmul.f32 %v949, %v908
    %v1014 = vmul.f32 %v950, %v909
    %v1015 = vmul.f32 %v951, %v909
    %v1016 = vmul.f32 %v952, %v910
    %v1017 = vmul.f32 %v953, %v910
    %v1018 = vmul.f32 %v954, %v911
    %v1019 = vmul.f32 %v955, %v911
    %v1020 = vmul.f32 %v956, %v912
    %v1021 = vmul.f32 %v957, %v912
    %v1022 = vmul.f32 %v958, %v913
    %v1023 = vmul.f32 %v959, %v913
    %v1024 = vmul.f32 %v960, %v914
    %v1025 = vmul.f32 %v961, %v914
    %v1026 = vmul.f32 %v962, %v915
    %v1027 = vmul.f32 %v963, %v915
    %v1028 = vmul.f32 %v964, %v916
    %v1029 = vmul.f32 %v965, %v916
    %v1030 = vmul.f32 %v966, %v917
    %v1031 = vmul.f32 %v967, %v917
    %v1032 = vmul.f32 %v968, %v918
    %v1033 = vmul.f32 %v969, %v918
    %v1034 = vmul.f32 %v970, %v919
    %v1035 = vmul.f32 %v971, %v919
    %v1036 = vmul.f32 %v972, %v920
    %v1037 = vmul.f32 %v973, %v920
    %v1038 = vmul.f32 %v974, %v921
    %v1039 = vmul.f32 %v975, %v921
    %v1040 = vmul.f32 %v976, %v922
    %v1041 = vmul.f32 %v977, %v922
    %v1042 = vmul.f32 %v978, %v923
    %v1043 = vmul.f32 %v979, %v923
    %v1044 = vmul.f32 %v980, %v924
    %v1045 = vmul.f32 %v981, %v924
    %v1046 = vmul.f32 %v982, %v925
    %v1047 = vmul.f32 %v983, %v925
    %v1048 = vmul.f32 %v984, %v926
    %v1049 = vmul.f32 %v985, %v926
    %v1050 = vmul.f32 %v986, %v927
    %v1051 = vmul.f32 %v987, %v927
    %v1052 = vmul.f32 %v988, %v928
    %v1053 = vmul.f32 %v989, %v928
    %v1054 = vmul.f32 %v990, %v929
    %v1055 = vmul.f32 %v991, %v929
    %v1056 = vmul.f32 %v992, %v930
    %v1057 = vmul.f32 %v993, %v930
    %v1058 = vmul.f32 %v994, %v931
    %v1059 = vmul.f32 %v995, %v931
    %v1060 = vmul.f32 %v996, %v932
    %v1061 = vmul.f32 %v997, %v932
    %v1062 = vmul.f32 %v998, %v933
    %v1063 = vmul.f32 %v999, %v933
    %v1064 = vmul.f32 %v1000, %v934
    %v1065 = vmul.f32 %v1001, %v934
    %v1066 = vmul.f32 %v1002, %v935
    %v1067 = vmul.f32 %v1003, %v935
    %v1068 = vmul.f32 %v1004, %v936
    %v1069 = vmul.f32 %v1005, %v937
    %v1070 = vmul.f32 %v1006, %v936
    %v1071 = vmul.f32 %v1007, %v937
    %v1072 = vmul.f32 %v1008, %v936
    %v1073 = vmul.f32 %v1009, %v937
    %v1074 = vmul.f32 %v1010, %v936
    %v1075 = vmul.f32 %v1011, %v937
    %v1076 = vmul.f32 %v1012, %v936
    %v1077 = vmul.f32 %v1013, %v937
    %v1078 = vmul.f32 %v1014, %v936
    %v1079 = vmul.f32 %v1015, %v937
    %v1080 = vmul.f32 %v1016, %v936
    %v1081 = vmul.f32 %v1017, %v937
    %v1082 = vmul.f32 %v1018, %v936
    %v1083 = vmul.f32 %v1019, %v937
    %v1084 = vmul.f32 %v1020, %v936
    %v1085 = vmul.f32 %v1021, %v937
    %v1086 = vmul.f32 %v1022, %v936
    %v1087 = vmul.f32 %v1023, %v937
    %v1088 = vmul.f32 %v1024, %v936
    %v1089 = vmul.f32 %v1025, %v937
    %v1090 = vmul.f32 %v1026, %v936
    %v1091 = vmul.f32 %v1027, %v937
    %v1092 = vmul.f32 %v1028, %v936
    %v1093 = vmul.f32 %v1029, %v937
    %v1094 = vmul.f32 %v1030, %v936
    %v1095 = vmul.f32 %v1031, %v937
    %v1096 = vmul.f32 %v1032, %v936
    %v1097 = vmul.f32 %v1033, %v937
    %v1098 = vmul.f32 %v1034, %v936
    %v1099 = vmul.f32 %v1035, %v937
    %v1100 = vmul.f32 %v1036, %v936
    %v1101 = vmul.f32 %v1037, %v937
    %v1102 = vmul.f32 %v1038, %v936
    %v1103 = vmul.f32 %v1039, %v937
    %v1104 = vmul.f32 %v1040, %v936
    %v1105 = vmul.f32 %v1041, %v937
    %v1106 = vmul.f32 %v1042, %v936
    %v1107 = vmul.f32 %v1043, %v937
    %v1108 = vmul.f32 %v1044, %v936
    %v1109 = vmul.f32 %v1045, %v937
    %v1110 = vmul.f32 %v1046, %v936
    %v1111 = vmul.f32 %v1047, %v937
    %v1112 = vmul.f32 %v1048, %v936
    %v1113 = vmul.f32 %v1049, %v937
    %v1114 = vmul.f32 %v1050, %v936
    %v1115 = vmul.f32 %v1051, %v937
    %v1116 = vmul.f32 %v1052, %v936
    %v1117 = vmul.f32 %v1053, %v937
    %v1118 = vmul.f32 %v1054, %v936
    %v1119 = vmul.f32 %v1055, %v937
    %v1120 = vmul.f32 %v1056, %v936
    %v1121 = vmul.f32 %v1057, %v937
    %v1122 = vmul.f32 %v1058, %v936
    %v1123 = vmul.f32 %v1059, %v937
    %v1124 = vmul.f32 %v1060, %v936
    %v1125 = vmul.f32 %v1061, %v937
    %v1126 = vmul.f32 %v1062, %v936
    %v1127 = vmul.f32 %v1063, %v937
    %v1128 = vmul.f32 %v1064, %v936
    %v1129 = vmul.f32 %v1065, %v937
    %v1130 = vmul.f32 %v1066, %v936
    %v1131 = vmul.f32 %v1067, %v937
    %v1132 = vadd.f32 %v1068, %v938
    %v1133 = vadd.f32 %v1069, %v939
    %v1134 = vadd.f32 %v1070, %v938
    %v1135 = vadd.f32 %v1071, %v939
    %v1136 = vadd.f32 %v1072, %v938
    %v1137 = vadd.f32 %v1073, %v939
    %v1138 = vadd.f32 %v1074, %v938
    %v1139 = vadd.f32 %v1075, %v939
    %v1140 = vadd.f32 %v1076, %v938
    %v1141 = vadd.f32 %v1077, %v939
    %v1142 = vadd.f32 %v1078, %v938
    %v1143 = vadd.f32 %v1079, %v939
    %v1144 = vadd.f32 %v1080, %v938
    %v1145 = vadd.f32 %v1081, %v939
    %v1146 = vadd.f32 %v1082, %v938
    %v1147 = vadd.f32 %v1083, %v939
    %v1148 = vadd.f32 %v1084, %v938
    %v1149 = vadd.f32 %v1085, %v939
    %v1150 = vadd.f32 %v1086, %v938
    %v1151 = vadd.f32 %v1087, %v939
    %v1152 = vadd.f32 %v1088, %v938
    %v1153 = vadd.f32 %v1089, %v939
    %v1154 = vadd.f32 %v1090, %v938
    %v1155 = vadd.f32 %v1091, %v939
    %v1156 = vadd.f32 %v1092, %v938
    %v1157 = vadd.f32 %v1093, %v939
    %v1158 = vadd.f32 %v1094, %v938
    %v1159 = vadd.f32 %v1095, %v939
    %v1160 = vadd.f32 %v1096, %v938
    %v1161 = vadd.f32 %v1097, %v939
    %v1162 = vadd.f32 %v1098, %v938
    %v1163 = vadd.f32 %v1099, %v939
    %v1164 = vadd.f32 %v1100, %v938
    %v1165 = vadd.f32 %v1101, %v939
    %v1166 = vadd.f32 %v1102, %v938
    %v1167 = vadd.f32 %v1103, %v939
    %v1168 = vadd.f32 %v1104, %v938
    %v1169 = vadd.f32 %v1105, %v939
    %v1170 = vadd.f32 %v1106, %v938
    %v1171 = vadd.f32 %v1107, %v939
    %v1172 = vadd.f32 %v1108, %v938
    %v1173 = vadd.f32 %v1109, %v939
    %v1174 = vadd.f32 %v1110, %v938
    %v1175 = vadd.f32 %v1111, %v939
    %v1176 = vadd.f32 %v1112, %v938
    %v1177 = vadd.f32 %v1113, %v939
    %v1178 = vadd.f32 %v1114, %v938
    %v1179 = vadd.f32 %v1115, %v939
    %v1180 = vadd.f32 %v1116, %v938
    %v1181 = vadd.f32 %v1117, %v939
    %v1182 = vadd.f32 %v1118, %v938
    %v1183 = vadd.f32 %v1119, %v939
    %v1184 = vadd.f32 %v1120, %v938
    %v1185 = vadd.f32 %v1121, %v939
    %v1186 = vadd.f32 %v1122, %v938
    %v1187 = vadd.f32 %v1123, %v939
    %v1188 = vadd.f32 %v1124, %v938
    %v1189 = vadd.f32 %v1125, %v939
    %v1190 = vadd.f32 %v1126, %v938
    %v1191 = vadd.f32 %v1127, %v939
    %v1192 = vadd.f32 %v1128, %v938
    %v1193 = vadd.f32 %v1129, %v939
    %v1194 = vadd.f32 %v1130, %v938
    %v1195 = vadd.f32 %v1131, %v939
    %v1196 = vsub.f32 0.0, %v1132
    %v1197 = vsub.f32 0.0, %v1133
    %v1198 = vsub.f32 0.0, %v1134
    %v1199 = vsub.f32 0.0, %v1135
    %v1200 = vsub.f32 0.0, %v1136
    %v1201 = vsub.f32 0.0, %v1137
    %v1202 = vsub.f32 0.0, %v1138
    %v1203 = vsub.f32 0.0, %v1139
    %v1204 = vsub.f32 0.0, %v1140
    %v1205 = vsub.f32 0.0, %v1141
    %v1206 = vsub.f32 0.0, %v1142
    %v1207 = vsub.f32 0.0, %v1143
    %v1208 = vsub.f32 0.0, %v1144
    %v1209 = vsub.f32 0.0, %v1145
    %v1210 = vsub.f32 0.0, %v1146
    %v1211 = vsub.f32 0.0, %v1147
    %v1212 = vsub.f32 0.0, %v1148
    %v1213 = vsub.f32 0.0, %v1149
    %v1214 = vsub.f32 0.0, %v1150
    %v1215 = vsub.f32 0.0, %v1151
    %v1216 = vsub.f32 0.0, %v1152
    %v1217 = vsub.f32 0.0, %v1153
    %v1218 = vsub.f32 0.0, %v1154
    %v1219 = vsub.f32 0.0, %v1155
    %v1220 = vsub.f32 0.0, %v1156
    %v1221 = vsub.f32 0.0, %v1157
    %v1222 = vsub.f32 0.0, %v1158
    %v1223 = vsub.f32 0.0, %v1159
    %v1224 = vsub.f32 0.0, %v1160
    %v1225 = vsub.f32 0.0, %v1161
    %v1226 = vsub.f32 0.0, %v1162
    %v1227 = vsub.f32 0.0, %v1163
    %v1228 = vsub.f32 0.0, %v1164
    %v1229 = vsub.f32 0.0, %v1165
    %v1230 = vsub.f32 0.0, %v1166
    %v1231 = vsub.f32 0.0, %v1167
    %v1232 = vsub.f32 0.0, %v1168
    %v1233 = vsub.f32 0.0, %v1169
    %v1234 = vsub.f32 0.0, %v1170
    %v1235 = vsub.f32 0.0, %v1171
    %v1236 = vsub.f32 0.0, %v1172
    %v1237 = vsub.f32 0.0, %v1173
    %v1238 = vsub.f32 0.0, %v1174
    %v1239 = vsub.f32 0.0, %v1175
    %v1240 = vsub.f32 0.0, %v1176
    %v1241 = vsub.f32 0.0, %v1177
    %v1242 = vsub.f32 0.0, %v1178
    %v1243 = vsub.f32 0.0, %v1179
    %v1244 = vsub.f32 0.0, %v1180
    %v1245 = vsub.f32 0.0, %v1181
    %v1246 = vsub.f32 0.0, %v1182
    %v1247 = vsub.f32 0.0, %v1183
    %v1248 = vsub.f32 0.0, %v1184
    %v1249 = vsub.f32 0.0, %v1185
    %v1250 = vsub.f32 0.0, %v1186
    %v1251 = vsub.f32 0.0, %v1187
    %v1252 = vsub.f32 0.0, %v1188
    %v1253 = vsub.f32 0.0, %v1189
    %v1254 = vsub.f32 0.0, %v1190
    %v1255 = vsub.f32 0.0, %v1191
    %v1256 = vsub.f32 0.0, %v1192
    %v1257 = vsub.f32 0.0, %v1193
    %v1258 = vsub.f32 0.0, %v1194
    %v1259 = vsub.f32 0.0, %v1195
    %v1260 = vmul.f32 %v1196, 1.442695
    %v1261 = vpow.pop %v1260
    %v1262 = vmul.f32 %v1197, 1.442695
    %v1263 = vpow.pop %v1262
    %v1264 = vmul.f32 %v1198, 1.442695
    %v1265 = vpow.pop %v1264
    %v1266 = vmul.f32 %v1199, 1.442695
    %v1267 = vpow.pop %v1266
    %v1268 = vmul.f32 %v1200, 1.442695
    %v1269 = vpow.pop %v1268
    %v1270 = vmul.f32 %v1201, 1.442695
    %v1271 = vpow.pop %v1270
    %v1272 = vmul.f32 %v1202, 1.442695
    %v1273 = vpow.pop %v1272
    %v1274 = vmul.f32 %v1203, 1.442695
    %v1275 = vpow.pop %v1274
    %v1276 = vmul.f32 %v1204, 1.442695
    %v1277 = vpow.pop %v1276
    %v1278 = vmul.f32 %v1205, 1.442695
    %v1279 = vpow.pop %v1278
    %v1280 = vmul.f32 %v1206, 1.442695
    %v1281 = vpow.pop %v1280
    %v1282 = vmul.f32 %v1207, 1.442695
    %v1283 = vpow.pop %v1282
    %v1284 = vmul.f32 %v1208, 1.442695
    %v1285 = vpow.pop %v1284
    %v1286 = vmul.f32 %v1209, 1.442695
    %v1287 = vpow.pop %v1286
    %v1288 = vmul.f32 %v1210, 1.442695
    %v1289 = vpow.pop %v1288
    %v1290 = vmul.f32 %v1211, 1.442695
    %v1291 = vpow.pop %v1290
    %v1292 = vmul.f32 %v1212, 1.442695
    %v1293 = vpow.pop %v1292
    %v1294 = vmul.f32 %v1213, 1.442695
    %v1295 = vpow.pop %v1294
    %v1296 = vmul.f32 %v1214, 1.442695
    %v1297 = vpow.pop %v1296
    %v1298 = vmul.f32 %v1215, 1.442695
    %v1299 = vpow.pop %v1298
    %v1300 = vmul.f32 %v1216, 1.442695
    %v1301 = vpow.pop %v1300
    %v1302 = vmul.f32 %v1217, 1.442695
    %v1303 = vpow.pop %v1302
    %v1304 = vmul.f32 %v1218, 1.442695
    %v1305 = vpow.pop %v1304
    %v1306 = vmul.f32 %v1219, 1.442695
    %v1307 = vpow.pop %v1306
    %v1308 = vmul.f32 %v1220, 1.442695
    %v1309 = vpow.pop %v1308
    %v1310 = vmul.f32 %v1221, 1.442695
    %v1311 = vpow.pop %v1310
    %v1312 = vmul.f32 %v1222, 1.442695
    %v1313 = vpow.pop %v1312
    %v1314 = vmul.f32 %v1223, 1.442695
    %v1315 = vpow.pop %v1314
    %v1316 = vmul.f32 %v1224, 1.442695
    %v1317 = vpow.pop %v1316
    %v1318 = vmul.f32 %v1225, 1.442695
    %v1319 = vpow.pop %v1318
    %v1320 = vmul.f32 %v1226, 1.442695
    %v1321 = vpow.pop %v1320
    %v1322 = vmul.f32 %v1227, 1.442695
    %v1323 = vpow.pop %v1322
    %v1324 = vmul.f32 %v1228, 1.442695
    %v1325 = vpow.pop %v1324
    %v1326 = vmul.f32 %v1229, 1.442695
    %v1327 = vpow.pop %v1326
    %v1328 = vmul.f32 %v1230, 1.442695
    %v1329 = vpow.pop %v1328
    %v1330 = vmul.f32 %v1231, 1.442695
    %v1331 = vpow.pop %v1330
    %v1332 = vmul.f32 %v1232, 1.442695
    %v1333 = vpow.pop %v1332
    %v1334 = vmul.f32 %v1233, 1.442695
    %v1335 = vpow.pop %v1334
    %v1336 = vmul.f32 %v1234, 1.442695
    %v1337 = vpow.pop %v1336
    %v1338 = vmul.f32 %v1235, 1.442695
    %v1339 = vpow.pop %v1338
    %v1340 = vmul.f32 %v1236, 1.442695
    %v1341 = vpow.pop %v1340
    %v1342 = vmul.f32 %v1237, 1.442695
    %v1343 = vpow.pop %v1342
    %v1344 = vmul.f32 %v1238, 1.442695
    %v1345 = vpow.pop %v1344
    %v1346 = vmul.f32 %v1239, 1.442695
    %v1347 = vpow.pop %v1346
    %v1348 = vmul.f32 %v1240, 1.442695
    %v1349 = vpow.pop %v1348
    %v1350 = vmul.f32 %v1241, 1.442695
    %v1351 = vpow.pop %v1350
    %v1352 = vmul.f32 %v1242, 1.442695
    %v1353 = vpow.pop %v1352
    %v1354 = vmul.f32 %v1243, 1.442695
    %v1355 = vpow.pop %v1354
    %v1356 = vmul.f32 %v1244, 1.442695
    %v1357 = vpow.pop %v1356
    %v1358 = vmul.f32 %v1245, 1.442695
    %v1359 = vpow.pop %v1358
    %v1360 = vmul.f32 %v1246, 1.442695
    %v1361 = vpow.pop %v1360
    %v1362 = vmul.f32 %v1247, 1.442695
    %v1363 = vpow.pop %v1362
    %v1364 = vmul.f32 %v1248, 1.442695
    %v1365 = vpow.pop %v1364
    %v1366 = vmul.f32 %v1249, 1.442695
    %v1367 = vpow.pop %v1366
    %v1368 = vmul.f32 %v1250, 1.442695
    %v1369 = vpow.pop %v1368
    %v1370 = vmul.f32 %v1251, 1.442695
    %v1371 = vpow.pop %v1370
    %v1372 = vmul.f32 %v1252, 1.442695
    %v1373 = vpow.pop %v1372
    %v1374 = vmul.f32 %v1253, 1.442695
    %v1375 = vpow.pop %v1374
    %v1376 = vmul.f32 %v1254, 1.442695
    %v1377 = vpow.pop %v1376
    %v1378 = vmul.f32 %v1255, 1.442695
    %v1379 = vpow.pop %v1378
    %v1380 = vmul.f32 %v1256, 1.442695
    %v1381 = vpow.pop %v1380
    %v1382 = vmul.f32 %v1257, 1.442695
    %v1383 = vpow.pop %v1382
    %v1384 = vmul.f32 %v1258, 1.442695
    %v1385 = vpow.pop %v1384
    %v1386 = vmul.f32 %v1259, 1.442695
    %v1387 = vpow.pop %v1386
    %v1388 = vadd.f32 %v1261, 1.0
    %v1389 = vadd.f32 %v1263, 1.0
    %v1390 = vadd.f32 %v1265, 1.0
    %v1391 = vadd.f32 %v1267, 1.0
    %v1392 = vadd.f32 %v1269, 1.0
    %v1393 = vadd.f32 %v1271, 1.0
    %v1394 = vadd.f32 %v1273, 1.0
    %v1395 = vadd.f32 %v1275, 1.0
    %v1396 = vadd.f32 %v1277, 1.0
    %v1397 = vadd.f32 %v1279, 1.0
    %v1398 = vadd.f32 %v1281, 1.0
    %v1399 = vadd.f32 %v1283, 1.0
    %v1400 = vadd.f32 %v1285, 1.0
    %v1401 = vadd.f32 %v1287, 1.0
    %v1402 = vadd.f32 %v1289, 1.0
    %v1403 = vadd.f32 %v1291, 1.0
    %v1404 = vadd.f32 %v1293, 1.0
    %v1405 = vadd.f32 %v1295, 1.0
    %v1406 = vadd.f32 %v1297, 1.0
    %v1407 = vadd.f32 %v1299, 1.0
    %v1408 = vadd.f32 %v1301, 1.0
    %v1409 = vadd.f32 %v1303, 1.0
    %v1410 = vadd.f32 %v1305, 1.0
    %v1411 = vadd.f32 %v1307, 1.0
    %v1412 = vadd.f32 %v1309, 1.0
    %v1413 = vadd.f32 %v1311, 1.0
    %v1414 = vadd.f32 %v1313, 1.0
    %v1415 = vadd.f32 %v1315, 1.0
    %v1416 = vadd.f32 %v1317, 1.0
    %v1417 = vadd.f32 %v1319, 1.0
    %v1418 = vadd.f32 %v1321, 1.0
    %v1419 = vadd.f32 %v1323, 1.0
    %v1420 = vadd.f32 %v1325, 1.0
    %v1421 = vadd.f32 %v1327, 1.0
    %v1422 = vadd.f32 %v1329, 1.0
    %v1423 = vadd.f32 %v1331, 1.0
    %v1424 = vadd.f32 %v1333, 1.0
    %v1425 = vadd.f32 %v1335, 1.0
    %v1426 = vadd.f32 %v1337, 1.0
    %v1427 = vadd.f32 %v1339, 1.0
    %v1428 = vadd.f32 %v1341, 1.0
    %v1429 = vadd.f32 %v1343, 1.0
    %v1430 = vadd.f32 %v1345, 1.0
    %v1431 = vadd.f32 %v1347, 1.0
    %v1432 = vadd.f32 %v1349, 1.0
    %v1433 = vadd.f32 %v1351, 1.0
    %v1434 = vadd.f32 %v1353, 1.0
    %v1435 = vadd.f32 %v1355, 1.0
    %v1436 = vadd.f32 %v1357, 1.0
    %v1437 = vadd.f32 %v1359, 1.0
    %v1438 = vadd.f32 %v1361, 1.0
    %v1439 = vadd.f32 %v1363, 1.0
    %v1440 = vadd.f32 %v1365, 1.0
    %v1441 = vadd.f32 %v1367, 1.0
    %v1442 = vadd.f32 %v1369, 1.0
    %v1443 = vadd.f32 %v1371, 1.0
    %v1444 = vadd.f32 %v1373, 1.0
    %v1445 = vadd.f32 %v1375, 1.0
    %v1446 = vadd.f32 %v1377, 1.0
    %v1447 = vadd.f32 %v1379, 1.0
    %v1448 = vadd.f32 %v1381, 1.0
    %v1449 = vadd.f32 %v1383, 1.0
    %v1450 = vadd.f32 %v1385, 1.0
    %v1451 = vadd.f32 %v1387, 1.0
    %v1452 = vrcp.pop %v1388
    %v1453 = vrcp.pop %v1389
    %v1454 = vrcp.pop %v1390
    %v1455 = vrcp.pop %v1391
    %v1456 = vrcp.pop %v1392
    %v1457 = vrcp.pop %v1393
    %v1458 = vrcp.pop %v1394
    %v1459 = vrcp.pop %v1395
    %v1460 = vrcp.pop %v1396
    %v1461 = vrcp.pop %v1397
    %v1462 = vrcp.pop %v1398
    %v1463 = vrcp.pop %v1399
    %v1464 = vrcp.pop %v1400
    %v1465 = vrcp.pop %v1401
    %v1466 = vrcp.pop %v1402
    %v1467 = vrcp.pop %v1403
    %v1468 = vrcp.pop %v1404
    %v1469 = vrcp.pop %v1405
    %v1470 = vrcp.pop %v1406
    %v1471 = vrcp.pop %v1407
    %v1472 = vrcp.pop %v1408
    %v1473 = vrcp.pop %v1409
    %v1474 = vrcp.pop %v1410
    %v1475 = vrcp.pop %v1411
    %v1476 = vrcp.pop %v1412
    %v1477 = vrcp.pop %v1413
    %v1478 = vrcp.pop %v1414
    %v1479 = vrcp.pop %v1415
    %v1480 = vrcp.pop %v1416
    %v1481 = vrcp.pop %v1417
    %v1482 = vrcp.pop %v1418
    %v1483 = vrcp.pop %v1419
    %v1484 = vrcp.pop %v1420
    %v1485 = vrcp.pop %v1421
    %v1486 = vrcp.pop %v1422
    %v1487 = vrcp.pop %v1423
    %v1488 = vrcp.pop %v1424
    %v1489 = vrcp.pop %v1425
    %v1490 = vrcp.pop %v1426
    %v1491 = vrcp.pop %v1427
    %v1492 = vrcp.pop %v1428
    %v1493 = vrcp.pop %v1429
    %v1494 = vrcp.pop %v1430
    %v1495 = vrcp.pop %v1431
    %v1496 = vrcp.pop %v1432
    %v1497 = vrcp.pop %v1433
    %v1498 = vrcp.pop %v1434
    %v1499 = vrcp.pop %v1435
    %v1500 = vrcp.pop %v1436
    %v1501 = vrcp.pop %v1437
    %v1502 = vrcp.pop %v1438
    %v1503 = vrcp.pop %v1439
    %v1504 = vrcp.pop %v1440
    %v1505 = vrcp.pop %v1441
    %v1506 = vrcp.pop %v1442
    %v1507 = vrcp.pop %v1443
    %v1508 = vrcp.pop %v1444
    %v1509 = vrcp.pop %v1445
    %v1510 = vrcp.pop %v1446
    %v1511 = vrcp.pop %v1447
    %v1512 = vrcp.pop %v1448
    %v1513 = vrcp.pop %v1449
    %v1514 = vrcp.pop %v1450
    %v1515 = vrcp.pop %v1451
    %v1516 = vmul.f32 %v1132, %v1452
    %v1517 = vmul.f32 %v1133, %v1453
    %v1518 = vmul.f32 %v1134, %v1454
    %v1519 = vmul.f32 %v1135, %v1455
    %v1520 = vmul.f32 %v1136, %v1456
    %v1521 = vmul.f32 %v1137, %v1457
    %v1522 = vmul.f32 %v1138, %v1458
    %v1523 = vmul.f32 %v1139, %v1459
    %v1524 = vmul.f32 %v1140, %v1460
    %v1525 = vmul.f32 %v1141, %v1461
    %v1526 = vmul.f32 %v1142, %v1462
    %v1527 = vmul.f32 %v1143, %v1463
    %v1528 = vmul.f32 %v1144, %v1464
    %v1529 = vmul.f32 %v1145, %v1465
    %v1530 = vmul.f32 %v1146, %v1466
    %v1531 = vmul.f32 %v1147, %v1467
    %v1532 = vmul.f32 %v1148, %v1468
    %v1533 = vmul.f32 %v1149, %v1469
    %v1534 = vmul.f32 %v1150, %v1470
    %v1535 = vmul.f32 %v1151, %v1471
    %v1536 = vmul.f32 %v1152, %v1472
    %v1537 = vmul.f32 %v1153, %v1473
    %v1538 = vmul.f32 %v1154, %v1474
    %v1539 = vmul.f32 %v1155, %v1475
    %v1540 = vmul.f32 %v1156, %v1476
    %v1541 = vmul.f32 %v1157, %v1477
    %v1542 = vmul.f32 %v1158, %v1478
    %v1543 = vmul.f32 %v1159, %v1479
    %v1544 = vmul.f32 %v1160, %v1480
    %v1545 = vmul.f32 %v1161, %v1481
    %v1546 = vmul.f32 %v1162, %v1482
    %v1547 = vmul.f32 %v1163, %v1483
    %v1548 = vmul.f32 %v1164, %v1484
    %v1549 = vmul.f32 %v1165, %v1485
    %v1550 = vmul.f32 %v1166, %v1486
    %v1551 = vmul.f32 %v1167, %v1487
    %v1552 = vmul.f32 %v1168, %v1488
    %v1553 = vmul.f32 %v1169, %v1489
    %v1554 = vmul.f32 %v1170, %v1490
    %v1555 = vmul.f32 %v1171, %v1491
    %v1556 = vmul.f32 %v1172, %v1492
    %v1557 = vmul.f32 %v1173, %v1493
    %v1558 = vmul.f32 %v1174, %v1494
    %v1559 = vmul.f32 %v1175, %v1495
    %v1560 = vmul.f32 %v1176, %v1496
    %v1561 = vmul.f32 %v1177, %v1497
    %v1562 = vmul.f32 %v1178, %v1498
    %v1563 = vmul.f32 %v1179, %v1499
    %v1564 = vmul.f32 %v1180, %v1500
    %v1565 = vmul.f32 %v1181, %v1501
    %v1566 = vmul.f32 %v1182, %v1502
    %v1567 = vmul.f32 %v1183, %v1503
    %v1568 = vmul.f32 %v1184, %v1504
    %v1569 = vmul.f32 %v1185, %v1505
    %v1570 = vmul.f32 %v1186, %v1506
    %v1571 = vmul.f32 %v1187, %v1507
    %v1572 = vmul.f32 %v1188, %v1508
    %v1573 = vmul.f32 %v1189, %v1509
    %v1574 = vmul.f32 %v1190, %v1510
    %v1575 = vmul.f32 %v1191, %v1511
    %v1576 = vmul.f32 %v1192, %v1512
    %v1577 = vmul.f32 %v1193, %v1513
    %v1578 = vmul.f32 %v1194, %v1514
    %v1579 = vmul.f32 %v1195, %v1515
    %1580 = vst.msk [vmem:[#allocation2] sm:$0xff] %vm102, 0.0
    %1581 = vst.msk [vmem:[#allocation2 + $0x8] sm:$0xff] %vm102, 0.0
    %vm1582 = vcmask 123904
    %1583 = vst.msk [vmem:[#allocation2 + $0x10] sm:$0x3] %vm1582, 0.0
    %1584 = vst.msk [vmem:[#allocation2 + $0x18] sm:$0xff] %vm102, 0.0
    %1585 = vst.msk [vmem:[#allocation2 + $0x20] sm:$0xff] %vm102, 0.0
    %1586 = vst.msk [vmem:[#allocation2 + $0x28] sm:$0x3] %vm1582, 0.0
    %1587 = vst.msk [vmem:[#allocation2 + $0x30] sm:$0xff] %vm102, 0.0
    %1588 = vst.msk [vmem:[#allocation2 + $0x38] sm:$0xff] %vm102, 0.0
    %1589 = vst.msk [vmem:[#allocation2 + $0x40] sm:$0x3] %vm1582, 0.0
    %1590 = vst.msk [vmem:[#allocation2 + $0x48] sm:$0xff] %vm102, 0.0
    %1591 = vst.msk [vmem:[#allocation2 + $0x50] sm:$0xff] %vm102, 0.0
    %1592 = vst.msk [vmem:[#allocation2 + $0x58] sm:$0x3] %vm1582, 0.0
    %1593 = vst.msk [vmem:[#allocation2 + $0x60] sm:$0xff] %vm102, 0.0
    %1594 = vst.msk [vmem:[#allocation2 + $0x68] sm:$0xff] %vm102, 0.0
    %1595 = vst.msk [vmem:[#allocation2 + $0x70] sm:$0x3] %vm1582, 0.0
    %1596 = vst.msk [vmem:[#allocation2 + $0x78] sm:$0xff] %vm102, 0.0
    %1597 = vst.msk [vmem:[#allocation2 + $0x80] sm:$0xff] %vm102, 0.0
    %1598 = vst.msk [vmem:[#allocation2 + $0x88] sm:$0x3] %vm1582, 0.0
    %1599 = vst.msk [vmem:[#allocation2 + $0x90] sm:$0xff] %vm102, 0.0
    %1600 = vst.msk [vmem:[#allocation2 + $0x98] sm:$0xff] %vm102, 0.0
    %1601 = vst.msk [vmem:[#allocation2 + $0xa0] sm:$0x3] %vm1582, 0.0
    %1602 = vst.msk [vmem:[#allocation2 + $0xa8] sm:$0xff] %vm102, 0.0
    %1603 = vst.msk [vmem:[#allocation2 + $0xb0] sm:$0xff] %vm102, 0.0
    %1604 = vst.msk [vmem:[#allocation2 + $0xb8] sm:$0x3] %vm1582, 0.0
    %1605 = vst.msk [vmem:[#allocation2 + $0xc0] sm:$0xff] %vm102, 0.0
    %1606 = vst.msk [vmem:[#allocation2 + $0xc8] sm:$0xff] %vm102, 0.0
    %1607 = vst.msk [vmem:[#allocation2 + $0xd0] sm:$0x3] %vm1582, 0.0
    %1608 = vst.msk [vmem:[#allocation2 + $0xd8] sm:$0xff] %vm102, 0.0
    %1609 = vst.msk [vmem:[#allocation2 + $0xe0] sm:$0xff] %vm102, 0.0
    %1610 = vst.msk [vmem:[#allocation2 + $0xe8] sm:$0x3] %vm1582, 0.0
    %1611 = vst.msk [vmem:[#allocation2 + $0xf0] sm:$0xff] %vm102, 0.0
    %1612 = vst.msk [vmem:[#allocation2 + $0xf8] sm:$0xff] %vm102, 0.0
    %1613 = vst.msk [vmem:[#allocation2 + $0x100] sm:$0x3] %vm1582, 0.0
    %1614 = vst.msk [vmem:[#allocation2 + $0x108] sm:$0xff] %vm102, 0.0
    %1615 = vst.msk [vmem:[#allocation2 + $0x110] sm:$0xff] %vm102, 0.0
    %1616 = vst.msk [vmem:[#allocation2 + $0x118] sm:$0x3] %vm1582, 0.0
    %1617 = vst.msk [vmem:[#allocation2 + $0x120] sm:$0xff] %vm102, 0.0
    %1618 = vst.msk [vmem:[#allocation2 + $0x128] sm:$0xff] %vm102, 0.0
    %1619 = vst.msk [vmem:[#allocation2 + $0x130] sm:$0x3] %vm1582, 0.0
    %1620 = vst.msk [vmem:[#allocation2 + $0x138] sm:$0xff] %vm102, 0.0
    %1621 = vst.msk [vmem:[#allocation2 + $0x140] sm:$0xff] %vm102, 0.0
    %1622 = vst.msk [vmem:[#allocation2 + $0x148] sm:$0x3] %vm1582, 0.0
    %1623 = vst.msk [vmem:[#allocation2 + $0x150] sm:$0xff] %vm102, 0.0
    %1624 = vst.msk [vmem:[#allocation2 + $0x158] sm:$0xff] %vm102, 0.0
    %1625 = vst.msk [vmem:[#allocation2 + $0x160] sm:$0x3] %vm1582, 0.0
    %1626 = vst.msk [vmem:[#allocation2 + $0x168] sm:$0xff] %vm102, 0.0
    %1627 = vst.msk [vmem:[#allocation2 + $0x170] sm:$0xff] %vm102, 0.0
    %1628 = vst.msk [vmem:[#allocation2 + $0x178] sm:$0x3] %vm1582, 0.0
    %1629 = vst.msk [vmem:[#allocation2 + $0x180] sm:$0xff] %vm102, 0.0
    %1630 = vst.msk [vmem:[#allocation2 + $0x188] sm:$0xff] %vm102, 0.0
    %1631 = vst.msk [vmem:[#allocation2 + $0x190] sm:$0x3] %vm1582, 0.0
    %1632 = vst.msk [vmem:[#allocation2 + $0x198] sm:$0xff] %vm102, 0.0
    %1633 = vst.msk [vmem:[#allocation2 + $0x1a0] sm:$0xff] %vm102, 0.0
    %1634 = vst.msk [vmem:[#allocation2 + $0x1a8] sm:$0x3] %vm1582, 0.0
    %1635 = vst.msk [vmem:[#allocation2 + $0x1b0] sm:$0xff] %vm102, 0.0
    %1636 = vst.msk [vmem:[#allocation2 + $0x1b8] sm:$0xff] %vm102, 0.0
    %1637 = vst.msk [vmem:[#allocation2 + $0x1c0] sm:$0x3] %vm1582, 0.0
    %1638 = vst.msk [vmem:[#allocation2 + $0x1c8] sm:$0xff] %vm102, 0.0
    %1639 = vst.msk [vmem:[#allocation2 + $0x1d0] sm:$0xff] %vm102, 0.0
    %1640 = vst.msk [vmem:[#allocation2 + $0x1d8] sm:$0x3] %vm1582, 0.0
    %1641 = vst.msk [vmem:[#allocation2 + $0x1e0] sm:$0xff] %vm102, 0.0
    %1642 = vst.msk [vmem:[#allocation2 + $0x1e8] sm:$0xff] %vm102, 0.0
    %1643 = vst.msk [vmem:[#allocation2 + $0x1f0] sm:$0x3] %vm1582, 0.0
    %1644 = vst.msk [vmem:[#allocation2 + $0x1f8] sm:$0xff] %vm102, 0.0
    %1645 = vst.msk [vmem:[#allocation2 + $0x200] sm:$0xff] %vm102, 0.0
    %1646 = vst.msk [vmem:[#allocation2 + $0x208] sm:$0x3] %vm1582, 0.0
    %1647 = vst.msk [vmem:[#allocation2 + $0x210] sm:$0xff] %vm102, 0.0
    %1648 = vst.msk [vmem:[#allocation2 + $0x218] sm:$0xff] %vm102, 0.0
    %1649 = vst.msk [vmem:[#allocation2 + $0x220] sm:$0x3] %vm1582, 0.0
    %1650 = vst.msk [vmem:[#allocation2 + $0x228] sm:$0xff] %vm102, 0.0
    %1651 = vst.msk [vmem:[#allocation2 + $0x230] sm:$0xff] %vm102, 0.0
    %1652 = vst.msk [vmem:[#allocation2 + $0x238] sm:$0x3] %vm1582, 0.0
    %1653 = vst.msk [vmem:[#allocation2 + $0x240] sm:$0xff] %vm102, 0.0
    %1654 = vst.msk [vmem:[#allocation2 + $0x248] sm:$0xff] %vm102, 0.0
    %1655 = vst.msk [vmem:[#allocation2 + $0x250] sm:$0x3] %vm1582, 0.0
    %1656 = vst.msk [vmem:[#allocation2 + $0x258] sm:$0xff] %vm102, 0.0
    %1657 = vst.msk [vmem:[#allocation2 + $0x260] sm:$0xff] %vm102, 0.0
    %1658 = vst.msk [vmem:[#allocation2 + $0x268] sm:$0x3] %vm1582, 0.0
    %1659 = vst.msk [vmem:[#allocation2 + $0x270] sm:$0xff] %vm102, 0.0
    %1660 = vst.msk [vmem:[#allocation2 + $0x278] sm:$0xff] %vm102, 0.0
    %1661 = vst.msk [vmem:[#allocation2 + $0x280] sm:$0x3] %vm1582, 0.0
    %1662 = vst.msk [vmem:[#allocation2 + $0x288] sm:$0xff] %vm102, 0.0
    %1663 = vst.msk [vmem:[#allocation2 + $0x290] sm:$0xff] %vm102, 0.0
    %1664 = vst.msk [vmem:[#allocation2 + $0x298] sm:$0x3] %vm1582, 0.0
    %1665 = vst.msk [vmem:[#allocation2 + $0x2a0] sm:$0xff] %vm102, 0.0
    %1666 = vst.msk [vmem:[#allocation2 + $0x2a8] sm:$0xff] %vm102, 0.0
    %1667 = vst.msk [vmem:[#allocation2 + $0x2b0] sm:$0x3] %vm1582, 0.0
    %1668 = vst.msk [vmem:[#allocation2 + $0x2b8] sm:$0xff] %vm102, 0.0
    %1669 = vst.msk [vmem:[#allocation2 + $0x2c0] sm:$0xff] %vm102, 0.0
    %1670 = vst.msk [vmem:[#allocation2 + $0x2c8] sm:$0x3] %vm1582, 0.0
    %1671 = vst.msk [vmem:[#allocation2 + $0x2d0] sm:$0xff] %vm102, 0.0
    %1672 = vst.msk [vmem:[#allocation2 + $0x2d8] sm:$0xff] %vm102, 0.0
    %1673 = vst.msk [vmem:[#allocation2 + $0x2e0] sm:$0x3] %vm1582, 0.0
    %1674 = vst.msk [vmem:[#allocation2 + $0x2e8] sm:$0xff] %vm102, 0.0
    %1675 = vst.msk [vmem:[#allocation2 + $0x2f0] sm:$0xff] %vm102, 0.0
    %1676 = vst.msk [vmem:[#allocation2 + $0x2f8] sm:$0x3] %vm1582, 0.0
    %1677 = vst.msk [vmem:[#allocation2 + $0x300] sm:$0xff] %vm102, 0.0
    %1678 = vst.msk [vmem:[#allocation2 + $0x308] sm:$0xff] %vm102, 0.0
    %1679 = vst.msk [vmem:[#allocation2 + $0x310] sm:$0x3] %vm1582, 0.0
    %1680 = vst.msk [vmem:[#allocation2 + $0x318] sm:$0xff] %vm102, 0.0
    %1681 = vst.msk [vmem:[#allocation2 + $0x320] sm:$0xff] %vm102, 0.0
    %1682 = vst.msk [vmem:[#allocation2 + $0x328] sm:$0x3] %vm1582, 0.0
    %1683 = vst.msk [vmem:[#allocation2 + $0x330] sm:$0xff] %vm102, 0.0
    %1684 = vst.msk [vmem:[#allocation2 + $0x338] sm:$0xff] %vm102, 0.0
    %1685 = vst.msk [vmem:[#allocation2 + $0x340] sm:$0x3] %vm1582, 0.0
    %1686 = vst.msk [vmem:[#allocation2 + $0x348] sm:$0xff] %vm102, 0.0
    %1687 = vst.msk [vmem:[#allocation2 + $0x350] sm:$0xff] %vm102, 0.0
    %1688 = vst.msk [vmem:[#allocation2 + $0x358] sm:$0x3] %vm1582, 0.0
    %s1689 = scalar_lea.vmem [#allocation2], 24
    %1690 = vst.msk [vmem:[%s1689 + $0x1] sm:$0xff] %vm102, %v1516
    %1691 = vst.msk [vmem:[%s1689 + $0x9] sm:$0xff] %vm102, %v1517
    %1692 = vst.msk [vmem:[%s1689 + $0x19] sm:$0xff] %vm102, %v1518
    %1693 = vst.msk [vmem:[%s1689 + $0x21] sm:$0xff] %vm102, %v1519
    %1694 = vst.msk [vmem:[%s1689 + $0x31] sm:$0xff] %vm102, %v1520
    %1695 = vst.msk [vmem:[%s1689 + $0x39] sm:$0xff] %vm102, %v1521
    %1696 = vst.msk [vmem:[%s1689 + $0x49] sm:$0xff] %vm102, %v1522
    %1697 = vst.msk [vmem:[%s1689 + $0x51] sm:$0xff] %vm102, %v1523
    %1698 = vst.msk [vmem:[%s1689 + $0x61] sm:$0xff] %vm102, %v1524
    %1699 = vst.msk [vmem:[%s1689 + $0x69] sm:$0xff] %vm102, %v1525
    %1700 = vst.msk [vmem:[%s1689 + $0x79] sm:$0xff] %vm102, %v1526
    %1701 = vst.msk [vmem:[%s1689 + $0x81] sm:$0xff] %vm102, %v1527
    %1702 = vst.msk [vmem:[%s1689 + $0x91] sm:$0xff] %vm102, %v1528
    %1703 = vst.msk [vmem:[%s1689 + $0x99] sm:$0xff] %vm102, %v1529
    %1704 = vst.msk [vmem:[%s1689 + $0xa9] sm:$0xff] %vm102, %v1530
    %1705 = vst.msk [vmem:[%s1689 + $0xb1] sm:$0xff] %vm102, %v1531
    %1706 = vst.msk [vmem:[%s1689 + $0xc1] sm:$0xff] %vm102, %v1532
    %1707 = vst.msk [vmem:[%s1689 + $0xc9] sm:$0xff] %vm102, %v1533
    %1708 = vst.msk [vmem:[%s1689 + $0xd9] sm:$0xff] %vm102, %v1534
    %1709 = vst.msk [vmem:[%s1689 + $0xe1] sm:$0xff] %vm102, %v1535
    %1710 = vst.msk [vmem:[%s1689 + $0xf1] sm:$0xff] %vm102, %v1536
    %1711 = vst.msk [vmem:[%s1689 + $0xf9] sm:$0xff] %vm102, %v1537
    %1712 = vst.msk [vmem:[%s1689 + $0x109] sm:$0xff] %vm102, %v1538
    %1713 = vst.msk [vmem:[%s1689 + $0x111] sm:$0xff] %vm102, %v1539
    %1714 = vst.msk [vmem:[%s1689 + $0x121] sm:$0xff] %vm102, %v1540
    %1715 = vst.msk [vmem:[%s1689 + $0x129] sm:$0xff] %vm102, %v1541
    %1716 = vst.msk [vmem:[%s1689 + $0x139] sm:$0xff] %vm102, %v1542
    %1717 = vst.msk [vmem:[%s1689 + $0x141] sm:$0xff] %vm102, %v1543
    %1718 = vst.msk [vmem:[%s1689 + $0x151] sm:$0xff] %vm102, %v1544
    %1719 = vst.msk [vmem:[%s1689 + $0x159] sm:$0xff] %vm102, %v1545
    %1720 = vst.msk [vmem:[%s1689 + $0x169] sm:$0xff] %vm102, %v1546
    %1721 = vst.msk [vmem:[%s1689 + $0x171] sm:$0xff] %vm102, %v1547
    %1722 = vst.msk [vmem:[%s1689 + $0x1b1] sm:$0xff] %vm102, %v1548
    %1723 = vst.msk [vmem:[%s1689 + $0x1b9] sm:$0xff] %vm102, %v1549
    %1724 = vst.msk [vmem:[%s1689 + $0x1c9] sm:$0xff] %vm102, %v1550
    %1725 = vst.msk [vmem:[%s1689 + $0x1d1] sm:$0xff] %vm102, %v1551
    %1726 = vst.msk [vmem:[%s1689 + $0x1e1] sm:$0xff] %vm102, %v1552
    %1727 = vst.msk [vmem:[%s1689 + $0x1e9] sm:$0xff] %vm102, %v1553
    %1728 = vst.msk [vmem:[%s1689 + $0x1f9] sm:$0xff] %vm102, %v1554
    %1729 = vst.msk [vmem:[%s1689 + $0x201] sm:$0xff] %vm102, %v1555
    %1730 = vst.msk [vmem:[%s1689 + $0x211] sm:$0xff] %vm102, %v1556
    %1731 = vst.msk [vmem:[%s1689 + $0x219] sm:$0xff] %vm102, %v1557
    %1732 = vst.msk [vmem:[%s1689 + $0x229] sm:$0xff] %vm102, %v1558
    %1733 = vst.msk [vmem:[%s1689 + $0x231] sm:$0xff] %vm102, %v1559
    %1734 = vst.msk [vmem:[%s1689 + $0x241] sm:$0xff] %vm102, %v1560
    %1735 = vst.msk [vmem:[%s1689 + $0x249] sm:$0xff] %vm102, %v1561
    %1736 = vst.msk [vmem:[%s1689 + $0x259] sm:$0xff] %vm102, %v1562
    %1737 = vst.msk [vmem:[%s1689 + $0x261] sm:$0xff] %vm102, %v1563
    %1738 = vst.msk [vmem:[%s1689 + $0x271] sm:$0xff] %vm102, %v1564
    %1739 = vst.msk [vmem:[%s1689 + $0x279] sm:$0xff] %vm102, %v1565
    %1740 = vst.msk [vmem:[%s1689 + $0x289] sm:$0xff] %vm102, %v1566
    %1741 = vst.msk [vmem:[%s1689 + $0x291] sm:$0xff] %vm102, %v1567
    %1742 = vst.msk [vmem:[%s1689 + $0x2a1] sm:$0xff] %vm102, %v1568
    %1743 = vst.msk [vmem:[%s1689 + $0x2a9] sm:$0xff] %vm102, %v1569
    %1744 = vst.msk [vmem:[%s1689 + $0x2b9] sm:$0xff] %vm102, %v1570
    %1745 = vst.msk [vmem:[%s1689 + $0x2c1] sm:$0xff] %vm102, %v1571
    %1746 = vst.msk [vmem:[%s1689 + $0x2d1] sm:$0xff] %vm102, %v1572
    %1747 = vst.msk [vmem:[%s1689 + $0x2d9] sm:$0xff] %vm102, %v1573
    %1748 = vst.msk [vmem:[%s1689 + $0x2e9] sm:$0xff] %vm102, %v1574
    %1749 = vst.msk [vmem:[%s1689 + $0x2f1] sm:$0xff] %vm102, %v1575
    %1750 = vst.msk [vmem:[%s1689 + $0x301] sm:$0xff] %vm102, %v1576
    %1751 = vst.msk [vmem:[%s1689 + $0x309] sm:$0xff] %vm102, %v1577
    %1752 = vst.msk [vmem:[%s1689 + $0x319] sm:$0xff] %vm102, %v1578
    %1753 = vst.msk [vmem:[%s1689 + $0x321] sm:$0xff] %vm102, %v1579
    %v1754 = vld [vmem:[#allocation2] sm:$0xff]
    %v1755 = vld [vmem:[#allocation2 + $0x8] sm:$0xff]
    %v1756 = vld [vmem:[#allocation2 + $0x18] sm:$0xff]
    %v1757 = vld [vmem:[#allocation2 + $0x20] sm:$0xff]
    %v1758 = vld [vmem:[#allocation2 + $0x30] sm:$0xff]
    %v1759 = vld [vmem:[#allocation2 + $0x38] sm:$0xff]
    %v1760 = vld [vmem:[#allocation2 + $0x48] sm:$0xff]
    %v1761 = vld [vmem:[#allocation2 + $0x50] sm:$0xff]
    %v1762 = vld [vmem:[#allocation2 + $0x60] sm:$0xff]
    %v1763 = vld [vmem:[#allocation2 + $0x68] sm:$0xff]
    %v1764 = vld [vmem:[#allocation2 + $0x78] sm:$0xff]
    %v1765 = vld [vmem:[#allocation2 + $0x80] sm:$0xff]
    %v1766 = vld [vmem:[#allocation2 + $0x90] sm:$0xff]
    %v1767 = vld [vmem:[#allocation2 + $0x98] sm:$0xff]
    %v1768 = vld [vmem:[#allocation2 + $0xa8] sm:$0xff]
    %v1769 = vld [vmem:[#allocation2 + $0xb0] sm:$0xff]
    %v1770 = vld [vmem:[#allocation2 + $0xc0] sm:$0xff]
    %v1771 = vld [vmem:[#allocation2 + $0xc8] sm:$0xff]
    %v1772 = vld [vmem:[#allocation2 + $0xd8] sm:$0xff]
    %v1773 = vld [vmem:[#allocation2 + $0xe0] sm:$0xff]
    %v1774 = vld [vmem:[#allocation2 + $0xf0] sm:$0xff]
    %v1775 = vld [vmem:[#allocation2 + $0xf8] sm:$0xff]
    %v1776 = vld [vmem:[#allocation2 + $0x108] sm:$0xff]
    %v1777 = vld [vmem:[#allocation2 + $0x110] sm:$0xff]
    %v1778 = vld [vmem:[#allocation2 + $0x120] sm:$0xff]
    %v1779 = vld [vmem:[#allocation2 + $0x128] sm:$0xff]
    %v1780 = vld [vmem:[#allocation2 + $0x138] sm:$0xff]
    %v1781 = vld [vmem:[#allocation2 + $0x140] sm:$0xff]
    %v1782 = vld [vmem:[#allocation2 + $0x150] sm:$0xff]
    %v1783 = vld [vmem:[#allocation2 + $0x158] sm:$0xff]
    %v1784 = vld [vmem:[#allocation2 + $0x168] sm:$0xff]
    %v1785 = vld [vmem:[#allocation2 + $0x170] sm:$0xff]
    %v1786 = vld [vmem:[#allocation2 + $0x1b0] sm:$0xff]
    %v1787 = vld [vmem:[#allocation2 + $0x1b8] sm:$0xff]
    %v1788 = vld [vmem:[#allocation2 + $0x1c8] sm:$0xff]
    %v1789 = vld [vmem:[#allocation2 + $0x1d0] sm:$0xff]
    %v1790 = vld [vmem:[#allocation2 + $0x1e0] sm:$0xff]
    %v1791 = vld [vmem:[#allocation2 + $0x1e8] sm:$0xff]
    %v1792 = vld [vmem:[#allocation2 + $0x1f8] sm:$0xff]
    %v1793 = vld [vmem:[#allocation2 + $0x200] sm:$0xff]
    %v1794 = vld [vmem:[#allocation2 + $0x210] sm:$0xff]
    %v1795 = vld [vmem:[#allocation2 + $0x218] sm:$0xff]
    %v1796 = vld [vmem:[#allocation2 + $0x228] sm:$0xff]
    %v1797 = vld [vmem:[#allocation2 + $0x230] sm:$0xff]
    %v1798 = vld [vmem:[#allocation2 + $0x240] sm:$0xff]
    %v1799 = vld [vmem:[#allocation2 + $0x248] sm:$0xff]
    %v1800 = vld [vmem:[#allocation2 + $0x258] sm:$0xff]
    %v1801 = vld [vmem:[#allocation2 + $0x260] sm:$0xff]
    %v1802 = vld [vmem:[#allocation2 + $0x270] sm:$0xff]
    %v1803 = vld [vmem:[#allocation2 + $0x278] sm:$0xff]
    %v1804 = vld [vmem:[#allocation2 + $0x288] sm:$0xff]
    %v1805 = vld [vmem:[#allocation2 + $0x290] sm:$0xff]
    %v1806 = vld [vmem:[#allocation2 + $0x2a0] sm:$0xff]
    %v1807 = vld [vmem:[#allocation2 + $0x2a8] sm:$0xff]
    %v1808 = vld [vmem:[#allocation2 + $0x2b8] sm:$0xff]
    %v1809 = vld [vmem:[#allocation2 + $0x2c0] sm:$0xff]
    %v1810 = vld [vmem:[#allocation2 + $0x2d0] sm:$0xff]
    %v1811 = vld [vmem:[#allocation2 + $0x2d8] sm:$0xff]
    %v1812 = vld [vmem:[#allocation2 + $0x2e8] sm:$0xff]
    %v1813 = vld [vmem:[#allocation2 + $0x2f0] sm:$0xff]
    %v1814 = vld [vmem:[#allocation2 + $0x300] sm:$0xff]
    %v1815 = vld [vmem:[#allocation2 + $0x308] sm:$0xff]
    %v1816 = vld [vmem:[#allocation2 + $0x318] sm:$0xff]
    %v1817 = vld [vmem:[#allocation2 + $0x320] sm:$0xff]
    %v1818 = vld [vmem:[#allocation2 + $0x1] sm:$0xff]
    %v1819 = vld [vmem:[#allocation2 + $0x9] sm:$0xff]
    %v1820 = vld [vmem:[#allocation2 + $0x19] sm:$0xff]
    %v1821 = vld [vmem:[#allocation2 + $0x21] sm:$0xff]
    %v1822 = vld [vmem:[#allocation2 + $0x31] sm:$0xff]
    %v1823 = vld [vmem:[#allocation2 + $0x39] sm:$0xff]
    %v1824 = vld [vmem:[#allocation2 + $0x49] sm:$0xff]
    %v1825 = vld [vmem:[#allocation2 + $0x51] sm:$0xff]
    %v1826 = vld [vmem:[#allocation2 + $0x61] sm:$0xff]
    %v1827 = vld [vmem:[#allocation2 + $0x69] sm:$0xff]
    %v1828 = vld [vmem:[#allocation2 + $0x79] sm:$0xff]
    %v1829 = vld [vmem:[#allocation2 + $0x81] sm:$0xff]
    %v1830 = vld [vmem:[#allocation2 + $0x91] sm:$0xff]
    %v1831 = vld [vmem:[#allocation2 + $0x99] sm:$0xff]
    %v1832 = vld [vmem:[#allocation2 + $0xa9] sm:$0xff]
    %v1833 = vld [vmem:[#allocation2 + $0xb1] sm:$0xff]
    %v1834 = vld [vmem:[#allocation2 + $0xc1] sm:$0xff]
    %v1835 = vld [vmem:[#allocation2 + $0xc9] sm:$0xff]
    %v1836 = vld [vmem:[#allocation2 + $0xd9] sm:$0xff]
    %v1837 = vld [vmem:[#allocation2 + $0xe1] sm:$0xff]
    %v1838 = vld [vmem:[#allocation2 + $0xf1] sm:$0xff]
    %v1839 = vld [vmem:[#allocation2 + $0xf9] sm:$0xff]
    %v1840 = vld [vmem:[#allocation2 + $0x109] sm:$0xff]
    %v1841 = vld [vmem:[#allocation2 + $0x111] sm:$0xff]
    %v1842 = vld [vmem:[#allocation2 + $0x121] sm:$0xff]
    %v1843 = vld [vmem:[#allocation2 + $0x129] sm:$0xff]
    %v1844 = vld [vmem:[#allocation2 + $0x139] sm:$0xff]
    %v1845 = vld [vmem:[#allocation2 + $0x141] sm:$0xff]
    %v1846 = vld [vmem:[#allocation2 + $0x151] sm:$0xff]
    %v1847 = vld [vmem:[#allocation2 + $0x159] sm:$0xff]
    %v1848 = vld [vmem:[#allocation2 + $0x169] sm:$0xff]
    %v1849 = vld [vmem:[#allocation2 + $0x171] sm:$0xff]
    %v1850 = vld [vmem:[#allocation2 + $0x1b1] sm:$0xff]
    %v1851 = vld [vmem:[#allocation2 + $0x1b9] sm:$0xff]
    %v1852 = vld [vmem:[#allocation2 + $0x1c9] sm:$0xff]
    %v1853 = vld [vmem:[#allocation2 + $0x1d1] sm:$0xff]
    %v1854 = vld [vmem:[#allocation2 + $0x1e1] sm:$0xff]
    %v1855 = vld [vmem:[#allocation2 + $0x1e9] sm:$0xff]
    %v1856 = vld [vmem:[#allocation2 + $0x1f9] sm:$0xff]
    %v1857 = vld [vmem:[#allocation2 + $0x201] sm:$0xff]
    %v1858 = vld [vmem:[#allocation2 + $0x211] sm:$0xff]
    %v1859 = vld [vmem:[#allocation2 + $0x219] sm:$0xff]
    %v1860 = vld [vmem:[#allocation2 + $0x229] sm:$0xff]
    %v1861 = vld [vmem:[#allocation2 + $0x231] sm:$0xff]
    %v1862 = vld [vmem:[#allocation2 + $0x241] sm:$0xff]
    %v1863 = vld [vmem:[#allocation2 + $0x249] sm:$0xff]
    %v1864 = vld [vmem:[#allocation2 + $0x259] sm:$0xff]
    %v1865 = vld [vmem:[#allocation2 + $0x261] sm:$0xff]
    %v1866 = vld [vmem:[#allocation2 + $0x271] sm:$0xff]
    %v1867 = vld [vmem:[#allocation2 + $0x279] sm:$0xff]
    %v1868 = vld [vmem:[#allocation2 + $0x289] sm:$0xff]
    %v1869 = vld [vmem:[#allocation2 + $0x291] sm:$0xff]
    %v1870 = vld [vmem:[#allocation2 + $0x2a1] sm:$0xff]
    %v1871 = vld [vmem:[#allocation2 + $0x2a9] sm:$0xff]
    %v1872 = vld [vmem:[#allocation2 + $0x2b9] sm:$0xff]
    %v1873 = vld [vmem:[#allocation2 + $0x2c1] sm:$0xff]
    %v1874 = vld [vmem:[#allocation2 + $0x2d1] sm:$0xff]
    %v1875 = vld [vmem:[#allocation2 + $0x2d9] sm:$0xff]
    %v1876 = vld [vmem:[#allocation2 + $0x2e9] sm:$0xff]
    %v1877 = vld [vmem:[#allocation2 + $0x2f1] sm:$0xff]
    %v1878 = vld [vmem:[#allocation2 + $0x301] sm:$0xff]
    %v1879 = vld [vmem:[#allocation2 + $0x309] sm:$0xff]
    %v1880 = vld [vmem:[#allocation2 + $0x319] sm:$0xff]
    %v1881 = vld [vmem:[#allocation2 + $0x321] sm:$0xff]
    %v1882 = vld [vmem:[#allocation2 + $0x2] sm:$0xff]
    %v1883 = vld [vmem:[#allocation2 + $0xa] sm:$0xff]
    %v1884 = vld [vmem:[#allocation2 + $0x1a] sm:$0xff]
    %v1885 = vld [vmem:[#allocation2 + $0x22] sm:$0xff]
    %v1886 = vld [vmem:[#allocation2 + $0x32] sm:$0xff]
    %v1887 = vld [vmem:[#allocation2 + $0x3a] sm:$0xff]
    %v1888 = vld [vmem:[#allocation2 + $0x4a] sm:$0xff]
    %v1889 = vld [vmem:[#allocation2 + $0x52] sm:$0xff]
    %v1890 = vld [vmem:[#allocation2 + $0x62] sm:$0xff]
    %v1891 = vld [vmem:[#allocation2 + $0x6a] sm:$0xff]
    %v1892 = vld [vmem:[#allocation2 + $0x7a] sm:$0xff]
    %v1893 = vld [vmem:[#allocation2 + $0x82] sm:$0xff]
    %v1894 = vld [vmem:[#allocation2 + $0x92] sm:$0xff]
    %v1895 = vld [vmem:[#allocation2 + $0x9a] sm:$0xff]
    %v1896 = vld [vmem:[#allocation2 + $0xaa] sm:$0xff]
    %v1897 = vld [vmem:[#allocation2 + $0xb2] sm:$0xff]
    %v1898 = vld [vmem:[#allocation2 + $0xc2] sm:$0xff]
    %v1899 = vld [vmem:[#allocation2 + $0xca] sm:$0xff]
    %v1900 = vld [vmem:[#allocation2 + $0xda] sm:$0xff]
    %v1901 = vld [vmem:[#allocation2 + $0xe2] sm:$0xff]
    %v1902 = vld [vmem:[#allocation2 + $0xf2] sm:$0xff]
    %v1903 = vld [vmem:[#allocation2 + $0xfa] sm:$0xff]
    %v1904 = vld [vmem:[#allocation2 + $0x10a] sm:$0xff]
    %v1905 = vld [vmem:[#allocation2 + $0x112] sm:$0xff]
    %v1906 = vld [vmem:[#allocation2 + $0x122] sm:$0xff]
    %v1907 = vld [vmem:[#allocation2 + $0x12a] sm:$0xff]
    %v1908 = vld [vmem:[#allocation2 + $0x13a] sm:$0xff]
    %v1909 = vld [vmem:[#allocation2 + $0x142] sm:$0xff]
    %v1910 = vld [vmem:[#allocation2 + $0x152] sm:$0xff]
    %v1911 = vld [vmem:[#allocation2 + $0x15a] sm:$0xff]
    %v1912 = vld [vmem:[#allocation2 + $0x16a] sm:$0xff]
    %v1913 = vld [vmem:[#allocation2 + $0x172] sm:$0xff]
    %v1914 = vld [vmem:[#allocation2 + $0x1b2] sm:$0xff]
    %v1915 = vld [vmem:[#allocation2 + $0x1ba] sm:$0xff]
    %v1916 = vld [vmem:[#allocation2 + $0x1ca] sm:$0xff]
    %v1917 = vld [vmem:[#allocation2 + $0x1d2] sm:$0xff]
    %v1918 = vld [vmem:[#allocation2 + $0x1e2] sm:$0xff]
    %v1919 = vld [vmem:[#allocation2 + $0x1ea] sm:$0xff]
    %v1920 = vld [vmem:[#allocation2 + $0x1fa] sm:$0xff]
    %v1921 = vld [vmem:[#allocation2 + $0x202] sm:$0xff]
    %v1922 = vld [vmem:[#allocation2 + $0x212] sm:$0xff]
    %v1923 = vld [vmem:[#allocation2 + $0x21a] sm:$0xff]
    %v1924 = vld [vmem:[#allocation2 + $0x22a] sm:$0xff]
    %v1925 = vld [vmem:[#allocation2 + $0x232] sm:$0xff]
    %v1926 = vld [vmem:[#allocation2 + $0x242] sm:$0xff]
    %v1927 = vld [vmem:[#allocation2 + $0x24a] sm:$0xff]
    %v1928 = vld [vmem:[#allocation2 + $0x25a] sm:$0xff]
    %v1929 = vld [vmem:[#allocation2 + $0x262] sm:$0xff]
    %v1930 = vld [vmem:[#allocation2 + $0x272] sm:$0xff]
    %v1931 = vld [vmem:[#allocation2 + $0x27a] sm:$0xff]
    %v1932 = vld [vmem:[#allocation2 + $0x28a] sm:$0xff]
    %v1933 = vld [vmem:[#allocation2 + $0x292] sm:$0xff]
    %v1934 = vld [vmem:[#allocation2 + $0x2a2] sm:$0xff]
    %v1935 = vld [vmem:[#allocation2 + $0x2aa] sm:$0xff]
    %v1936 = vld [vmem:[#allocation2 + $0x2ba] sm:$0xff]
    %v1937 = vld [vmem:[#allocation2 + $0x2c2] sm:$0xff]
    %v1938 = vld [vmem:[#allocation2 + $0x2d2] sm:$0xff]
    %v1939 = vld [vmem:[#allocation2 + $0x2da] sm:$0xff]
    %v1940 = vld [vmem:[#allocation2 + $0x2ea] sm:$0xff]
    %v1941 = vld [vmem:[#allocation2 + $0x2f2] sm:$0xff]
    %v1942 = vld [vmem:[#allocation2 + $0x302] sm:$0xff]
    %v1943 = vld [vmem:[#allocation2 + $0x30a] sm:$0xff]
    %v1944 = vld [vmem:[#allocation2 + $0x31a] sm:$0xff]
    %v1945 = vld [vmem:[#allocation2 + $0x322] sm:$0xff]
    %v1946 = vld [vmem:[%s1689] sm:$0xff]
    %v1947 = vld [vmem:[%s1689 + $0x8] sm:$0xff]
    %v1948 = vld [vmem:[%s1689 + $0x18] sm:$0xff]
    %v1949 = vld [vmem:[%s1689 + $0x20] sm:$0xff]
    %v1950 = vld [vmem:[%s1689 + $0x30] sm:$0xff]
    %v1951 = vld [vmem:[%s1689 + $0x38] sm:$0xff]
    %v1952 = vld [vmem:[%s1689 + $0x48] sm:$0xff]
    %v1953 = vld [vmem:[%s1689 + $0x50] sm:$0xff]
    %v1954 = vld [vmem:[%s1689 + $0x60] sm:$0xff]
    %v1955 = vld [vmem:[%s1689 + $0x68] sm:$0xff]
    %v1956 = vld [vmem:[%s1689 + $0x78] sm:$0xff]
    %v1957 = vld [vmem:[%s1689 + $0x80] sm:$0xff]
    %v1958 = vld [vmem:[%s1689 + $0x90] sm:$0xff]
    %v1959 = vld [vmem:[%s1689 + $0x98] sm:$0xff]
    %v1960 = vld [vmem:[%s1689 + $0xa8] sm:$0xff]
    %v1961 = vld [vmem:[%s1689 + $0xb0] sm:$0xff]
    %v1962 = vld [vmem:[%s1689 + $0xc0] sm:$0xff]
    %v1963 = vld [vmem:[%s1689 + $0xc8] sm:$0xff]
    %v1964 = vld [vmem:[%s1689 + $0xd8] sm:$0xff]
    %v1965 = vld [vmem:[%s1689 + $0xe0] sm:$0xff]
    %v1966 = vld [vmem:[%s1689 + $0xf0] sm:$0xff]
    %v1967 = vld [vmem:[%s1689 + $0xf8] sm:$0xff]
    %v1968 = vld [vmem:[%s1689 + $0x108] sm:$0xff]
    %v1969 = vld [vmem:[%s1689 + $0x110] sm:$0xff]
    %v1970 = vld [vmem:[%s1689 + $0x120] sm:$0xff]
    %v1971 = vld [vmem:[%s1689 + $0x128] sm:$0xff]
    %v1972 = vld [vmem:[%s1689 + $0x138] sm:$0xff]
    %v1973 = vld [vmem:[%s1689 + $0x140] sm:$0xff]
    %v1974 = vld [vmem:[%s1689 + $0x150] sm:$0xff]
    %v1975 = vld [vmem:[%s1689 + $0x158] sm:$0xff]
    %v1976 = vld [vmem:[%s1689 + $0x168] sm:$0xff]
    %v1977 = vld [vmem:[%s1689 + $0x170] sm:$0xff]
    %v1978 = vld [vmem:[%s1689 + $0x1b0] sm:$0xff]
    %v1979 = vld [vmem:[%s1689 + $0x1b8] sm:$0xff]
    %v1980 = vld [vmem:[%s1689 + $0x1c8] sm:$0xff]
    %v1981 = vld [vmem:[%s1689 + $0x1d0] sm:$0xff]
    %v1982 = vld [vmem:[%s1689 + $0x1e0] sm:$0xff]
    %v1983 = vld [vmem:[%s1689 + $0x1e8] sm:$0xff]
    %v1984 = vld [vmem:[%s1689 + $0x1f8] sm:$0xff]
    %v1985 = vld [vmem:[%s1689 + $0x200] sm:$0xff]
    %v1986 = vld [vmem:[%s1689 + $0x210] sm:$0xff]
    %v1987 = vld [vmem:[%s1689 + $0x218] sm:$0xff]
    %v1988 = vld [vmem:[%s1689 + $0x228] sm:$0xff]
    %v1989 = vld [vmem:[%s1689 + $0x230] sm:$0xff]
    %v1990 = vld [vmem:[%s1689 + $0x240] sm:$0xff]
    %v1991 = vld [vmem:[%s1689 + $0x248] sm:$0xff]
    %v1992 = vld [vmem:[%s1689 + $0x258] sm:$0xff]
    %v1993 = vld [vmem:[%s1689 + $0x260] sm:$0xff]
    %v1994 = vld [vmem:[%s1689 + $0x270] sm:$0xff]
    %v1995 = vld [vmem:[%s1689 + $0x278] sm:$0xff]
    %v1996 = vld [vmem:[%s1689 + $0x288] sm:$0xff]
    %v1997 = vld [vmem:[%s1689 + $0x290] sm:$0xff]
    %v1998 = vld [vmem:[%s1689 + $0x2a0] sm:$0xff]
    %v1999 = vld [vmem:[%s1689 + $0x2a8] sm:$0xff]
    %v2000 = vld [vmem:[%s1689 + $0x2b8] sm:$0xff]
    %v2001 = vld [vmem:[%s1689 + $0x2c0] sm:$0xff]
    %v2002 = vld [vmem:[%s1689 + $0x2d0] sm:$0xff]
    %v2003 = vld [vmem:[%s1689 + $0x2d8] sm:$0xff]
    %v2004 = vld [vmem:[%s1689 + $0x2e8] sm:$0xff]
    %v2005 = vld [vmem:[%s1689 + $0x2f0] sm:$0xff]
    %v2006 = vld [vmem:[%s1689 + $0x300] sm:$0xff]
    %v2007 = vld [vmem:[%s1689 + $0x308] sm:$0xff]
    %v2008 = vld [vmem:[%s1689 + $0x318] sm:$0xff]
    %v2009 = vld [vmem:[%s1689 + $0x320] sm:$0xff]
    %v2010 = vld [vmem:[%s1689 + $0x1] sm:$0xff]
    %v2011 = vld [vmem:[%s1689 + $0x9] sm:$0xff]
    %v2012 = vld [vmem:[%s1689 + $0x19] sm:$0xff]
    %v2013 = vld [vmem:[%s1689 + $0x21] sm:$0xff]
    %v2014 = vld [vmem:[%s1689 + $0x31] sm:$0xff]
    %v2015 = vld [vmem:[%s1689 + $0x39] sm:$0xff]
    %v2016 = vld [vmem:[%s1689 + $0x49] sm:$0xff]
    %v2017 = vld [vmem:[%s1689 + $0x51] sm:$0xff]
    %v2018 = vld [vmem:[%s1689 + $0x61] sm:$0xff]
    %v2019 = vld [vmem:[%s1689 + $0x69] sm:$0xff]
    %v2020 = vld [vmem:[%s1689 + $0x79] sm:$0xff]
    %v2021 = vld [vmem:[%s1689 + $0x81] sm:$0xff]
    %v2022 = vld [vmem:[%s1689 + $0x91] sm:$0xff]
    %v2023 = vld [vmem:[%s1689 + $0x99] sm:$0xff]
    %v2024 = vld [vmem:[%s1689 + $0xa9] sm:$0xff]
    %v2025 = vld [vmem:[%s1689 + $0xb1] sm:$0xff]
    %v2026 = vld [vmem:[%s1689 + $0xc1] sm:$0xff]
    %v2027 = vld [vmem:[%s1689 + $0xc9] sm:$0xff]
    %v2028 = vld [vmem:[%s1689 + $0xd9] sm:$0xff]
    %v2029 = vld [vmem:[%s1689 + $0xe1] sm:$0xff]
    %v2030 = vld [vmem:[%s1689 + $0xf1] sm:$0xff]
    %v2031 = vld [vmem:[%s1689 + $0xf9] sm:$0xff]
    %v2032 = vld [vmem:[%s1689 + $0x109] sm:$0xff]
    %v2033 = vld [vmem:[%s1689 + $0x111] sm:$0xff]
    %v2034 = vld [vmem:[%s1689 + $0x121] sm:$0xff]
    %v2035 = vld [vmem:[%s1689 + $0x129] sm:$0xff]
    %v2036 = vld [vmem:[%s1689 + $0x139] sm:$0xff]
    %v2037 = vld [vmem:[%s1689 + $0x141] sm:$0xff]
    %v2038 = vld [vmem:[%s1689 + $0x151] sm:$0xff]
    %v2039 = vld [vmem:[%s1689 + $0x159] sm:$0xff]
    %v2040 = vld [vmem:[%s1689 + $0x169] sm:$0xff]
    %v2041 = vld [vmem:[%s1689 + $0x171] sm:$0xff]
    %v2042 = vld [vmem:[%s1689 + $0x1b1] sm:$0xff]
    %v2043 = vld [vmem:[%s1689 + $0x1b9] sm:$0xff]
    %v2044 = vld [vmem:[%s1689 + $0x1c9] sm:$0xff]
    %v2045 = vld [vmem:[%s1689 + $0x1d1] sm:$0xff]
    %v2046 = vld [vmem:[%s1689 + $0x1e1] sm:$0xff]
    %v2047 = vld [vmem:[%s1689 + $0x1e9] sm:$0xff]
    %v2048 = vld [vmem:[%s1689 + $0x1f9] sm:$0xff]
    %v2049 = vld [vmem:[%s1689 + $0x201] sm:$0xff]
    %v2050 = vld [vmem:[%s1689 + $0x211] sm:$0xff]
    %v2051 = vld [vmem:[%s1689 + $0x219] sm:$0xff]
    %v2052 = vld [vmem:[%s1689 + $0x229] sm:$0xff]
    %v2053 = vld [vmem:[%s1689 + $0x231] sm:$0xff]
    %v2054 = vld [vmem:[%s1689 + $0x241] sm:$0xff]
    %v2055 = vld [vmem:[%s1689 + $0x249] sm:$0xff]
    %v2056 = vld [vmem:[%s1689 + $0x259] sm:$0xff]
    %v2057 = vld [vmem:[%s1689 + $0x261] sm:$0xff]
    %v2058 = vld [vmem:[%s1689 + $0x271] sm:$0xff]
    %v2059 = vld [vmem:[%s1689 + $0x279] sm:$0xff]
    %v2060 = vld [vmem:[%s1689 + $0x289] sm:$0xff]
    %v2061 = vld [vmem:[%s1689 + $0x291] sm:$0xff]
    %v2062 = vld [vmem:[%s1689 + $0x2a1] sm:$0xff]
    %v2063 = vld [vmem:[%s1689 + $0x2a9] sm:$0xff]
    %v2064 = vld [vmem:[%s1689 + $0x2b9] sm:$0xff]
    %v2065 = vld [vmem:[%s1689 + $0x2c1] sm:$0xff]
    %v2066 = vld [vmem:[%s1689 + $0x2d1] sm:$0xff]
    %v2067 = vld [vmem:[%s1689 + $0x2d9] sm:$0xff]
    %v2068 = vld [vmem:[%s1689 + $0x2e9] sm:$0xff]
    %v2069 = vld [vmem:[%s1689 + $0x2f1] sm:$0xff]
    %v2070 = vld [vmem:[%s1689 + $0x301] sm:$0xff]
    %v2071 = vld [vmem:[%s1689 + $0x309] sm:$0xff]
    %v2072 = vld [vmem:[%s1689 + $0x319] sm:$0xff]
    %v2073 = vld [vmem:[%s1689 + $0x321] sm:$0xff]
    %v2074 = vld [vmem:[%s1689 + $0x2] sm:$0xff]
    %v2075 = vld [vmem:[%s1689 + $0xa] sm:$0xff]
    %v2076 = vld [vmem:[%s1689 + $0x1a] sm:$0xff]
    %v2077 = vld [vmem:[%s1689 + $0x22] sm:$0xff]
    %v2078 = vld [vmem:[%s1689 + $0x32] sm:$0xff]
    %v2079 = vld [vmem:[%s1689 + $0x3a] sm:$0xff]
    %v2080 = vld [vmem:[%s1689 + $0x4a] sm:$0xff]
    %v2081 = vld [vmem:[%s1689 + $0x52] sm:$0xff]
    %v2082 = vld [vmem:[%s1689 + $0x62] sm:$0xff]
    %v2083 = vld [vmem:[%s1689 + $0x6a] sm:$0xff]
    %v2084 = vld [vmem:[%s1689 + $0x7a] sm:$0xff]
    %v2085 = vld [vmem:[%s1689 + $0x82] sm:$0xff]
    %v2086 = vld [vmem:[%s1689 + $0x92] sm:$0xff]
    %v2087 = vld [vmem:[%s1689 + $0x9a] sm:$0xff]
    %v2088 = vld [vmem:[%s1689 + $0xaa] sm:$0xff]
    %v2089 = vld [vmem:[%s1689 + $0xb2] sm:$0xff]
    %v2090 = vld [vmem:[%s1689 + $0xc2] sm:$0xff]
    %v2091 = vld [vmem:[%s1689 + $0xca] sm:$0xff]
    %v2092 = vld [vmem:[%s1689 + $0xda] sm:$0xff]
    %v2093 = vld [vmem:[%s1689 + $0xe2] sm:$0xff]
    %v2094 = vld [vmem:[%s1689 + $0xf2] sm:$0xff]
    %v2095 = vld [vmem:[%s1689 + $0xfa] sm:$0xff]
    %v2096 = vld [vmem:[%s1689 + $0x10a] sm:$0xff]
    %v2097 = vld [vmem:[%s1689 + $0x112] sm:$0xff]
    %v2098 = vld [vmem:[%s1689 + $0x122] sm:$0xff]
    %v2099 = vld [vmem:[%s1689 + $0x12a] sm:$0xff]
    %v2100 = vld [vmem:[%s1689 + $0x13a] sm:$0xff]
    %v2101 = vld [vmem:[%s1689 + $0x142] sm:$0xff]
    %v2102 = vld [vmem:[%s1689 + $0x152] sm:$0xff]
    %v2103 = vld [vmem:[%s1689 + $0x15a] sm:$0xff]
    %v2104 = vld [vmem:[%s1689 + $0x16a] sm:$0xff]
    %v2105 = vld [vmem:[%s1689 + $0x172] sm:$0xff]
    %v2106 = vld [vmem:[%s1689 + $0x1b2] sm:$0xff]
    %v2107 = vld [vmem:[%s1689 + $0x1ba] sm:$0xff]
    %v2108 = vld [vmem:[%s1689 + $0x1ca] sm:$0xff]
    %v2109 = vld [vmem:[%s1689 + $0x1d2] sm:$0xff]
    %v2110 = vld [vmem:[%s1689 + $0x1e2] sm:$0xff]
    %v2111 = vld [vmem:[%s1689 + $0x1ea] sm:$0xff]
    %v2112 = vld [vmem:[%s1689 + $0x1fa] sm:$0xff]
    %v2113 = vld [vmem:[%s1689 + $0x202] sm:$0xff]
    %v2114 = vld [vmem:[%s1689 + $0x212] sm:$0xff]
    %v2115 = vld [vmem:[%s1689 + $0x21a] sm:$0xff]
    %v2116 = vld [vmem:[%s1689 + $0x22a] sm:$0xff]
    %v2117 = vld [vmem:[%s1689 + $0x232] sm:$0xff]
    %v2118 = vld [vmem:[%s1689 + $0x242] sm:$0xff]
    %v2119 = vld [vmem:[%s1689 + $0x24a] sm:$0xff]
    %v2120 = vld [vmem:[%s1689 + $0x25a] sm:$0xff]
    %v2121 = vld [vmem:[%s1689 + $0x262] sm:$0xff]
    %v2122 = vld [vmem:[%s1689 + $0x272] sm:$0xff]
    %v2123 = vld [vmem:[%s1689 + $0x27a] sm:$0xff]
    %v2124 = vld [vmem:[%s1689 + $0x28a] sm:$0xff]
    %v2125 = vld [vmem:[%s1689 + $0x292] sm:$0xff]
    %v2126 = vld [vmem:[%s1689 + $0x2a2] sm:$0xff]
    %v2127 = vld [vmem:[%s1689 + $0x2aa] sm:$0xff]
    %v2128 = vld [vmem:[%s1689 + $0x2ba] sm:$0xff]
    %v2129 = vld [vmem:[%s1689 + $0x2c2] sm:$0xff]
    %v2130 = vld [vmem:[%s1689 + $0x2d2] sm:$0xff]
    %v2131 = vld [vmem:[%s1689 + $0x2da] sm:$0xff]
    %v2132 = vld [vmem:[%s1689 + $0x2ea] sm:$0xff]
    %v2133 = vld [vmem:[%s1689 + $0x2f2] sm:$0xff]
    %v2134 = vld [vmem:[%s1689 + $0x302] sm:$0xff]
    %v2135 = vld [vmem:[%s1689 + $0x30a] sm:$0xff]
    %v2136 = vld [vmem:[%s1689 + $0x31a] sm:$0xff]
    %v2137 = vld [vmem:[%s1689 + $0x322] sm:$0xff]
    %s2138 = scalar_lea.vmem [#allocation2], 48
    %v2139 = vld [vmem:[%s2138] sm:$0xff]
    %v2140 = vld [vmem:[%s2138 + $0x8] sm:$0xff]
    %v2141 = vld [vmem:[%s2138 + $0x18] sm:$0xff]
    %v2142 = vld [vmem:[%s2138 + $0x20] sm:$0xff]
    %v2143 = vld [vmem:[%s2138 + $0x30] sm:$0xff]
    %v2144 = vld [vmem:[%s2138 + $0x38] sm:$0xff]
    %v2145 = vld [vmem:[%s2138 + $0x48] sm:$0xff]
    %v2146 = vld [vmem:[%s2138 + $0x50] sm:$0xff]
    %v2147 = vld [vmem:[%s2138 + $0x60] sm:$0xff]
    %v2148 = vld [vmem:[%s2138 + $0x68] sm:$0xff]
    %v2149 = vld [vmem:[%s2138 + $0x78] sm:$0xff]
    %v2150 = vld [vmem:[%s2138 + $0x80] sm:$0xff]
    %v2151 = vld [vmem:[%s2138 + $0x90] sm:$0xff]
    %v2152 = vld [vmem:[%s2138 + $0x98] sm:$0xff]
    %v2153 = vld [vmem:[%s2138 + $0xa8] sm:$0xff]
    %v2154 = vld [vmem:[%s2138 + $0xb0] sm:$0xff]
    %v2155 = vld [vmem:[%s2138 + $0xc0] sm:$0xff]
    %v2156 = vld [vmem:[%s2138 + $0xc8] sm:$0xff]
    %v2157 = vld [vmem:[%s2138 + $0xd8] sm:$0xff]
    %v2158 = vld [vmem:[%s2138 + $0xe0] sm:$0xff]
    %v2159 = vld [vmem:[%s2138 + $0xf0] sm:$0xff]
    %v2160 = vld [vmem:[%s2138 + $0xf8] sm:$0xff]
    %v2161 = vld [vmem:[%s2138 + $0x108] sm:$0xff]
    %v2162 = vld [vmem:[%s2138 + $0x110] sm:$0xff]
    %v2163 = vld [vmem:[%s2138 + $0x120] sm:$0xff]
    %v2164 = vld [vmem:[%s2138 + $0x128] sm:$0xff]
    %v2165 = vld [vmem:[%s2138 + $0x138] sm:$0xff]
    %v2166 = vld [vmem:[%s2138 + $0x140] sm:$0xff]
    %v2167 = vld [vmem:[%s2138 + $0x150] sm:$0xff]
    %v2168 = vld [vmem:[%s2138 + $0x158] sm:$0xff]
    %v2169 = vld [vmem:[%s2138 + $0x168] sm:$0xff]
    %v2170 = vld [vmem:[%s2138 + $0x170] sm:$0xff]
    %v2171 = vld [vmem:[%s2138 + $0x1b0] sm:$0xff]
    %v2172 = vld [vmem:[%s2138 + $0x1b8] sm:$0xff]
    %v2173 = vld [vmem:[%s2138 + $0x1c8] sm:$0xff]
    %v2174 = vld [vmem:[%s2138 + $0x1d0] sm:$0xff]
    %v2175 = vld [vmem:[%s2138 + $0x1e0] sm:$0xff]
    %v2176 = vld [vmem:[%s2138 + $0x1e8] sm:$0xff]
    %v2177 = vld [vmem:[%s2138 + $0x1f8] sm:$0xff]
    %v2178 = vld [vmem:[%s2138 + $0x200] sm:$0xff]
    %v2179 = vld [vmem:[%s2138 + $0x210] sm:$0xff]
    %v2180 = vld [vmem:[%s2138 + $0x218] sm:$0xff]
    %v2181 = vld [vmem:[%s2138 + $0x228] sm:$0xff]
    %v2182 = vld [vmem:[%s2138 + $0x230] sm:$0xff]
    %v2183 = vld [vmem:[%s2138 + $0x240] sm:$0xff]
    %v2184 = vld [vmem:[%s2138 + $0x248] sm:$0xff]
    %v2185 = vld [vmem:[%s2138 + $0x258] sm:$0xff]
    %v2186 = vld [vmem:[%s2138 + $0x260] sm:$0xff]
    %v2187 = vld [vmem:[%s2138 + $0x270] sm:$0xff]
    %v2188 = vld [vmem:[%s2138 + $0x278] sm:$0xff]
    %v2189 = vld [vmem:[%s2138 + $0x288] sm:$0xff]
    %v2190 = vld [vmem:[%s2138 + $0x290] sm:$0xff]
    %v2191 = vld [vmem:[%s2138 + $0x2a0] sm:$0xff]
    %v2192 = vld [vmem:[%s2138 + $0x2a8] sm:$0xff]
    %v2193 = vld [vmem:[%s2138 + $0x2b8] sm:$0xff]
    %v2194 = vld [vmem:[%s2138 + $0x2c0] sm:$0xff]
    %v2195 = vld [vmem:[%s2138 + $0x2d0] sm:$0xff]
    %v2196 = vld [vmem:[%s2138 + $0x2d8] sm:$0xff]
    %v2197 = vld [vmem:[%s2138 + $0x2e8] sm:$0xff]
    %v2198 = vld [vmem:[%s2138 + $0x2f0] sm:$0xff]
    %v2199 = vld [vmem:[%s2138 + $0x300] sm:$0xff]
    %v2200 = vld [vmem:[%s2138 + $0x308] sm:$0xff]
    %v2201 = vld [vmem:[%s2138 + $0x318] sm:$0xff]
    %v2202 = vld [vmem:[%s2138 + $0x320] sm:$0xff]
    %v2203 = vld [vmem:[%s2138 + $0x1] sm:$0xff]
    %v2204 = vld [vmem:[%s2138 + $0x9] sm:$0xff]
    %v2205 = vld [vmem:[%s2138 + $0x19] sm:$0xff]
    %v2206 = vld [vmem:[%s2138 + $0x21] sm:$0xff]
    %v2207 = vld [vmem:[%s2138 + $0x31] sm:$0xff]
    %v2208 = vld [vmem:[%s2138 + $0x39] sm:$0xff]
    %v2209 = vld [vmem:[%s2138 + $0x49] sm:$0xff]
    %v2210 = vld [vmem:[%s2138 + $0x51] sm:$0xff]
    %v2211 = vld [vmem:[%s2138 + $0x61] sm:$0xff]
    %v2212 = vld [vmem:[%s2138 + $0x69] sm:$0xff]
    %v2213 = vld [vmem:[%s2138 + $0x79] sm:$0xff]
    %v2214 = vld [vmem:[%s2138 + $0x81] sm:$0xff]
    %v2215 = vld [vmem:[%s2138 + $0x91] sm:$0xff]
    %v2216 = vld [vmem:[%s2138 + $0x99] sm:$0xff]
    %v2217 = vld [vmem:[%s2138 + $0xa9] sm:$0xff]
    %v2218 = vld [vmem:[%s2138 + $0xb1] sm:$0xff]
    %v2219 = vld [vmem:[%s2138 + $0xc1] sm:$0xff]
    %v2220 = vld [vmem:[%s2138 + $0xc9] sm:$0xff]
    %v2221 = vld [vmem:[%s2138 + $0xd9] sm:$0xff]
    %v2222 = vld [vmem:[%s2138 + $0xe1] sm:$0xff]
    %v2223 = vld [vmem:[%s2138 + $0xf1] sm:$0xff]
    %v2224 = vld [vmem:[%s2138 + $0xf9] sm:$0xff]
    %v2225 = vld [vmem:[%s2138 + $0x109] sm:$0xff]
    %v2226 = vld [vmem:[%s2138 + $0x111] sm:$0xff]
    %v2227 = vld [vmem:[%s2138 + $0x121] sm:$0xff]
    %v2228 = vld [vmem:[%s2138 + $0x129] sm:$0xff]
    %v2229 = vld [vmem:[%s2138 + $0x139] sm:$0xff]
    %v2230 = vld [vmem:[%s2138 + $0x141] sm:$0xff]
    %v2231 = vld [vmem:[%s2138 + $0x151] sm:$0xff]
    %v2232 = vld [vmem:[%s2138 + $0x159] sm:$0xff]
    %v2233 = vld [vmem:[%s2138 + $0x169] sm:$0xff]
    %v2234 = vld [vmem:[%s2138 + $0x171] sm:$0xff]
    %v2235 = vld [vmem:[%s2138 + $0x1b1] sm:$0xff]
    %v2236 = vld [vmem:[%s2138 + $0x1b9] sm:$0xff]
    %v2237 = vld [vmem:[%s2138 + $0x1c9] sm:$0xff]
    %v2238 = vld [vmem:[%s2138 + $0x1d1] sm:$0xff]
    %v2239 = vld [vmem:[%s2138 + $0x1e1] sm:$0xff]
    %v2240 = vld [vmem:[%s2138 + $0x1e9] sm:$0xff]
    %v2241 = vld [vmem:[%s2138 + $0x1f9] sm:$0xff]
    %v2242 = vld [vmem:[%s2138 + $0x201] sm:$0xff]
    %v2243 = vld [vmem:[%s2138 + $0x211] sm:$0xff]
    %v2244 = vld [vmem:[%s2138 + $0x219] sm:$0xff]
    %v2245 = vld [vmem:[%s2138 + $0x229] sm:$0xff]
    %v2246 = vld [vmem:[%s2138 + $0x231] sm:$0xff]
    %v2247 = vld [vmem:[%s2138 + $0x241] sm:$0xff]
    %v2248 = vld [vmem:[%s2138 + $0x249] sm:$0xff]
    %v2249 = vld [vmem:[%s2138 + $0x259] sm:$0xff]
    %v2250 = vld [vmem:[%s2138 + $0x261] sm:$0xff]
    %v2251 = vld [vmem:[%s2138 + $0x271] sm:$0xff]
    %v2252 = vld [vmem:[%s2138 + $0x279] sm:$0xff]
    %v2253 = vld [vmem:[%s2138 + $0x289] sm:$0xff]
    %v2254 = vld [vmem:[%s2138 + $0x291] sm:$0xff]
    %v2255 = vld [vmem:[%s2138 + $0x2a1] sm:$0xff]
    %v2256 = vld [vmem:[%s2138 + $0x2a9] sm:$0xff]
    %v2257 = vld [vmem:[%s2138 + $0x2b9] sm:$0xff]
    %v2258 = vld [vmem:[%s2138 + $0x2c1] sm:$0xff]
    %v2259 = vld [vmem:[%s2138 + $0x2d1] sm:$0xff]
    %v2260 = vld [vmem:[%s2138 + $0x2d9] sm:$0xff]
    %v2261 = vld [vmem:[%s2138 + $0x2e9] sm:$0xff]
    %v2262 = vld [vmem:[%s2138 + $0x2f1] sm:$0xff]
    %v2263 = vld [vmem:[%s2138 + $0x301] sm:$0xff]
    %v2264 = vld [vmem:[%s2138 + $0x309] sm:$0xff]
    %v2265 = vld [vmem:[%s2138 + $0x319] sm:$0xff]
    %v2266 = vld [vmem:[%s2138 + $0x321] sm:$0xff]
    %v2267 = vld [vmem:[%s2138 + $0x2] sm:$0xff]
    %v2268 = vld [vmem:[%s2138 + $0xa] sm:$0xff]
    %v2269 = vld [vmem:[%s2138 + $0x1a] sm:$0xff]
    %v2270 = vld [vmem:[%s2138 + $0x22] sm:$0xff]
    %v2271 = vld [vmem:[%s2138 + $0x32] sm:$0xff]
    %v2272 = vld [vmem:[%s2138 + $0x3a] sm:$0xff]
    %v2273 = vld [vmem:[%s2138 + $0x4a] sm:$0xff]
    %v2274 = vld [vmem:[%s2138 + $0x52] sm:$0xff]
    %v2275 = vld [vmem:[%s2138 + $0x62] sm:$0xff]
    %v2276 = vld [vmem:[%s2138 + $0x6a] sm:$0xff]
    %v2277 = vld [vmem:[%s2138 + $0x7a] sm:$0xff]
    %v2278 = vld [vmem:[%s2138 + $0x82] sm:$0xff]
    %v2279 = vld [vmem:[%s2138 + $0x92] sm:$0xff]
    %v2280 = vld [vmem:[%s2138 + $0x9a] sm:$0xff]
    %v2281 = vld [vmem:[%s2138 + $0xaa] sm:$0xff]
    %v2282 = vld [vmem:[%s2138 + $0xb2] sm:$0xff]
    %v2283 = vld [vmem:[%s2138 + $0xc2] sm:$0xff]
    %v2284 = vld [vmem:[%s2138 + $0xca] sm:$0xff]
    %v2285 = vld [vmem:[%s2138 + $0xda] sm:$0xff]
    %v2286 = vld [vmem:[%s2138 + $0xe2] sm:$0xff]
    %v2287 = vld [vmem:[%s2138 + $0xf2] sm:$0xff]
    %v2288 = vld [vmem:[%s2138 + $0xfa] sm:$0xff]
    %v2289 = vld [vmem:[%s2138 + $0x10a] sm:$0xff]
    %v2290 = vld [vmem:[%s2138 + $0x112] sm:$0xff]
    %v2291 = vld [vmem:[%s2138 + $0x122] sm:$0xff]
    %v2292 = vld [vmem:[%s2138 + $0x12a] sm:$0xff]
    %v2293 = vld [vmem:[%s2138 + $0x13a] sm:$0xff]
    %v2294 = vld [vmem:[%s2138 + $0x142] sm:$0xff]
    %v2295 = vld [vmem:[%s2138 + $0x152] sm:$0xff]
    %v2296 = vld [vmem:[%s2138 + $0x15a] sm:$0xff]
    %v2297 = vld [vmem:[%s2138 + $0x16a] sm:$0xff]
    %v2298 = vld [vmem:[%s2138 + $0x172] sm:$0xff]
    %v2299 = vld [vmem:[%s2138 + $0x1b2] sm:$0xff]
    %v2300 = vld [vmem:[%s2138 + $0x1ba] sm:$0xff]
    %v2301 = vld [vmem:[%s2138 + $0x1ca] sm:$0xff]
    %v2302 = vld [vmem:[%s2138 + $0x1d2] sm:$0xff]
    %v2303 = vld [vmem:[%s2138 + $0x1e2] sm:$0xff]
    %v2304 = vld [vmem:[%s2138 + $0x1ea] sm:$0xff]
    %v2305 = vld [vmem:[%s2138 + $0x1fa] sm:$0xff]
    %v2306 = vld [vmem:[%s2138 + $0x202] sm:$0xff]
    %v2307 = vld [vmem:[%s2138 + $0x212] sm:$0xff]
    %v2308 = vld [vmem:[%s2138 + $0x21a] sm:$0xff]
    %v2309 = vld [vmem:[%s2138 + $0x22a] sm:$0xff]
    %v2310 = vld [vmem:[%s2138 + $0x232] sm:$0xff]
    %v2311 = vld [vmem:[%s2138 + $0x242] sm:$0xff]
    %v2312 = vld [vmem:[%s2138 + $0x24a] sm:$0xff]
    %v2313 = vld [vmem:[%s2138 + $0x25a] sm:$0xff]
    %v2314 = vld [vmem:[%s2138 + $0x262] sm:$0xff]
    %v2315 = vld [vmem:[%s2138 + $0x272] sm:$0xff]
    %v2316 = vld [vmem:[%s2138 + $0x27a] sm:$0xff]
    %v2317 = vld [vmem:[%s2138 + $0x28a] sm:$0xff]
    %v2318 = vld [vmem:[%s2138 + $0x292] sm:$0xff]
    %v2319 = vld [vmem:[%s2138 + $0x2a2] sm:$0xff]
    %v2320 = vld [vmem:[%s2138 + $0x2aa] sm:$0xff]
    %v2321 = vld [vmem:[%s2138 + $0x2ba] sm:$0xff]
    %v2322 = vld [vmem:[%s2138 + $0x2c2] sm:$0xff]
    %v2323 = vld [vmem:[%s2138 + $0x2d2] sm:$0xff]
    %v2324 = vld [vmem:[%s2138 + $0x2da] sm:$0xff]
    %v2325 = vld [vmem:[%s2138 + $0x2ea] sm:$0xff]
    %v2326 = vld [vmem:[%s2138 + $0x2f2] sm:$0xff]
    %v2327 = vld [vmem:[%s2138 + $0x302] sm:$0xff]
    %v2328 = vld [vmem:[%s2138 + $0x30a] sm:$0xff]
    %v2329 = vld [vmem:[%s2138 + $0x31a] sm:$0xff]
    %v2330 = vld [vmem:[%s2138 + $0x322] sm:$0xff]
    %2395 = vrot.lane.b32.xlu0 %v1818, 16
    %v2396 = vpop.permute.xlu0 %2395
    %2397 = vrot.lane.b32.xlu0 %v1819, 16
    %v2398 = vpop.permute.xlu0 %2397
    %2399 = vrot.lane.b32.xlu0 %v1820, 16
    %v2400 = vpop.permute.xlu0 %2399
    %2401 = vrot.lane.b32.xlu0 %v1821, 16
    %v2402 = vpop.permute.xlu0 %2401
    %2403 = vrot.lane.b32.xlu0 %v1822, 16
    %v2404 = vpop.permute.xlu0 %2403
    %2405 = vrot.lane.b32.xlu0 %v1823, 16
    %v2406 = vpop.permute.xlu0 %2405
    %2407 = vrot.lane.b32.xlu0 %v1824, 16
    %v2408 = vpop.permute.xlu0 %2407
    %2409 = vrot.lane.b32.xlu0 %v1825, 16
    %v2410 = vpop.permute.xlu0 %2409
    %2411 = vrot.lane.b32.xlu0 %v1826, 16
    %v2412 = vpop.permute.xlu0 %2411
    %2413 = vrot.lane.b32.xlu0 %v1827, 16
    %v2414 = vpop.permute.xlu0 %2413
    %2415 = vrot.lane.b32.xlu0 %v1828, 16
    %v2416 = vpop.permute.xlu0 %2415
    %2417 = vrot.lane.b32.xlu0 %v1829, 16
    %v2418 = vpop.permute.xlu0 %2417
    %2419 = vrot.lane.b32.xlu0 %v1830, 16
    %v2420 = vpop.permute.xlu0 %2419
    %2421 = vrot.lane.b32.xlu0 %v1831, 16
    %v2422 = vpop.permute.xlu0 %2421
    %2423 = vrot.lane.b32.xlu0 %v1832, 16
    %v2424 = vpop.permute.xlu0 %2423
    %2425 = vrot.lane.b32.xlu0 %v1833, 16
    %v2426 = vpop.permute.xlu0 %2425
    %2427 = vrot.lane.b32.xlu0 %v1834, 16
    %v2428 = vpop.permute.xlu0 %2427
    %2429 = vrot.lane.b32.xlu0 %v1835, 16
    %v2430 = vpop.permute.xlu0 %2429
    %2431 = vrot.lane.b32.xlu0 %v1836, 16
    %v2432 = vpop.permute.xlu0 %2431
    %2433 = vrot.lane.b32.xlu0 %v1837, 16
    %v2434 = vpop.permute.xlu0 %2433
    %2435 = vrot.lane.b32.xlu0 %v1838, 16
    %v2436 = vpop.permute.xlu0 %2435
    %2437 = vrot.lane.b32.xlu0 %v1839, 16
    %v2438 = vpop.permute.xlu0 %2437
    %2439 = vrot.lane.b32.xlu0 %v1840, 16
    %v2440 = vpop.permute.xlu0 %2439
    %2441 = vrot.lane.b32.xlu0 %v1841, 16
    %v2442 = vpop.permute.xlu0 %2441
    %2443 = vrot.lane.b32.xlu0 %v1842, 16
    %v2444 = vpop.permute.xlu0 %2443
    %2445 = vrot.lane.b32.xlu0 %v1843, 16
    %v2446 = vpop.permute.xlu0 %2445
    %2447 = vrot.lane.b32.xlu0 %v1844, 16
    %v2448 = vpop.permute.xlu0 %2447
    %2449 = vrot.lane.b32.xlu0 %v1845, 16
    %v2450 = vpop.permute.xlu0 %2449
    %2451 = vrot.lane.b32.xlu0 %v1846, 16
    %v2452 = vpop.permute.xlu0 %2451
    %2453 = vrot.lane.b32.xlu0 %v1847, 16
    %v2454 = vpop.permute.xlu0 %2453
    %2455 = vrot.lane.b32.xlu0 %v1848, 16
    %v2456 = vpop.permute.xlu0 %2455
    %2457 = vrot.lane.b32.xlu0 %v1849, 16
    %v2458 = vpop.permute.xlu0 %2457
    %2459 = vrot.lane.b32.xlu0 %v1850, 16
    %v2460 = vpop.permute.xlu0 %2459
    %2461 = vrot.lane.b32.xlu0 %v1851, 16
    %v2462 = vpop.permute.xlu0 %2461
    %2463 = vrot.lane.b32.xlu0 %v1852, 16
    %v2464 = vpop.permute.xlu0 %2463
    %2465 = vrot.lane.b32.xlu0 %v1853, 16
    %v2466 = vpop.permute.xlu0 %2465
    %2467 = vrot.lane.b32.xlu0 %v1854, 16
    %v2468 = vpop.permute.xlu0 %2467
    %2469 = vrot.lane.b32.xlu0 %v1855, 16
    %v2470 = vpop.permute.xlu0 %2469
    %2471 = vrot.lane.b32.xlu0 %v1856, 16
    %v2472 = vpop.permute.xlu0 %2471
    %2473 = vrot.lane.b32.xlu0 %v1857, 16
    %v2474 = vpop.permute.xlu0 %2473
    %2475 = vrot.lane.b32.xlu0 %v1858, 16
    %v2476 = vpop.permute.xlu0 %2475
    %2477 = vrot.lane.b32.xlu0 %v1859, 16
    %v2478 = vpop.permute.xlu0 %2477
    %2479 = vrot.lane.b32.xlu0 %v1860, 16
    %v2480 = vpop.permute.xlu0 %2479
    %2481 = vrot.lane.b32.xlu0 %v1861, 16
    %v2482 = vpop.permute.xlu0 %2481
    %2483 = vrot.lane.b32.xlu0 %v1862, 16
    %v2484 = vpop.permute.xlu0 %2483
    %2485 = vrot.lane.b32.xlu0 %v1863, 16
    %v2486 = vpop.permute.xlu0 %2485
    %2487 = vrot.lane.b32.xlu0 %v1864, 16
    %v2488 = vpop.permute.xlu0 %2487
    %2489 = vrot.lane.b32.xlu0 %v1865, 16
    %v2490 = vpop.permute.xlu0 %2489
    %2491 = vrot.lane.b32.xlu0 %v1866, 16
    %v2492 = vpop.permute.xlu0 %2491
    %2493 = vrot.lane.b32.xlu0 %v1867, 16
    %v2494 = vpop.permute.xlu0 %2493
    %2495 = vrot.lane.b32.xlu0 %v1868, 16
    %v2496 = vpop.permute.xlu0 %2495
    %2497 = vrot.lane.b32.xlu0 %v1869, 16
    %v2498 = vpop.permute.xlu0 %2497
    %2499 = vrot.lane.b32.xlu0 %v1870, 16
    %v2500 = vpop.permute.xlu0 %2499
    %2501 = vrot.lane.b32.xlu0 %v1871, 16
    %v2502 = vpop.permute.xlu0 %2501
    %2503 = vrot.lane.b32.xlu0 %v1872, 16
    %v2504 = vpop.permute.xlu0 %2503
    %2505 = vrot.lane.b32.xlu0 %v1873, 16
    %v2506 = vpop.permute.xlu0 %2505
    %2507 = vrot.lane.b32.xlu0 %v1874, 16
    %v2508 = vpop.permute.xlu0 %2507
    %2509 = vrot.lane.b32.xlu0 %v1875, 16
    %v2510 = vpop.permute.xlu0 %2509
    %2511 = vrot.lane.b32.xlu0 %v1876, 16
    %v2512 = vpop.permute.xlu0 %2511
    %2513 = vrot.lane.b32.xlu0 %v1877, 16
    %v2514 = vpop.permute.xlu0 %2513
    %2515 = vrot.lane.b32.xlu0 %v1878, 16
    %v2516 = vpop.permute.xlu0 %2515
    %2517 = vrot.lane.b32.xlu0 %v1879, 16
    %v2518 = vpop.permute.xlu0 %2517
    %2519 = vrot.lane.b32.xlu0 %v1880, 16
    %v2520 = vpop.permute.xlu0 %2519
    %2521 = vrot.lane.b32.xlu0 %v1881, 16
    %v2522 = vpop.permute.xlu0 %2521
    %2651 = vrot.lane.b32.xlu0 %v1882, 32
    %v2652 = vpop.permute.xlu0 %2651
    %2653 = vrot.lane.b32.xlu0 %v1883, 32
    %v2654 = vpop.permute.xlu0 %2653
    %2655 = vrot.lane.b32.xlu0 %v1884, 32
    %v2656 = vpop.permute.xlu0 %2655
    %2657 = vrot.lane.b32.xlu0 %v1885, 32
    %v2658 = vpop.permute.xlu0 %2657
    %2659 = vrot.lane.b32.xlu0 %v1886, 32
    %v2660 = vpop.permute.xlu0 %2659
    %2661 = vrot.lane.b32.xlu0 %v1887, 32
    %v2662 = vpop.permute.xlu0 %2661
    %2663 = vrot.lane.b32.xlu0 %v1888, 32
    %v2664 = vpop.permute.xlu0 %2663
    %2665 = vrot.lane.b32.xlu0 %v1889, 32
    %v2666 = vpop.permute.xlu0 %2665
    %2667 = vrot.lane.b32.xlu0 %v1890, 32
    %v2668 = vpop.permute.xlu0 %2667
    %2669 = vrot.lane.b32.xlu0 %v1891, 32
    %v2670 = vpop.permute.xlu0 %2669
    %2671 = vrot.lane.b32.xlu0 %v1892, 32
    %v2672 = vpop.permute.xlu0 %2671
    %2673 = vrot.lane.b32.xlu0 %v1893, 32
    %v2674 = vpop.permute.xlu0 %2673
    %2675 = vrot.lane.b32.xlu0 %v1894, 32
    %v2676 = vpop.permute.xlu0 %2675
    %2677 = vrot.lane.b32.xlu0 %v1895, 32
    %v2678 = vpop.permute.xlu0 %2677
    %2679 = vrot.lane.b32.xlu0 %v1896, 32
    %v2680 = vpop.permute.xlu0 %2679
    %2681 = vrot.lane.b32.xlu0 %v1897, 32
    %v2682 = vpop.permute.xlu0 %2681
    %2683 = vrot.lane.b32.xlu0 %v1898, 32
    %v2684 = vpop.permute.xlu0 %2683
    %2685 = vrot.lane.b32.xlu0 %v1899, 32
    %v2686 = vpop.permute.xlu0 %2685
    %2687 = vrot.lane.b32.xlu0 %v1900, 32
    %v2688 = vpop.permute.xlu0 %2687
    %2689 = vrot.lane.b32.xlu0 %v1901, 32
    %v2690 = vpop.permute.xlu0 %2689
    %2691 = vrot.lane.b32.xlu0 %v1902, 32
    %v2692 = vpop.permute.xlu0 %2691
    %2693 = vrot.lane.b32.xlu0 %v1903, 32
    %v2694 = vpop.permute.xlu0 %2693
    %2695 = vrot.lane.b32.xlu0 %v1904, 32
    %v2696 = vpop.permute.xlu0 %2695
    %2697 = vrot.lane.b32.xlu0 %v1905, 32
    %v2698 = vpop.permute.xlu0 %2697
    %2699 = vrot.lane.b32.xlu0 %v1906, 32
    %v2700 = vpop.permute.xlu0 %2699
    %2701 = vrot.lane.b32.xlu0 %v1907, 32
    %v2702 = vpop.permute.xlu0 %2701
    %2703 = vrot.lane.b32.xlu0 %v1908, 32
    %v2704 = vpop.permute.xlu0 %2703
    %2705 = vrot.lane.b32.xlu0 %v1909, 32
    %v2706 = vpop.permute.xlu0 %2705
    %2707 = vrot.lane.b32.xlu0 %v1910, 32
    %v2708 = vpop.permute.xlu0 %2707
    %2709 = vrot.lane.b32.xlu0 %v1911, 32
    %v2710 = vpop.permute.xlu0 %2709
    %2711 = vrot.lane.b32.xlu0 %v1912, 32
    %v2712 = vpop.permute.xlu0 %2711
    %2713 = vrot.lane.b32.xlu0 %v1913, 32
    %v2714 = vpop.permute.xlu0 %2713
    %2715 = vrot.lane.b32.xlu0 %v1914, 32
    %v2716 = vpop.permute.xlu0 %2715
    %2717 = vrot.lane.b32.xlu0 %v1915, 32
    %v2718 = vpop.permute.xlu0 %2717
    %2719 = vrot.lane.b32.xlu0 %v1916, 32
    %v2720 = vpop.permute.xlu0 %2719
    %2721 = vrot.lane.b32.xlu0 %v1917, 32
    %v2722 = vpop.permute.xlu0 %2721
    %2723 = vrot.lane.b32.xlu0 %v1918, 32
    %v2724 = vpop.permute.xlu0 %2723
    %2725 = vrot.lane.b32.xlu0 %v1919, 32
    %v2726 = vpop.permute.xlu0 %2725
    %2727 = vrot.lane.b32.xlu0 %v1920, 32
    %v2728 = vpop.permute.xlu0 %2727
    %2729 = vrot.lane.b32.xlu0 %v1921, 32
    %v2730 = vpop.permute.xlu0 %2729
    %2731 = vrot.lane.b32.xlu0 %v1922, 32
    %v2732 = vpop.permute.xlu0 %2731
    %2733 = vrot.lane.b32.xlu0 %v1923, 32
    %v2734 = vpop.permute.xlu0 %2733
    %2735 = vrot.lane.b32.xlu0 %v1924, 32
    %v2736 = vpop.permute.xlu0 %2735
    %2737 = vrot.lane.b32.xlu0 %v1925, 32
    %v2738 = vpop.permute.xlu0 %2737
    %2739 = vrot.lane.b32.xlu0 %v1926, 32
    %v2740 = vpop.permute.xlu0 %2739
    %2741 = vrot.lane.b32.xlu0 %v1927, 32
    %v2742 = vpop.permute.xlu0 %2741
    %2743 = vrot.lane.b32.xlu0 %v1928, 32
    %v2744 = vpop.permute.xlu0 %2743
    %2745 = vrot.lane.b32.xlu0 %v1929, 32
    %v2746 = vpop.permute.xlu0 %2745
    %2747 = vrot.lane.b32.xlu0 %v1930, 32
    %v2748 = vpop.permute.xlu0 %2747
    %2749 = vrot.lane.b32.xlu0 %v1931, 32
    %v2750 = vpop.permute.xlu0 %2749
    %2751 = vrot.lane.b32.xlu0 %v1932, 32
    %v2752 = vpop.permute.xlu0 %2751
    %2753 = vrot.lane.b32.xlu0 %v1933, 32
    %v2754 = vpop.permute.xlu0 %2753
    %2755 = vrot.lane.b32.xlu0 %v1934, 32
    %v2756 = vpop.permute.xlu0 %2755
    %2757 = vrot.lane.b32.xlu0 %v1935, 32
    %v2758 = vpop.permute.xlu0 %2757
    %2759 = vrot.lane.b32.xlu0 %v1936, 32
    %v2760 = vpop.permute.xlu0 %2759
    %2761 = vrot.lane.b32.xlu0 %v1937, 32
    %v2762 = vpop.permute.xlu0 %2761
    %2763 = vrot.lane.b32.xlu0 %v1938, 32
    %v2764 = vpop.permute.xlu0 %2763
    %2765 = vrot.lane.b32.xlu0 %v1939, 32
    %v2766 = vpop.permute.xlu0 %2765
    %2767 = vrot.lane.b32.xlu0 %v1940, 32
    %v2768 = vpop.permute.xlu0 %2767
    %2769 = vrot.lane.b32.xlu0 %v1941, 32
    %v2770 = vpop.permute.xlu0 %2769
    %2771 = vrot.lane.b32.xlu0 %v1942, 32
    %v2772 = vpop.permute.xlu0 %2771
    %2773 = vrot.lane.b32.xlu0 %v1943, 32
    %v2774 = vpop.permute.xlu0 %2773
    %2775 = vrot.lane.b32.xlu0 %v1944, 32
    %v2776 = vpop.permute.xlu0 %2775
    %2777 = vrot.lane.b32.xlu0 %v1945, 32
    %v2778 = vpop.permute.xlu0 %2777
    %2907 = vrot.lane.b32.xlu0 %v1946, 48
    %v2908 = vpop.permute.xlu0 %2907
    %2909 = vrot.lane.b32.xlu0 %v1947, 48
    %v2910 = vpop.permute.xlu0 %2909
    %2911 = vrot.lane.b32.xlu0 %v1948, 48
    %v2912 = vpop.permute.xlu0 %2911
    %2913 = vrot.lane.b32.xlu0 %v1949, 48
    %v2914 = vpop.permute.xlu0 %2913
    %2915 = vrot.lane.b32.xlu0 %v1950, 48
    %v2916 = vpop.permute.xlu0 %2915
    %2917 = vrot.lane.b32.xlu0 %v1951, 48
    %v2918 = vpop.permute.xlu0 %2917
    %2919 = vrot.lane.b32.xlu0 %v1952, 48
    %v2920 = vpop.permute.xlu0 %2919
    %2921 = vrot.lane.b32.xlu0 %v1953, 48
    %v2922 = vpop.permute.xlu0 %2921
    %2923 = vrot.lane.b32.xlu0 %v1954, 48
    %v2924 = vpop.permute.xlu0 %2923
    %2925 = vrot.lane.b32.xlu0 %v1955, 48
    %v2926 = vpop.permute.xlu0 %2925
    %2927 = vrot.lane.b32.xlu0 %v1956, 48
    %v2928 = vpop.permute.xlu0 %2927
    %2929 = vrot.lane.b32.xlu0 %v1957, 48
    %v2930 = vpop.permute.xlu0 %2929
    %2931 = vrot.lane.b32.xlu0 %v1958, 48
    %v2932 = vpop.permute.xlu0 %2931
    %2933 = vrot.lane.b32.xlu0 %v1959, 48
    %v2934 = vpop.permute.xlu0 %2933
    %2935 = vrot.lane.b32.xlu0 %v1960, 48
    %v2936 = vpop.permute.xlu0 %2935
    %2937 = vrot.lane.b32.xlu0 %v1961, 48
    %v2938 = vpop.permute.xlu0 %2937
    %2939 = vrot.lane.b32.xlu0 %v1962, 48
    %v2940 = vpop.permute.xlu0 %2939
    %2941 = vrot.lane.b32.xlu0 %v1963, 48
    %v2942 = vpop.permute.xlu0 %2941
    %2943 = vrot.lane.b32.xlu0 %v1964, 48
    %v2944 = vpop.permute.xlu0 %2943
    %2945 = vrot.lane.b32.xlu0 %v1965, 48
    %v2946 = vpop.permute.xlu0 %2945
    %2947 = vrot.lane.b32.xlu0 %v1966, 48
    %v2948 = vpop.permute.xlu0 %2947
    %2949 = vrot.lane.b32.xlu0 %v1967, 48
    %v2950 = vpop.permute.xlu0 %2949
    %2951 = vrot.lane.b32.xlu0 %v1968, 48
    %v2952 = vpop.permute.xlu0 %2951
    %2953 = vrot.lane.b32.xlu0 %v1969, 48
    %v2954 = vpop.permute.xlu0 %2953
    %2955 = vrot.lane.b32.xlu0 %v1970, 48
    %v2956 = vpop.permute.xlu0 %2955
    %2957 = vrot.lane.b32.xlu0 %v1971, 48
    %v2958 = vpop.permute.xlu0 %2957
    %2959 = vrot.lane.b32.xlu0 %v1972, 48
    %v2960 = vpop.permute.xlu0 %2959
    %2961 = vrot.lane.b32.xlu0 %v1973, 48
    %v2962 = vpop.permute.xlu0 %2961
    %2963 = vrot.lane.b32.xlu0 %v1974, 48
    %v2964 = vpop.permute.xlu0 %2963
    %2965 = vrot.lane.b32.xlu0 %v1975, 48
    %v2966 = vpop.permute.xlu0 %2965
    %2967 = vrot.lane.b32.xlu0 %v1976, 48
    %v2968 = vpop.permute.xlu0 %2967
    %2969 = vrot.lane.b32.xlu0 %v1977, 48
    %v2970 = vpop.permute.xlu0 %2969
    %2971 = vrot.lane.b32.xlu0 %v1978, 48
    %v2972 = vpop.permute.xlu0 %2971
    %2973 = vrot.lane.b32.xlu0 %v1979, 48
    %v2974 = vpop.permute.xlu0 %2973
    %2975 = vrot.lane.b32.xlu0 %v1980, 48
    %v2976 = vpop.permute.xlu0 %2975
    %2977 = vrot.lane.b32.xlu0 %v1981, 48
    %v2978 = vpop.permute.xlu0 %2977
    %2979 = vrot.lane.b32.xlu0 %v1982, 48
    %v2980 = vpop.permute.xlu0 %2979
    %2981 = vrot.lane.b32.xlu0 %v1983, 48
    %v2982 = vpop.permute.xlu0 %2981
    %2983 = vrot.lane.b32.xlu0 %v1984, 48
    %v2984 = vpop.permute.xlu0 %2983
    %2985 = vrot.lane.b32.xlu0 %v1985, 48
    %v2986 = vpop.permute.xlu0 %2985
    %2987 = vrot.lane.b32.xlu0 %v1986, 48
    %v2988 = vpop.permute.xlu0 %2987
    %2989 = vrot.lane.b32.xlu0 %v1987, 48
    %v2990 = vpop.permute.xlu0 %2989
    %2991 = vrot.lane.b32.xlu0 %v1988, 48
    %v2992 = vpop.permute.xlu0 %2991
    %2993 = vrot.lane.b32.xlu0 %v1989, 48
    %v2994 = vpop.permute.xlu0 %2993
    %2995 = vrot.lane.b32.xlu0 %v1990, 48
    %v2996 = vpop.permute.xlu0 %2995
    %2997 = vrot.lane.b32.xlu0 %v1991, 48
    %v2998 = vpop.permute.xlu0 %2997
    %2999 = vrot.lane.b32.xlu0 %v1992, 48
    %v3000 = vpop.permute.xlu0 %2999
    %3001 = vrot.lane.b32.xlu0 %v1993, 48
    %v3002 = vpop.permute.xlu0 %3001
    %3003 = vrot.lane.b32.xlu0 %v1994, 48
    %v3004 = vpop.permute.xlu0 %3003
    %3005 = vrot.lane.b32.xlu0 %v1995, 48
    %v3006 = vpop.permute.xlu0 %3005
    %3007 = vrot.lane.b32.xlu0 %v1996, 48
    %v3008 = vpop.permute.xlu0 %3007
    %3009 = vrot.lane.b32.xlu0 %v1997, 48
    %v3010 = vpop.permute.xlu0 %3009
    %3011 = vrot.lane.b32.xlu0 %v1998, 48
    %v3012 = vpop.permute.xlu0 %3011
    %3013 = vrot.lane.b32.xlu0 %v1999, 48
    %v3014 = vpop.permute.xlu0 %3013
    %3015 = vrot.lane.b32.xlu0 %v2000, 48
    %v3016 = vpop.permute.xlu0 %3015
    %3017 = vrot.lane.b32.xlu0 %v2001, 48
    %v3018 = vpop.permute.xlu0 %3017
    %3019 = vrot.lane.b32.xlu0 %v2002, 48
    %v3020 = vpop.permute.xlu0 %3019
    %3021 = vrot.lane.b32.xlu0 %v2003, 48
    %v3022 = vpop.permute.xlu0 %3021
    %3023 = vrot.lane.b32.xlu0 %v2004, 48
    %v3024 = vpop.permute.xlu0 %3023
    %3025 = vrot.lane.b32.xlu0 %v2005, 48
    %v3026 = vpop.permute.xlu0 %3025
    %3027 = vrot.lane.b32.xlu0 %v2006, 48
    %v3028 = vpop.permute.xlu0 %3027
    %3029 = vrot.lane.b32.xlu0 %v2007, 48
    %v3030 = vpop.permute.xlu0 %3029
    %3031 = vrot.lane.b32.xlu0 %v2008, 48
    %v3032 = vpop.permute.xlu0 %3031
    %3033 = vrot.lane.b32.xlu0 %v2009, 48
    %v3034 = vpop.permute.xlu0 %3033
    %3163 = vrot.lane.b32.xlu0 %v2010, 64
    %v3164 = vpop.permute.xlu0 %3163
    %3165 = vrot.lane.b32.xlu0 %v2011, 64
    %v3166 = vpop.permute.xlu0 %3165
    %3167 = vrot.lane.b32.xlu0 %v2012, 64
    %v3168 = vpop.permute.xlu0 %3167
    %3169 = vrot.lane.b32.xlu0 %v2013, 64
    %v3170 = vpop.permute.xlu0 %3169
    %3171 = vrot.lane.b32.xlu0 %v2014, 64
    %v3172 = vpop.permute.xlu0 %3171
    %3173 = vrot.lane.b32.xlu0 %v2015, 64
    %v3174 = vpop.permute.xlu0 %3173
    %3175 = vrot.lane.b32.xlu0 %v2016, 64
    %v3176 = vpop.permute.xlu0 %3175
    %3177 = vrot.lane.b32.xlu0 %v2017, 64
    %v3178 = vpop.permute.xlu0 %3177
    %3179 = vrot.lane.b32.xlu0 %v2018, 64
    %v3180 = vpop.permute.xlu0 %3179
    %3181 = vrot.lane.b32.xlu0 %v2019, 64
    %v3182 = vpop.permute.xlu0 %3181
    %3183 = vrot.lane.b32.xlu0 %v2020, 64
    %v3184 = vpop.permute.xlu0 %3183
    %3185 = vrot.lane.b32.xlu0 %v2021, 64
    %v3186 = vpop.permute.xlu0 %3185
    %3187 = vrot.lane.b32.xlu0 %v2022, 64
    %v3188 = vpop.permute.xlu0 %3187
    %3189 = vrot.lane.b32.xlu0 %v2023, 64
    %v3190 = vpop.permute.xlu0 %3189
    %3191 = vrot.lane.b32.xlu0 %v2024, 64
    %v3192 = vpop.permute.xlu0 %3191
    %3193 = vrot.lane.b32.xlu0 %v2025, 64
    %v3194 = vpop.permute.xlu0 %3193
    %3195 = vrot.lane.b32.xlu0 %v2026, 64
    %v3196 = vpop.permute.xlu0 %3195
    %3197 = vrot.lane.b32.xlu0 %v2027, 64
    %v3198 = vpop.permute.xlu0 %3197
    %3199 = vrot.lane.b32.xlu0 %v2028, 64
    %v3200 = vpop.permute.xlu0 %3199
    %3201 = vrot.lane.b32.xlu0 %v2029, 64
    %v3202 = vpop.permute.xlu0 %3201
    %3203 = vrot.lane.b32.xlu0 %v2030, 64
    %v3204 = vpop.permute.xlu0 %3203
    %3205 = vrot.lane.b32.xlu0 %v2031, 64
    %v3206 = vpop.permute.xlu0 %3205
    %3207 = vrot.lane.b32.xlu0 %v2032, 64
    %v3208 = vpop.permute.xlu0 %3207
    %3209 = vrot.lane.b32.xlu0 %v2033, 64
    %v3210 = vpop.permute.xlu0 %3209
    %3211 = vrot.lane.b32.xlu0 %v2034, 64
    %v3212 = vpop.permute.xlu0 %3211
    %3213 = vrot.lane.b32.xlu0 %v2035, 64
    %v3214 = vpop.permute.xlu0 %3213
    %3215 = vrot.lane.b32.xlu0 %v2036, 64
    %v3216 = vpop.permute.xlu0 %3215
    %3217 = vrot.lane.b32.xlu0 %v2037, 64
    %v3218 = vpop.permute.xlu0 %3217
    %3219 = vrot.lane.b32.xlu0 %v2038, 64
    %v3220 = vpop.permute.xlu0 %3219
    %3221 = vrot.lane.b32.xlu0 %v2039, 64
    %v3222 = vpop.permute.xlu0 %3221
    %3223 = vrot.lane.b32.xlu0 %v2040, 64
    %v3224 = vpop.permute.xlu0 %3223
    %3225 = vrot.lane.b32.xlu0 %v2041, 64
    %v3226 = vpop.permute.xlu0 %3225
    %3227 = vrot.lane.b32.xlu0 %v2042, 64
    %v3228 = vpop.permute.xlu0 %3227
    %3229 = vrot.lane.b32.xlu0 %v2043, 64
    %v3230 = vpop.permute.xlu0 %3229
    %3231 = vrot.lane.b32.xlu0 %v2044, 64
    %v3232 = vpop.permute.xlu0 %3231
    %3233 = vrot.lane.b32.xlu0 %v2045, 64
    %v3234 = vpop.permute.xlu0 %3233
    %3235 = vrot.lane.b32.xlu0 %v2046, 64
    %v3236 = vpop.permute.xlu0 %3235
    %3237 = vrot.lane.b32.xlu0 %v2047, 64
    %v3238 = vpop.permute.xlu0 %3237
    %3239 = vrot.lane.b32.xlu0 %v2048, 64
    %v3240 = vpop.permute.xlu0 %3239
    %3241 = vrot.lane.b32.xlu0 %v2049, 64
    %v3242 = vpop.permute.xlu0 %3241
    %3243 = vrot.lane.b32.xlu0 %v2050, 64
    %v3244 = vpop.permute.xlu0 %3243
    %3245 = vrot.lane.b32.xlu0 %v2051, 64
    %v3246 = vpop.permute.xlu0 %3245
    %3247 = vrot.lane.b32.xlu0 %v2052, 64
    %v3248 = vpop.permute.xlu0 %3247
    %3249 = vrot.lane.b32.xlu0 %v2053, 64
    %v3250 = vpop.permute.xlu0 %3249
    %3251 = vrot.lane.b32.xlu0 %v2054, 64
    %v3252 = vpop.permute.xlu0 %3251
    %3253 = vrot.lane.b32.xlu0 %v2055, 64
    %v3254 = vpop.permute.xlu0 %3253
    %3255 = vrot.lane.b32.xlu0 %v2056, 64
    %v3256 = vpop.permute.xlu0 %3255
    %3257 = vrot.lane.b32.xlu0 %v2057, 64
    %v3258 = vpop.permute.xlu0 %3257
    %3259 = vrot.lane.b32.xlu0 %v2058, 64
    %v3260 = vpop.permute.xlu0 %3259
    %3261 = vrot.lane.b32.xlu0 %v2059, 64
    %v3262 = vpop.permute.xlu0 %3261
    %3263 = vrot.lane.b32.xlu0 %v2060, 64
    %v3264 = vpop.permute.xlu0 %3263
    %3265 = vrot.lane.b32.xlu0 %v2061, 64
    %v3266 = vpop.permute.xlu0 %3265
    %3267 = vrot.lane.b32.xlu0 %v2062, 64
    %v3268 = vpop.permute.xlu0 %3267
    %3269 = vrot.lane.b32.xlu0 %v2063, 64
    %v3270 = vpop.permute.xlu0 %3269
    %3271 = vrot.lane.b32.xlu0 %v2064, 64
    %v3272 = vpop.permute.xlu0 %3271
    %3273 = vrot.lane.b32.xlu0 %v2065, 64
    %v3274 = vpop.permute.xlu0 %3273
    %3275 = vrot.lane.b32.xlu0 %v2066, 64
    %v3276 = vpop.permute.xlu0 %3275
    %3277 = vrot.lane.b32.xlu0 %v2067, 64
    %v3278 = vpop.permute.xlu0 %3277
    %3279 = vrot.lane.b32.xlu0 %v2068, 64
    %v3280 = vpop.permute.xlu0 %3279
    %3281 = vrot.lane.b32.xlu0 %v2069, 64
    %v3282 = vpop.permute.xlu0 %3281
    %3283 = vrot.lane.b32.xlu0 %v2070, 64
    %v3284 = vpop.permute.xlu0 %3283
    %3285 = vrot.lane.b32.xlu0 %v2071, 64
    %v3286 = vpop.permute.xlu0 %3285
    %3287 = vrot.lane.b32.xlu0 %v2072, 64
    %v3288 = vpop.permute.xlu0 %3287
    %3289 = vrot.lane.b32.xlu0 %v2073, 64
    %v3290 = vpop.permute.xlu0 %3289
    %3419 = vrot.lane.b32.xlu0 %v2074, 80
    %v3420 = vpop.permute.xlu0 %3419
    %3421 = vrot.lane.b32.xlu0 %v2075, 80
    %v3422 = vpop.permute.xlu0 %3421
    %3423 = vrot.lane.b32.xlu0 %v2076, 80
    %v3424 = vpop.permute.xlu0 %3423
    %3425 = vrot.lane.b32.xlu0 %v2077, 80
    %v3426 = vpop.permute.xlu0 %3425
    %3427 = vrot.lane.b32.xlu0 %v2078, 80
    %v3428 = vpop.permute.xlu0 %3427
    %3429 = vrot.lane.b32.xlu0 %v2079, 80
    %v3430 = vpop.permute.xlu0 %3429
    %3431 = vrot.lane.b32.xlu0 %v2080, 80
    %v3432 = vpop.permute.xlu0 %3431
    %3433 = vrot.lane.b32.xlu0 %v2081, 80
    %v3434 = vpop.permute.xlu0 %3433
    %3435 = vrot.lane.b32.xlu0 %v2082, 80
    %v3436 = vpop.permute.xlu0 %3435
    %3437 = vrot.lane.b32.xlu0 %v2083, 80
    %v3438 = vpop.permute.xlu0 %3437
    %3439 = vrot.lane.b32.xlu0 %v2084, 80
    %v3440 = vpop.permute.xlu0 %3439
    %3441 = vrot.lane.b32.xlu0 %v2085, 80
    %v3442 = vpop.permute.xlu0 %3441
    %3443 = vrot.lane.b32.xlu0 %v2086, 80
    %v3444 = vpop.permute.xlu0 %3443
    %3445 = vrot.lane.b32.xlu0 %v2087, 80
    %v3446 = vpop.permute.xlu0 %3445
    %3447 = vrot.lane.b32.xlu0 %v2088, 80
    %v3448 = vpop.permute.xlu0 %3447
    %3449 = vrot.lane.b32.xlu0 %v2089, 80
    %v3450 = vpop.permute.xlu0 %3449
    %3451 = vrot.lane.b32.xlu0 %v2090, 80
    %v3452 = vpop.permute.xlu0 %3451
    %3453 = vrot.lane.b32.xlu0 %v2091, 80
    %v3454 = vpop.permute.xlu0 %3453
    %3455 = vrot.lane.b32.xlu0 %v2092, 80
    %v3456 = vpop.permute.xlu0 %3455
    %3457 = vrot.lane.b32.xlu0 %v2093, 80
    %v3458 = vpop.permute.xlu0 %3457
    %3459 = vrot.lane.b32.xlu0 %v2094, 80
    %v3460 = vpop.permute.xlu0 %3459
    %3461 = vrot.lane.b32.xlu0 %v2095, 80
    %v3462 = vpop.permute.xlu0 %3461
    %3463 = vrot.lane.b32.xlu0 %v2096, 80
    %v3464 = vpop.permute.xlu0 %3463
    %3465 = vrot.lane.b32.xlu0 %v2097, 80
    %v3466 = vpop.permute.xlu0 %3465
    %3467 = vrot.lane.b32.xlu0 %v2098, 80
    %v3468 = vpop.permute.xlu0 %3467
    %3469 = vrot.lane.b32.xlu0 %v2099, 80
    %v3470 = vpop.permute.xlu0 %3469
    %3471 = vrot.lane.b32.xlu0 %v2100, 80
    %v3472 = vpop.permute.xlu0 %3471
    %3473 = vrot.lane.b32.xlu0 %v2101, 80
    %v3474 = vpop.permute.xlu0 %3473
    %3475 = vrot.lane.b32.xlu0 %v2102, 80
    %v3476 = vpop.permute.xlu0 %3475
    %3477 = vrot.lane.b32.xlu0 %v2103, 80
    %v3478 = vpop.permute.xlu0 %3477
    %3479 = vrot.lane.b32.xlu0 %v2104, 80
    %v3480 = vpop.permute.xlu0 %3479
    %3481 = vrot.lane.b32.xlu0 %v2105, 80
    %v3482 = vpop.permute.xlu0 %3481
    %3483 = vrot.lane.b32.xlu0 %v2106, 80
    %v3484 = vpop.permute.xlu0 %3483
    %3485 = vrot.lane.b32.xlu0 %v2107, 80
    %v3486 = vpop.permute.xlu0 %3485
    %3487 = vrot.lane.b32.xlu0 %v2108, 80
    %v3488 = vpop.permute.xlu0 %3487
    %3489 = vrot.lane.b32.xlu0 %v2109, 80
    %v3490 = vpop.permute.xlu0 %3489
    %3491 = vrot.lane.b32.xlu0 %v2110, 80
    %v3492 = vpop.permute.xlu0 %3491
    %3493 = vrot.lane.b32.xlu0 %v2111, 80
    %v3494 = vpop.permute.xlu0 %3493
    %3495 = vrot.lane.b32.xlu0 %v2112, 80
    %v3496 = vpop.permute.xlu0 %3495
    %3497 = vrot.lane.b32.xlu0 %v2113, 80
    %v3498 = vpop.permute.xlu0 %3497
    %3499 = vrot.lane.b32.xlu0 %v2114, 80
    %v3500 = vpop.permute.xlu0 %3499
    %3501 = vrot.lane.b32.xlu0 %v2115, 80
    %v3502 = vpop.permute.xlu0 %3501
    %3503 = vrot.lane.b32.xlu0 %v2116, 80
    %v3504 = vpop.permute.xlu0 %3503
    %3505 = vrot.lane.b32.xlu0 %v2117, 80
    %v3506 = vpop.permute.xlu0 %3505
    %3507 = vrot.lane.b32.xlu0 %v2118, 80
    %v3508 = vpop.permute.xlu0 %3507
    %3509 = vrot.lane.b32.xlu0 %v2119, 80
    %v3510 = vpop.permute.xlu0 %3509
    %3511 = vrot.lane.b32.xlu0 %v2120, 80
    %v3512 = vpop.permute.xlu0 %3511
    %3513 = vrot.lane.b32.xlu0 %v2121, 80
    %v3514 = vpop.permute.xlu0 %3513
    %3515 = vrot.lane.b32.xlu0 %v2122, 80
    %v3516 = vpop.permute.xlu0 %3515
    %3517 = vrot.lane.b32.xlu0 %v2123, 80
    %v3518 = vpop.permute.xlu0 %3517
    %3519 = vrot.lane.b32.xlu0 %v2124, 80
    %v3520 = vpop.permute.xlu0 %3519
    %3521 = vrot.lane.b32.xlu0 %v2125, 80
    %v3522 = vpop.permute.xlu0 %3521
    %3523 = vrot.lane.b32.xlu0 %v2126, 80
    %v3524 = vpop.permute.xlu0 %3523
    %3525 = vrot.lane.b32.xlu0 %v2127, 80
    %v3526 = vpop.permute.xlu0 %3525
    %3527 = vrot.lane.b32.xlu0 %v2128, 80
    %v3528 = vpop.permute.xlu0 %3527
    %3529 = vrot.lane.b32.xlu0 %v2129, 80
    %v3530 = vpop.permute.xlu0 %3529
    %3531 = vrot.lane.b32.xlu0 %v2130, 80
    %v3532 = vpop.permute.xlu0 %3531
    %3533 = vrot.lane.b32.xlu0 %v2131, 80
    %v3534 = vpop.permute.xlu0 %3533
    %3535 = vrot.lane.b32.xlu0 %v2132, 80
    %v3536 = vpop.permute.xlu0 %3535
    %3537 = vrot.lane.b32.xlu0 %v2133, 80
    %v3538 = vpop.permute.xlu0 %3537
    %3539 = vrot.lane.b32.xlu0 %v2134, 80
    %v3540 = vpop.permute.xlu0 %3539
    %3541 = vrot.lane.b32.xlu0 %v2135, 80
    %v3542 = vpop.permute.xlu0 %3541
    %3543 = vrot.lane.b32.xlu0 %v2136, 80
    %v3544 = vpop.permute.xlu0 %3543
    %3545 = vrot.lane.b32.xlu0 %v2137, 80
    %v3546 = vpop.permute.xlu0 %3545
    %3675 = vrot.lane.b32.xlu0 %v2139, 96
    %v3676 = vpop.permute.xlu0 %3675
    %3677 = vrot.lane.b32.xlu0 %v2140, 96
    %v3678 = vpop.permute.xlu0 %3677
    %3679 = vrot.lane.b32.xlu0 %v2141, 96
    %v3680 = vpop.permute.xlu0 %3679
    %3681 = vrot.lane.b32.xlu0 %v2142, 96
    %v3682 = vpop.permute.xlu0 %3681
    %3683 = vrot.lane.b32.xlu0 %v2143, 96
    %v3684 = vpop.permute.xlu0 %3683
    %3685 = vrot.lane.b32.xlu0 %v2144, 96
    %v3686 = vpop.permute.xlu0 %3685
    %3687 = vrot.lane.b32.xlu0 %v2145, 96
    %v3688 = vpop.permute.xlu0 %3687
    %3689 = vrot.lane.b32.xlu0 %v2146, 96
    %v3690 = vpop.permute.xlu0 %3689
    %3691 = vrot.lane.b32.xlu0 %v2147, 96
    %v3692 = vpop.permute.xlu0 %3691
    %3693 = vrot.lane.b32.xlu0 %v2148, 96
    %v3694 = vpop.permute.xlu0 %3693
    %3695 = vrot.lane.b32.xlu0 %v2149, 96
    %v3696 = vpop.permute.xlu0 %3695
    %3697 = vrot.lane.b32.xlu0 %v2150, 96
    %v3698 = vpop.permute.xlu0 %3697
    %3699 = vrot.lane.b32.xlu0 %v2151, 96
    %v3700 = vpop.permute.xlu0 %3699
    %3701 = vrot.lane.b32.xlu0 %v2152, 96
    %v3702 = vpop.permute.xlu0 %3701
    %3703 = vrot.lane.b32.xlu0 %v2153, 96
    %v3704 = vpop.permute.xlu0 %3703
    %3705 = vrot.lane.b32.xlu0 %v2154, 96
    %v3706 = vpop.permute.xlu0 %3705
    %3707 = vrot.lane.b32.xlu0 %v2155, 96
    %v3708 = vpop.permute.xlu0 %3707
    %3709 = vrot.lane.b32.xlu0 %v2156, 96
    %v3710 = vpop.permute.xlu0 %3709
    %3711 = vrot.lane.b32.xlu0 %v2157, 96
    %v3712 = vpop.permute.xlu0 %3711
    %3713 = vrot.lane.b32.xlu0 %v2158, 96
    %v3714 = vpop.permute.xlu0 %3713
    %3715 = vrot.lane.b32.xlu0 %v2159, 96
    %v3716 = vpop.permute.xlu0 %3715
    %3717 = vrot.lane.b32.xlu0 %v2160, 96
    %v3718 = vpop.permute.xlu0 %3717
    %3719 = vrot.lane.b32.xlu0 %v2161, 96
    %v3720 = vpop.permute.xlu0 %3719
    %3721 = vrot.lane.b32.xlu0 %v2162, 96
    %v3722 = vpop.permute.xlu0 %3721
    %3723 = vrot.lane.b32.xlu0 %v2163, 96
    %v3724 = vpop.permute.xlu0 %3723
    %3725 = vrot.lane.b32.xlu0 %v2164, 96
    %v3726 = vpop.permute.xlu0 %3725
    %3727 = vrot.lane.b32.xlu0 %v2165, 96
    %v3728 = vpop.permute.xlu0 %3727
    %3729 = vrot.lane.b32.xlu0 %v2166, 96
    %v3730 = vpop.permute.xlu0 %3729
    %3731 = vrot.lane.b32.xlu0 %v2167, 96
    %v3732 = vpop.permute.xlu0 %3731
    %3733 = vrot.lane.b32.xlu0 %v2168, 96
    %v3734 = vpop.permute.xlu0 %3733
    %3735 = vrot.lane.b32.xlu0 %v2169, 96
    %v3736 = vpop.permute.xlu0 %3735
    %3737 = vrot.lane.b32.xlu0 %v2170, 96
    %v3738 = vpop.permute.xlu0 %3737
    %3739 = vrot.lane.b32.xlu0 %v2171, 96
    %v3740 = vpop.permute.xlu0 %3739
    %3741 = vrot.lane.b32.xlu0 %v2172, 96
    %v3742 = vpop.permute.xlu0 %3741
    %3743 = vrot.lane.b32.xlu0 %v2173, 96
    %v3744 = vpop.permute.xlu0 %3743
    %3745 = vrot.lane.b32.xlu0 %v2174, 96
    %v3746 = vpop.permute.xlu0 %3745
    %3747 = vrot.lane.b32.xlu0 %v2175, 96
    %v3748 = vpop.permute.xlu0 %3747
    %3749 = vrot.lane.b32.xlu0 %v2176, 96
    %v3750 = vpop.permute.xlu0 %3749
    %3751 = vrot.lane.b32.xlu0 %v2177, 96
    %v3752 = vpop.permute.xlu0 %3751
    %3753 = vrot.lane.b32.xlu0 %v2178, 96
    %v3754 = vpop.permute.xlu0 %3753
    %3755 = vrot.lane.b32.xlu0 %v2179, 96
    %v3756 = vpop.permute.xlu0 %3755
    %3757 = vrot.lane.b32.xlu0 %v2180, 96
    %v3758 = vpop.permute.xlu0 %3757
    %3759 = vrot.lane.b32.xlu0 %v2181, 96
    %v3760 = vpop.permute.xlu0 %3759
    %3761 = vrot.lane.b32.xlu0 %v2182, 96
    %v3762 = vpop.permute.xlu0 %3761
    %3763 = vrot.lane.b32.xlu0 %v2183, 96
    %v3764 = vpop.permute.xlu0 %3763
    %3765 = vrot.lane.b32.xlu0 %v2184, 96
    %v3766 = vpop.permute.xlu0 %3765
    %3767 = vrot.lane.b32.xlu0 %v2185, 96
    %v3768 = vpop.permute.xlu0 %3767
    %3769 = vrot.lane.b32.xlu0 %v2186, 96
    %v3770 = vpop.permute.xlu0 %3769
    %3771 = vrot.lane.b32.xlu0 %v2187, 96
    %v3772 = vpop.permute.xlu0 %3771
    %3773 = vrot.lane.b32.xlu0 %v2188, 96
    %v3774 = vpop.permute.xlu0 %3773
    %3775 = vrot.lane.b32.xlu0 %v2189, 96
    %v3776 = vpop.permute.xlu0 %3775
    %3777 = vrot.lane.b32.xlu0 %v2190, 96
    %v3778 = vpop.permute.xlu0 %3777
    %3779 = vrot.lane.b32.xlu0 %v2191, 96
    %v3780 = vpop.permute.xlu0 %3779
    %3781 = vrot.lane.b32.xlu0 %v2192, 96
    %v3782 = vpop.permute.xlu0 %3781
    %3783 = vrot.lane.b32.xlu0 %v2193, 96
    %v3784 = vpop.permute.xlu0 %3783
    %3785 = vrot.lane.b32.xlu0 %v2194, 96
    %v3786 = vpop.permute.xlu0 %3785
    %3787 = vrot.lane.b32.xlu0 %v2195, 96
    %v3788 = vpop.permute.xlu0 %3787
    %3789 = vrot.lane.b32.xlu0 %v2196, 96
    %v3790 = vpop.permute.xlu0 %3789
    %3791 = vrot.lane.b32.xlu0 %v2197, 96
    %v3792 = vpop.permute.xlu0 %3791
    %3793 = vrot.lane.b32.xlu0 %v2198, 96
    %v3794 = vpop.permute.xlu0 %3793
    %3795 = vrot.lane.b32.xlu0 %v2199, 96
    %v3796 = vpop.permute.xlu0 %3795
    %3797 = vrot.lane.b32.xlu0 %v2200, 96
    %v3798 = vpop.permute.xlu0 %3797
    %3799 = vrot.lane.b32.xlu0 %v2201, 96
    %v3800 = vpop.permute.xlu0 %3799
    %3801 = vrot.lane.b32.xlu0 %v2202, 96
    %v3802 = vpop.permute.xlu0 %3801
    %3931 = vrot.lane.b32.xlu0 %v2203, 112
    %v3932 = vpop.permute.xlu0 %3931
    %3933 = vrot.lane.b32.xlu0 %v2204, 112
    %v3934 = vpop.permute.xlu0 %3933
    %3935 = vrot.lane.b32.xlu0 %v2205, 112
    %v3936 = vpop.permute.xlu0 %3935
    %3937 = vrot.lane.b32.xlu0 %v2206, 112
    %v3938 = vpop.permute.xlu0 %3937
    %3939 = vrot.lane.b32.xlu0 %v2207, 112
    %v3940 = vpop.permute.xlu0 %3939
    %3941 = vrot.lane.b32.xlu0 %v2208, 112
    %v3942 = vpop.permute.xlu0 %3941
    %3943 = vrot.lane.b32.xlu0 %v2209, 112
    %v3944 = vpop.permute.xlu0 %3943
    %3945 = vrot.lane.b32.xlu0 %v2210, 112
    %v3946 = vpop.permute.xlu0 %3945
    %3947 = vrot.lane.b32.xlu0 %v2211, 112
    %v3948 = vpop.permute.xlu0 %3947
    %3949 = vrot.lane.b32.xlu0 %v2212, 112
    %v3950 = vpop.permute.xlu0 %3949
    %3951 = vrot.lane.b32.xlu0 %v2213, 112
    %v3952 = vpop.permute.xlu0 %3951
    %3953 = vrot.lane.b32.xlu0 %v2214, 112
    %v3954 = vpop.permute.xlu0 %3953
    %3955 = vrot.lane.b32.xlu0 %v2215, 112
    %v3956 = vpop.permute.xlu0 %3955
    %3957 = vrot.lane.b32.xlu0 %v2216, 112
    %v3958 = vpop.permute.xlu0 %3957
    %3959 = vrot.lane.b32.xlu0 %v2217, 112
    %v3960 = vpop.permute.xlu0 %3959
    %3961 = vrot.lane.b32.xlu0 %v2218, 112
    %v3962 = vpop.permute.xlu0 %3961
    %3963 = vrot.lane.b32.xlu0 %v2219, 112
    %v3964 = vpop.permute.xlu0 %3963
    %3965 = vrot.lane.b32.xlu0 %v2220, 112
    %v3966 = vpop.permute.xlu0 %3965
    %3967 = vrot.lane.b32.xlu0 %v2221, 112
    %v3968 = vpop.permute.xlu0 %3967
    %3969 = vrot.lane.b32.xlu0 %v2222, 112
    %v3970 = vpop.permute.xlu0 %3969
    %3971 = vrot.lane.b32.xlu0 %v2223, 112
    %v3972 = vpop.permute.xlu0 %3971
    %3973 = vrot.lane.b32.xlu0 %v2224, 112
    %v3974 = vpop.permute.xlu0 %3973
    %3975 = vrot.lane.b32.xlu0 %v2225, 112
    %v3976 = vpop.permute.xlu0 %3975
    %3977 = vrot.lane.b32.xlu0 %v2226, 112
    %v3978 = vpop.permute.xlu0 %3977
    %3979 = vrot.lane.b32.xlu0 %v2227, 112
    %v3980 = vpop.permute.xlu0 %3979
    %3981 = vrot.lane.b32.xlu0 %v2228, 112
    %v3982 = vpop.permute.xlu0 %3981
    %3983 = vrot.lane.b32.xlu0 %v2229, 112
    %v3984 = vpop.permute.xlu0 %3983
    %3985 = vrot.lane.b32.xlu0 %v2230, 112
    %v3986 = vpop.permute.xlu0 %3985
    %3987 = vrot.lane.b32.xlu0 %v2231, 112
    %v3988 = vpop.permute.xlu0 %3987
    %3989 = vrot.lane.b32.xlu0 %v2232, 112
    %v3990 = vpop.permute.xlu0 %3989
    %3991 = vrot.lane.b32.xlu0 %v2233, 112
    %v3992 = vpop.permute.xlu0 %3991
    %3993 = vrot.lane.b32.xlu0 %v2234, 112
    %v3994 = vpop.permute.xlu0 %3993
    %3995 = vrot.lane.b32.xlu0 %v2235, 112
    %v3996 = vpop.permute.xlu0 %3995
    %3997 = vrot.lane.b32.xlu0 %v2236, 112
    %v3998 = vpop.permute.xlu0 %3997
    %3999 = vrot.lane.b32.xlu0 %v2237, 112
    %v4000 = vpop.permute.xlu0 %3999
    %4001 = vrot.lane.b32.xlu0 %v2238, 112
    %v4002 = vpop.permute.xlu0 %4001
    %4003 = vrot.lane.b32.xlu0 %v2239, 112
    %v4004 = vpop.permute.xlu0 %4003
    %4005 = vrot.lane.b32.xlu0 %v2240, 112
    %v4006 = vpop.permute.xlu0 %4005
    %4007 = vrot.lane.b32.xlu0 %v2241, 112
    %v4008 = vpop.permute.xlu0 %4007
    %4009 = vrot.lane.b32.xlu0 %v2242, 112
    %v4010 = vpop.permute.xlu0 %4009
    %4011 = vrot.lane.b32.xlu0 %v2243, 112
    %v4012 = vpop.permute.xlu0 %4011
    %4013 = vrot.lane.b32.xlu0 %v2244, 112
    %v4014 = vpop.permute.xlu0 %4013
    %4015 = vrot.lane.b32.xlu0 %v2245, 112
    %v4016 = vpop.permute.xlu0 %4015
    %4017 = vrot.lane.b32.xlu0 %v2246, 112
    %v4018 = vpop.permute.xlu0 %4017
    %4019 = vrot.lane.b32.xlu0 %v2247, 112
    %v4020 = vpop.permute.xlu0 %4019
    %4021 = vrot.lane.b32.xlu0 %v2248, 112
    %v4022 = vpop.permute.xlu0 %4021
    %4023 = vrot.lane.b32.xlu0 %v2249, 112
    %v4024 = vpop.permute.xlu0 %4023
    %4025 = vrot.lane.b32.xlu0 %v2250, 112
    %v4026 = vpop.permute.xlu0 %4025
    %4027 = vrot.lane.b32.xlu0 %v2251, 112
    %v4028 = vpop.permute.xlu0 %4027
    %4029 = vrot.lane.b32.xlu0 %v2252, 112
    %v4030 = vpop.permute.xlu0 %4029
    %4031 = vrot.lane.b32.xlu0 %v2253, 112
    %v4032 = vpop.permute.xlu0 %4031
    %4033 = vrot.lane.b32.xlu0 %v2254, 112
    %v4034 = vpop.permute.xlu0 %4033
    %4035 = vrot.lane.b32.xlu0 %v2255, 112
    %v4036 = vpop.permute.xlu0 %4035
    %4037 = vrot.lane.b32.xlu0 %v2256, 112
    %v4038 = vpop.permute.xlu0 %4037
    %4039 = vrot.lane.b32.xlu0 %v2257, 112
    %v4040 = vpop.permute.xlu0 %4039
    %4041 = vrot.lane.b32.xlu0 %v2258, 112
    %v4042 = vpop.permute.xlu0 %4041
    %4043 = vrot.lane.b32.xlu0 %v2259, 112
    %v4044 = vpop.permute.xlu0 %4043
    %4045 = vrot.lane.b32.xlu0 %v2260, 112
    %v4046 = vpop.permute.xlu0 %4045
    %4047 = vrot.lane.b32.xlu0 %v2261, 112
    %v4048 = vpop.permute.xlu0 %4047
    %4049 = vrot.lane.b32.xlu0 %v2262, 112
    %v4050 = vpop.permute.xlu0 %4049
    %4051 = vrot.lane.b32.xlu0 %v2263, 112
    %v4052 = vpop.permute.xlu0 %4051
    %4053 = vrot.lane.b32.xlu0 %v2264, 112
    %v4054 = vpop.permute.xlu0 %4053
    %4055 = vrot.lane.b32.xlu0 %v2265, 112
    %v4056 = vpop.permute.xlu0 %4055
    %4057 = vrot.lane.b32.xlu0 %v2266, 112
    %v4058 = vpop.permute.xlu0 %4057
    %v4123 = vsel %vm102, %v1754, %v2396
    %v4124 = vsel %vm102, %v1755, %v2398
    %v4125 = vsel %vm102, %v1756, %v2400
    %v4126 = vsel %vm102, %v1757, %v2402
    %v4127 = vsel %vm102, %v1758, %v2404
    %v4128 = vsel %vm102, %v1759, %v2406
    %v4129 = vsel %vm102, %v1760, %v2408
    %v4130 = vsel %vm102, %v1761, %v2410
    %v4131 = vsel %vm102, %v1762, %v2412
    %v4132 = vsel %vm102, %v1763, %v2414
    %v4133 = vsel %vm102, %v1764, %v2416
    %v4134 = vsel %vm102, %v1765, %v2418
    %v4135 = vsel %vm102, %v1766, %v2420
    %v4136 = vsel %vm102, %v1767, %v2422
    %v4137 = vsel %vm102, %v1768, %v2424
    %v4138 = vsel %vm102, %v1769, %v2426
    %v4139 = vsel %vm102, %v1770, %v2428
    %v4140 = vsel %vm102, %v1771, %v2430
    %v4141 = vsel %vm102, %v1772, %v2432
    %v4142 = vsel %vm102, %v1773, %v2434
    %v4143 = vsel %vm102, %v1774, %v2436
    %v4144 = vsel %vm102, %v1775, %v2438
    %v4145 = vsel %vm102, %v1776, %v2440
    %v4146 = vsel %vm102, %v1777, %v2442
    %v4147 = vsel %vm102, %v1778, %v2444
    %v4148 = vsel %vm102, %v1779, %v2446
    %v4149 = vsel %vm102, %v1780, %v2448
    %v4150 = vsel %vm102, %v1781, %v2450
    %v4151 = vsel %vm102, %v1782, %v2452
    %v4152 = vsel %vm102, %v1783, %v2454
    %v4153 = vsel %vm102, %v1784, %v2456
    %v4154 = vsel %vm102, %v1785, %v2458
    %v4155 = vsel %vm102, %v1786, %v2460
    %v4156 = vsel %vm102, %v1787, %v2462
    %v4157 = vsel %vm102, %v1788, %v2464
    %v4158 = vsel %vm102, %v1789, %v2466
    %v4159 = vsel %vm102, %v1790, %v2468
    %v4160 = vsel %vm102, %v1791, %v2470
    %v4161 = vsel %vm102, %v1792, %v2472
    %v4162 = vsel %vm102, %v1793, %v2474
    %v4163 = vsel %vm102, %v1794, %v2476
    %v4164 = vsel %vm102, %v1795, %v2478
    %v4165 = vsel %vm102, %v1796, %v2480
    %v4166 = vsel %vm102, %v1797, %v2482
    %v4167 = vsel %vm102, %v1798, %v2484
    %v4168 = vsel %vm102, %v1799, %v2486
    %v4169 = vsel %vm102, %v1800, %v2488
    %v4170 = vsel %vm102, %v1801, %v2490
    %v4171 = vsel %vm102, %v1802, %v2492
    %v4172 = vsel %vm102, %v1803, %v2494
    %v4173 = vsel %vm102, %v1804, %v2496
    %v4174 = vsel %vm102, %v1805, %v2498
    %v4175 = vsel %vm102, %v1806, %v2500
    %v4176 = vsel %vm102, %v1807, %v2502
    %v4177 = vsel %vm102, %v1808, %v2504
    %v4178 = vsel %vm102, %v1809, %v2506
    %v4179 = vsel %vm102, %v1810, %v2508
    %v4180 = vsel %vm102, %v1811, %v2510
    %v4181 = vsel %vm102, %v1812, %v2512
    %v4182 = vsel %vm102, %v1813, %v2514
    %v4183 = vsel %vm102, %v1814, %v2516
    %v4184 = vsel %vm102, %v1815, %v2518
    %v4185 = vsel %vm102, %v1816, %v2520
    %v4186 = vsel %vm102, %v1817, %v2522
    %vm4187 = vcmask 261120
    %v4188 = vsel %vm4187, %v4123, %v2652
    %v4189 = vsel %vm4187, %v4124, %v2654
    %v4190 = vsel %vm4187, %v4125, %v2656
    %v4191 = vsel %vm4187, %v4126, %v2658
    %v4192 = vsel %vm4187, %v4127, %v2660
    %v4193 = vsel %vm4187, %v4128, %v2662
    %v4194 = vsel %vm4187, %v4129, %v2664
    %v4195 = vsel %vm4187, %v4130, %v2666
    %v4196 = vsel %vm4187, %v4131, %v2668
    %v4197 = vsel %vm4187, %v4132, %v2670
    %v4198 = vsel %vm4187, %v4133, %v2672
    %v4199 = vsel %vm4187, %v4134, %v2674
    %v4200 = vsel %vm4187, %v4135, %v2676
    %v4201 = vsel %vm4187, %v4136, %v2678
    %v4202 = vsel %vm4187, %v4137, %v2680
    %v4203 = vsel %vm4187, %v4138, %v2682
    %v4204 = vsel %vm4187, %v4139, %v2684
    %v4205 = vsel %vm4187, %v4140, %v2686
    %v4206 = vsel %vm4187, %v4141, %v2688
    %v4207 = vsel %vm4187, %v4142, %v2690
    %v4208 = vsel %vm4187, %v4143, %v2692
    %v4209 = vsel %vm4187, %v4144, %v2694
    %v4210 = vsel %vm4187, %v4145, %v2696
    %v4211 = vsel %vm4187, %v4146, %v2698
    %v4212 = vsel %vm4187, %v4147, %v2700
    %v4213 = vsel %vm4187, %v4148, %v2702
    %v4214 = vsel %vm4187, %v4149, %v2704
    %v4215 = vsel %vm4187, %v4150, %v2706
    %v4216 = vsel %vm4187, %v4151, %v2708
    %v4217 = vsel %vm4187, %v4152, %v2710
    %v4218 = vsel %vm4187, %v4153, %v2712
    %v4219 = vsel %vm4187, %v4154, %v2714
    %v4220 = vsel %vm4187, %v4155, %v2716
    %v4221 = vsel %vm4187, %v4156, %v2718
    %v4222 = vsel %vm4187, %v4157, %v2720
    %v4223 = vsel %vm4187, %v4158, %v2722
    %v4224 = vsel %vm4187, %v4159, %v2724
    %v4225 = vsel %vm4187, %v4160, %v2726
    %v4226 = vsel %vm4187, %v4161, %v2728
    %v4227 = vsel %vm4187, %v4162, %v2730
    %v4228 = vsel %vm4187, %v4163, %v2732
    %v4229 = vsel %vm4187, %v4164, %v2734
    %v4230 = vsel %vm4187, %v4165, %v2736
    %v4231 = vsel %vm4187, %v4166, %v2738
    %v4232 = vsel %vm4187, %v4167, %v2740
    %v4233 = vsel %vm4187, %v4168, %v2742
    %v4234 = vsel %vm4187, %v4169, %v2744
    %v4235 = vsel %vm4187, %v4170, %v2746
    %v4236 = vsel %vm4187, %v4171, %v2748
    %v4237 = vsel %vm4187, %v4172, %v2750
    %v4238 = vsel %vm4187, %v4173, %v2752
    %v4239 = vsel %vm4187, %v4174, %v2754
    %v4240 = vsel %vm4187, %v4175, %v2756
    %v4241 = vsel %vm4187, %v4176, %v2758
    %v4242 = vsel %vm4187, %v4177, %v2760
    %v4243 = vsel %vm4187, %v4178, %v2762
    %v4244 = vsel %vm4187, %v4179, %v2764
    %v4245 = vsel %vm4187, %v4180, %v2766
    %v4246 = vsel %vm4187, %v4181, %v2768
    %v4247 = vsel %vm4187, %v4182, %v2770
    %v4248 = vsel %vm4187, %v4183, %v2772
    %v4249 = vsel %vm4187, %v4184, %v2774
    %v4250 = vsel %vm4187, %v4185, %v2776
    %v4251 = vsel %vm4187, %v4186, %v2778
    %vm4252 = vcmask 392192
    %v4253 = vsel %vm4252, %v4188, %v2908
    %v4254 = vsel %vm4252, %v4189, %v2910
    %v4255 = vsel %vm4252, %v4190, %v2912
    %v4256 = vsel %vm4252, %v4191, %v2914
    %v4257 = vsel %vm4252, %v4192, %v2916
    %v4258 = vsel %vm4252, %v4193, %v2918
    %v4259 = vsel %vm4252, %v4194, %v2920
    %v4260 = vsel %vm4252, %v4195, %v2922
    %v4261 = vsel %vm4252, %v4196, %v2924
    %v4262 = vsel %vm4252, %v4197, %v2926
    %v4263 = vsel %vm4252, %v4198, %v2928
    %v4264 = vsel %vm4252, %v4199, %v2930
    %v4265 = vsel %vm4252, %v4200, %v2932
    %v4266 = vsel %vm4252, %v4201, %v2934
    %v4267 = vsel %vm4252, %v4202, %v2936
    %v4268 = vsel %vm4252, %v4203, %v2938
    %v4269 = vsel %vm4252, %v4204, %v2940
    %v4270 = vsel %vm4252, %v4205, %v2942
    %v4271 = vsel %vm4252, %v4206, %v2944
    %v4272 = vsel %vm4252, %v4207, %v2946
    %v4273 = vsel %vm4252, %v4208, %v2948
    %v4274 = vsel %vm4252, %v4209, %v2950
    %v4275 = vsel %vm4252, %v4210, %v2952
    %v4276 = vsel %vm4252, %v4211, %v2954
    %v4277 = vsel %vm4252, %v4212, %v2956
    %v4278 = vsel %vm4252, %v4213, %v2958
    %v4279 = vsel %vm4252, %v4214, %v2960
    %v4280 = vsel %vm4252, %v4215, %v2962
    %v4281 = vsel %vm4252, %v4216, %v2964
    %v4282 = vsel %vm4252, %v4217, %v2966
    %v4283 = vsel %vm4252, %v4218, %v2968
    %v4284 = vsel %vm4252, %v4219, %v2970
    %v4285 = vsel %vm4252, %v4220, %v2972
    %v4286 = vsel %vm4252, %v4221, %v2974
    %v4287 = vsel %vm4252, %v4222, %v2976
    %v4288 = vsel %vm4252, %v4223, %v2978
    %v4289 = vsel %vm4252, %v4224, %v2980
    %v4290 = vsel %vm4252, %v4225, %v2982
    %v4291 = vsel %vm4252, %v4226, %v2984
    %v4292 = vsel %vm4252, %v4227, %v2986
    %v4293 = vsel %vm4252, %v4228, %v2988
    %v4294 = vsel %vm4252, %v4229, %v2990
    %v4295 = vsel %vm4252, %v4230, %v2992
    %v4296 = vsel %vm4252, %v4231, %v2994
    %v4297 = vsel %vm4252, %v4232, %v2996
    %v4298 = vsel %vm4252, %v4233, %v2998
    %v4299 = vsel %vm4252, %v4234, %v3000
    %v4300 = vsel %vm4252, %v4235, %v3002
    %v4301 = vsel %vm4252, %v4236, %v3004
    %v4302 = vsel %vm4252, %v4237, %v3006
    %v4303 = vsel %vm4252, %v4238, %v3008
    %v4304 = vsel %vm4252, %v4239, %v3010
    %v4305 = vsel %vm4252, %v4240, %v3012
    %v4306 = vsel %vm4252, %v4241, %v3014
    %v4307 = vsel %vm4252, %v4242, %v3016
    %v4308 = vsel %vm4252, %v4243, %v3018
    %v4309 = vsel %vm4252, %v4244, %v3020
    %v4310 = vsel %vm4252, %v4245, %v3022
    %v4311 = vsel %vm4252, %v4246, %v3024
    %v4312 = vsel %vm4252, %v4247, %v3026
    %v4313 = vsel %vm4252, %v4248, %v3028
    %v4314 = vsel %vm4252, %v4249, %v3030
    %v4315 = vsel %vm4252, %v4250, %v3032
    %v4316 = vsel %vm4252, %v4251, %v3034
    %vm4317 = vcmask 523264
    %v4318 = vsel %vm4317, %v4253, %v3164
    %v4319 = vsel %vm4317, %v4254, %v3166
    %v4320 = vsel %vm4317, %v4255, %v3168
    %v4321 = vsel %vm4317, %v4256, %v3170
    %v4322 = vsel %vm4317, %v4257, %v3172
    %v4323 = vsel %vm4317, %v4258, %v3174
    %v4324 = vsel %vm4317, %v4259, %v3176
    %v4325 = vsel %vm4317, %v4260, %v3178
    %v4326 = vsel %vm4317, %v4261, %v3180
    %v4327 = vsel %vm4317, %v4262, %v3182
    %v4328 = vsel %vm4317, %v4263, %v3184
    %v4329 = vsel %vm4317, %v4264, %v3186
    %v4330 = vsel %vm4317, %v4265, %v3188
    %v4331 = vsel %vm4317, %v4266, %v3190
    %v4332 = vsel %vm4317, %v4267, %v3192
    %v4333 = vsel %vm4317, %v4268, %v3194
    %v4334 = vsel %vm4317, %v4269, %v3196
    %v4335 = vsel %vm4317, %v4270, %v3198
    %v4336 = vsel %vm4317, %v4271, %v3200
    %v4337 = vsel %vm4317, %v4272, %v3202
    %v4338 = vsel %vm4317, %v4273, %v3204
    %v4339 = vsel %vm4317, %v4274, %v3206
    %v4340 = vsel %vm4317, %v4275, %v3208
    %v4341 = vsel %vm4317, %v4276, %v3210
    %v4342 = vsel %vm4317, %v4277, %v3212
    %v4343 = vsel %vm4317, %v4278, %v3214
    %v4344 = vsel %vm4317, %v4279, %v3216
    %v4345 = vsel %vm4317, %v4280, %v3218
    %v4346 = vsel %vm4317, %v4281, %v3220
    %v4347 = vsel %vm4317, %v4282, %v3222
    %v4348 = vsel %vm4317, %v4283, %v3224
    %v4349 = vsel %vm4317, %v4284, %v3226
    %v4350 = vsel %vm4317, %v4285, %v3228
    %v4351 = vsel %vm4317, %v4286, %v3230
    %v4352 = vsel %vm4317, %v4287, %v3232
    %v4353 = vsel %vm4317, %v4288, %v3234
    %v4354 = vsel %vm4317, %v4289, %v3236
    %v4355 = vsel %vm4317, %v4290, %v3238
    %v4356 = vsel %vm4317, %v4291, %v3240
    %v4357 = vsel %vm4317, %v4292, %v3242
    %v4358 = vsel %vm4317, %v4293, %v3244
    %v4359 = vsel %vm4317, %v4294, %v3246
    %v4360 = vsel %vm4317, %v4295, %v3248
    %v4361 = vsel %vm4317, %v4296, %v3250
    %v4362 = vsel %vm4317, %v4297, %v3252
    %v4363 = vsel %vm4317, %v4298, %v3254
    %v4364 = vsel %vm4317, %v4299, %v3256
    %v4365 = vsel %vm4317, %v4300, %v3258
    %v4366 = vsel %vm4317, %v4301, %v3260
    %v4367 = vsel %vm4317, %v4302, %v3262
    %v4368 = vsel %vm4317, %v4303, %v3264
    %v4369 = vsel %vm4317, %v4304, %v3266
    %v4370 = vsel %vm4317, %v4305, %v3268
    %v4371 = vsel %vm4317, %v4306, %v3270
    %v4372 = vsel %vm4317, %v4307, %v3272
    %v4373 = vsel %vm4317, %v4308, %v3274
    %v4374 = vsel %vm4317, %v4309, %v3276
    %v4375 = vsel %vm4317, %v4310, %v3278
    %v4376 = vsel %vm4317, %v4311, %v3280
    %v4377 = vsel %vm4317, %v4312, %v3282
    %v4378 = vsel %vm4317, %v4313, %v3284
    %v4379 = vsel %vm4317, %v4314, %v3286
    %v4380 = vsel %vm4317, %v4315, %v3288
    %v4381 = vsel %vm4317, %v4316, %v3290
    %vm4382 = vcmask 654336
    %v4383 = vsel %vm4382, %v4318, %v3420
    %v4384 = vsel %vm4382, %v4319, %v3422
    %v4385 = vsel %vm4382, %v4320, %v3424
    %v4386 = vsel %vm4382, %v4321, %v3426
    %v4387 = vsel %vm4382, %v4322, %v3428
    %v4388 = vsel %vm4382, %v4323, %v3430
    %v4389 = vsel %vm4382, %v4324, %v3432
    %v4390 = vsel %vm4382, %v4325, %v3434
    %v4391 = vsel %vm4382, %v4326, %v3436
    %v4392 = vsel %vm4382, %v4327, %v3438
    %v4393 = vsel %vm4382, %v4328, %v3440
    %v4394 = vsel %vm4382, %v4329, %v3442
    %v4395 = vsel %vm4382, %v4330, %v3444
    %v4396 = vsel %vm4382, %v4331, %v3446
    %v4397 = vsel %vm4382, %v4332, %v3448
    %v4398 = vsel %vm4382, %v4333, %v3450
    %v4399 = vsel %vm4382, %v4334, %v3452
    %v4400 = vsel %vm4382, %v4335, %v3454
    %v4401 = vsel %vm4382, %v4336, %v3456
    %v4402 = vsel %vm4382, %v4337, %v3458
    %v4403 = vsel %vm4382, %v4338, %v3460
    %v4404 = vsel %vm4382, %v4339, %v3462
    %v4405 = vsel %vm4382, %v4340, %v3464
    %v4406 = vsel %vm4382, %v4341, %v3466
    %v4407 = vsel %vm4382, %v4342, %v3468
    %v4408 = vsel %vm4382, %v4343, %v3470
    %v4409 = vsel %vm4382, %v4344, %v3472
    %v4410 = vsel %vm4382, %v4345, %v3474
    %v4411 = vsel %vm4382, %v4346, %v3476
    %v4412 = vsel %vm4382, %v4347, %v3478
    %v4413 = vsel %vm4382, %v4348, %v3480
    %v4414 = vsel %vm4382, %v4349, %v3482
    %v4415 = vsel %vm4382, %v4350, %v3484
    %v4416 = vsel %vm4382, %v4351, %v3486
    %v4417 = vsel %vm4382, %v4352, %v3488
    %v4418 = vsel %vm4382, %v4353, %v3490
    %v4419 = vsel %vm4382, %v4354, %v3492
    %v4420 = vsel %vm4382, %v4355, %v3494
    %v4421 = vsel %vm4382, %v4356, %v3496
    %v4422 = vsel %vm4382, %v4357, %v3498
    %v4423 = vsel %vm4382, %v4358, %v3500
    %v4424 = vsel %vm4382, %v4359, %v3502
    %v4425 = vsel %vm4382, %v4360, %v3504
    %v4426 = vsel %vm4382, %v4361, %v3506
    %v4427 = vsel %vm4382, %v4362, %v3508
    %v4428 = vsel %vm4382, %v4363, %v3510
    %v4429 = vsel %vm4382, %v4364, %v3512
    %v4430 = vsel %vm4382, %v4365, %v3514
    %v4431 = vsel %vm4382, %v4366, %v3516
    %v4432 = vsel %vm4382, %v4367, %v3518
    %v4433 = vsel %vm4382, %v4368, %v3520
    %v4434 = vsel %vm4382, %v4369, %v3522
    %v4435 = vsel %vm4382, %v4370, %v3524
    %v4436 = vsel %vm4382, %v4371, %v3526
    %v4437 = vsel %vm4382, %v4372, %v3528
    %v4438 = vsel %vm4382, %v4373, %v3530
    %v4439 = vsel %vm4382, %v4374, %v3532
    %v4440 = vsel %vm4382, %v4375, %v3534
    %v4441 = vsel %vm4382, %v4376, %v3536
    %v4442 = vsel %vm4382, %v4377, %v3538
    %v4443 = vsel %vm4382, %v4378, %v3540
    %v4444 = vsel %vm4382, %v4379, %v3542
    %v4445 = vsel %vm4382, %v4380, %v3544
    %v4446 = vsel %vm4382, %v4381, %v3546
    %vm4447 = vcmask 785408
    %v4448 = vsel %vm4447, %v4383, %v3676
    %v4449 = vsel %vm4447, %v4384, %v3678
    %v4450 = vsel %vm4447, %v4385, %v3680
    %v4451 = vsel %vm4447, %v4386, %v3682
    %v4452 = vsel %vm4447, %v4387, %v3684
    %v4453 = vsel %vm4447, %v4388, %v3686
    %v4454 = vsel %vm4447, %v4389, %v3688
    %v4455 = vsel %vm4447, %v4390, %v3690
    %v4456 = vsel %vm4447, %v4391, %v3692
    %v4457 = vsel %vm4447, %v4392, %v3694
    %v4458 = vsel %vm4447, %v4393, %v3696
    %v4459 = vsel %vm4447, %v4394, %v3698
    %v4460 = vsel %vm4447, %v4395, %v3700
    %v4461 = vsel %vm4447, %v4396, %v3702
    %v4462 = vsel %vm4447, %v4397, %v3704
    %v4463 = vsel %vm4447, %v4398, %v3706
    %v4464 = vsel %vm4447, %v4399, %v3708
    %v4465 = vsel %vm4447, %v4400, %v3710
    %v4466 = vsel %vm4447, %v4401, %v3712
    %v4467 = vsel %vm4447, %v4402, %v3714
    %v4468 = vsel %vm4447, %v4403, %v3716
    %v4469 = vsel %vm4447, %v4404, %v3718
    %v4470 = vsel %vm4447, %v4405, %v3720
    %v4471 = vsel %vm4447, %v4406, %v3722
    %v4472 = vsel %vm4447, %v4407, %v3724
    %v4473 = vsel %vm4447, %v4408, %v3726
    %v4474 = vsel %vm4447, %v4409, %v3728
    %v4475 = vsel %vm4447, %v4410, %v3730
    %v4476 = vsel %vm4447, %v4411, %v3732
    %v4477 = vsel %vm4447, %v4412, %v3734
    %v4478 = vsel %vm4447, %v4413, %v3736
    %v4479 = vsel %vm4447, %v4414, %v3738
    %v4480 = vsel %vm4447, %v4415, %v3740
    %v4481 = vsel %vm4447, %v4416, %v3742
    %v4482 = vsel %vm4447, %v4417, %v3744
    %v4483 = vsel %vm4447, %v4418, %v3746
    %v4484 = vsel %vm4447, %v4419, %v3748
    %v4485 = vsel %vm4447, %v4420, %v3750
    %v4486 = vsel %vm4447, %v4421, %v3752
    %v4487 = vsel %vm4447, %v4422, %v3754
    %v4488 = vsel %vm4447, %v4423, %v3756
    %v4489 = vsel %vm4447, %v4424, %v3758
    %v4490 = vsel %vm4447, %v4425, %v3760
    %v4491 = vsel %vm4447, %v4426, %v3762
    %v4492 = vsel %vm4447, %v4427, %v3764
    %v4493 = vsel %vm4447, %v4428, %v3766
    %v4494 = vsel %vm4447, %v4429, %v3768
    %v4495 = vsel %vm4447, %v4430, %v3770
    %v4496 = vsel %vm4447, %v4431, %v3772
    %v4497 = vsel %vm4447, %v4432, %v3774
    %v4498 = vsel %vm4447, %v4433, %v3776
    %v4499 = vsel %vm4447, %v4434, %v3778
    %v4500 = vsel %vm4447, %v4435, %v3780
    %v4501 = vsel %vm4447, %v4436, %v3782
    %v4502 = vsel %vm4447, %v4437, %v3784
    %v4503 = vsel %vm4447, %v4438, %v3786
    %v4504 = vsel %vm4447, %v4439, %v3788
    %v4505 = vsel %vm4447, %v4440, %v3790
    %v4506 = vsel %vm4447, %v4441, %v3792
    %v4507 = vsel %vm4447, %v4442, %v3794
    %v4508 = vsel %vm4447, %v4443, %v3796
    %v4509 = vsel %vm4447, %v4444, %v3798
    %v4510 = vsel %vm4447, %v4445, %v3800
    %v4511 = vsel %vm4447, %v4446, %v3802
    %vm4512 = vcmask 916480
    %v4513 = vsel %vm4512, %v4448, %v3932
    %v4514 = vsel %vm4512, %v4449, %v3934
    %v4515 = vsel %vm4512, %v4450, %v3936
    %v4516 = vsel %vm4512, %v4451, %v3938
    %v4517 = vsel %vm4512, %v4452, %v3940
    %v4518 = vsel %vm4512, %v4453, %v3942
    %v4519 = vsel %vm4512, %v4454, %v3944
    %v4520 = vsel %vm4512, %v4455, %v3946
    %v4521 = vsel %vm4512, %v4456, %v3948
    %v4522 = vsel %vm4512, %v4457, %v3950
    %v4523 = vsel %vm4512, %v4458, %v3952
    %v4524 = vsel %vm4512, %v4459, %v3954
    %v4525 = vsel %vm4512, %v4460, %v3956
    %v4526 = vsel %vm4512, %v4461, %v3958
    %v4527 = vsel %vm4512, %v4462, %v3960
    %v4528 = vsel %vm4512, %v4463, %v3962
    %v4529 = vsel %vm4512, %v4464, %v3964
    %v4530 = vsel %vm4512, %v4465, %v3966
    %v4531 = vsel %vm4512, %v4466, %v3968
    %v4532 = vsel %vm4512, %v4467, %v3970
    %v4533 = vsel %vm4512, %v4468, %v3972
    %v4534 = vsel %vm4512, %v4469, %v3974
    %v4535 = vsel %vm4512, %v4470, %v3976
    %v4536 = vsel %vm4512, %v4471, %v3978
    %v4537 = vsel %vm4512, %v4472, %v3980
    %v4538 = vsel %vm4512, %v4473, %v3982
    %v4539 = vsel %vm4512, %v4474, %v3984
    %v4540 = vsel %vm4512, %v4475, %v3986
    %v4541 = vsel %vm4512, %v4476, %v3988
    %v4542 = vsel %vm4512, %v4477, %v3990
    %v4543 = vsel %vm4512, %v4478, %v3992
    %v4544 = vsel %vm4512, %v4479, %v3994
    %v4545 = vsel %vm4512, %v4480, %v3996
    %v4546 = vsel %vm4512, %v4481, %v3998
    %v4547 = vsel %vm4512, %v4482, %v4000
    %v4548 = vsel %vm4512, %v4483, %v4002
    %v4549 = vsel %vm4512, %v4484, %v4004
    %v4550 = vsel %vm4512, %v4485, %v4006
    %v4551 = vsel %vm4512, %v4486, %v4008
    %v4552 = vsel %vm4512, %v4487, %v4010
    %v4553 = vsel %vm4512, %v4488, %v4012
    %v4554 = vsel %vm4512, %v4489, %v4014
    %v4555 = vsel %vm4512, %v4490, %v4016
    %v4556 = vsel %vm4512, %v4491, %v4018
    %v4557 = vsel %vm4512, %v4492, %v4020
    %v4558 = vsel %vm4512, %v4493, %v4022
    %v4559 = vsel %vm4512, %v4494, %v4024
    %v4560 = vsel %vm4512, %v4495, %v4026
    %v4561 = vsel %vm4512, %v4496, %v4028
    %v4562 = vsel %vm4512, %v4497, %v4030
    %v4563 = vsel %vm4512, %v4498, %v4032
    %v4564 = vsel %vm4512, %v4499, %v4034
    %v4565 = vsel %vm4512, %v4500, %v4036
    %v4566 = vsel %vm4512, %v4501, %v4038
    %v4567 = vsel %vm4512, %v4502, %v4040
    %v4568 = vsel %vm4512, %v4503, %v4042
    %v4569 = vsel %vm4512, %v4504, %v4044
    %v4570 = vsel %vm4512, %v4505, %v4046
    %v4571 = vsel %vm4512, %v4506, %v4048
    %v4572 = vsel %vm4512, %v4507, %v4050
    %v4573 = vsel %vm4512, %v4508, %v4052
    %v4574 = vsel %vm4512, %v4509, %v4054
    %v4575 = vsel %vm4512, %v4510, %v4056
    %v4576 = vsel %vm4512, %v4511, %v4058
    %v4577 = vpack.c.bf16 %v4514, %v4513
    %v4578 = vpack.c.bf16 %v2268, %v2267
    %v4579 = vpack.c.bf16 %v4516, %v4515
    %v4580 = vpack.c.bf16 %v2270, %v2269
    %v4581 = vpack.c.bf16 %v4518, %v4517
    %v4582 = vpack.c.bf16 %v2272, %v2271
    %v4583 = vpack.c.bf16 %v4520, %v4519
    %v4584 = vpack.c.bf16 %v2274, %v2273
    %v4585 = vpack.c.bf16 %v4522, %v4521
    %v4586 = vpack.c.bf16 %v2276, %v2275
    %v4587 = vpack.c.bf16 %v4524, %v4523
    %v4588 = vpack.c.bf16 %v2278, %v2277
    %v4589 = vpack.c.bf16 %v4526, %v4525
    %v4590 = vpack.c.bf16 %v2280, %v2279
    %v4591 = vpack.c.bf16 %v4528, %v4527
    %v4592 = vpack.c.bf16 %v2282, %v2281
    %v4593 = vpack.c.bf16 %v4530, %v4529
    %v4594 = vpack.c.bf16 %v2284, %v2283
    %v4595 = vpack.c.bf16 %v4532, %v4531
    %v4596 = vpack.c.bf16 %v2286, %v2285
    %v4597 = vpack.c.bf16 %v4534, %v4533
    %v4598 = vpack.c.bf16 %v2288, %v2287
    %v4599 = vpack.c.bf16 %v4536, %v4535
    %v4600 = vpack.c.bf16 %v2290, %v2289
    %v4601 = vpack.c.bf16 %v4538, %v4537
    %v4602 = vpack.c.bf16 %v2292, %v2291
    %v4603 = vpack.c.bf16 %v4540, %v4539
    %v4604 = vpack.c.bf16 %v2294, %v2293
    %v4605 = vpack.c.bf16 %v4542, %v4541
    %v4606 = vpack.c.bf16 %v2296, %v2295
    %v4607 = vpack.c.bf16 %v4544, %v4543
    %v4608 = vpack.c.bf16 %v2298, %v2297
    %v4609 = vpack.c.bf16 %v4546, %v4545
    %v4610 = vpack.c.bf16 %v2300, %v2299
    %v4611 = vpack.c.bf16 %v4548, %v4547
    %v4612 = vpack.c.bf16 %v2302, %v2301
    %v4613 = vpack.c.bf16 %v4550, %v4549
    %v4614 = vpack.c.bf16 %v2304, %v2303
    %v4615 = vpack.c.bf16 %v4552, %v4551
    %v4616 = vpack.c.bf16 %v2306, %v2305
    %v4617 = vpack.c.bf16 %v4554, %v4553
    %v4618 = vpack.c.bf16 %v2308, %v2307
    %v4619 = vpack.c.bf16 %v4556, %v4555
    %v4620 = vpack.c.bf16 %v2310, %v2309
    %v4621 = vpack.c.bf16 %v4558, %v4557
    %v4622 = vpack.c.bf16 %v2312, %v2311
    %v4623 = vpack.c.bf16 %v4560, %v4559
    %v4624 = vpack.c.bf16 %v2314, %v2313
    %v4625 = vpack.c.bf16 %v4562, %v4561
    %v4626 = vpack.c.bf16 %v2316, %v2315
    %v4627 = vpack.c.bf16 %v4564, %v4563
    %v4628 = vpack.c.bf16 %v2318, %v2317
    %v4629 = vpack.c.bf16 %v4566, %v4565
    %v4630 = vpack.c.bf16 %v2320, %v2319
    %v4631 = vpack.c.bf16 %v4568, %v4567
    %v4632 = vpack.c.bf16 %v2322, %v2321
    %v4633 = vpack.c.bf16 %v4570, %v4569
    %v4634 = vpack.c.bf16 %v2324, %v2323
    %v4635 = vpack.c.bf16 %v4572, %v4571
    %v4636 = vpack.c.bf16 %v2326, %v2325
    %v4637 = vpack.c.bf16 %v4574, %v4573
    %v4638 = vpack.c.bf16 %v2328, %v2327
    %v4639 = vpack.c.bf16 %v4576, %v4575
    %v4640 = vpack.c.bf16 %v2330, %v2329
    %v4641 = vld [vmem:[%s1] sm:$0xff]
    %v4642 = vld [vmem:[%s1 + $0x8] sm:$0xff]
    %v4643 = vld [vmem:[%s1 + $0x10] sm:$0xff]
    %v4644 = vld [vmem:[%s1 + $0x18] sm:$0xff]
    %v4649 = vunpack.c.l.b16 %v4641
    %v4650 = vunpack.c.h.b16 %v4641
    %v4651 = vunpack.c.l.b16 %v4642
    %v4652 = vunpack.c.h.b16 %v4642
    %v4653 = vunpack.c.l.b16 %v4643
    %v4654 = vunpack.c.h.b16 %v4643
    %v4655 = vunpack.c.l.b16 %v4644
    %v4656 = vunpack.c.h.b16 %v4644
    %v4657 = vpack.c.b16 %v4651, %v4649
    %v4658 = vpack.c.b16 %v4652, %v4650
    %v4659 = vpack.c.b16 %v4655, %v4653
    %v4660 = vpack.c.b16 %v4656, %v4654
    %v4664 = vsel %vm102, %v4658, 0
    %v4667 = vsel %vm102, %v4660, 0
    %v4670 = vsel %vm102, %v4578, 0
    %v4673 = vsel %vm102, %v4580, 0
    %v4676 = vsel %vm102, %v4582, 0
    %v4679 = vsel %vm102, %v4584, 0
    %v4682 = vsel %vm102, %v4586, 0
    %v4685 = vsel %vm102, %v4588, 0
    %v4688 = vsel %vm102, %v4590, 0
    %v4691 = vsel %vm102, %v4592, 0
    %v4694 = vsel %vm102, %v4594, 0
    %v4697 = vsel %vm102, %v4596, 0
    %v4700 = vsel %vm102, %v4598, 0
    %v4703 = vsel %vm102, %v4600, 0
    %v4706 = vsel %vm102, %v4602, 0
    %v4709 = vsel %vm102, %v4604, 0
    %v4712 = vsel %vm102, %v4606, 0
    %v4715 = vsel %vm102, %v4608, 0
    %v4718 = vsel %vm102, %v4610, 0
    %v4721 = vsel %vm102, %v4612, 0
    %v4724 = vsel %vm102, %v4614, 0
    %v4727 = vsel %vm102, %v4616, 0
    %v4730 = vsel %vm102, %v4618, 0
    %v4733 = vsel %vm102, %v4620, 0
    %v4736 = vsel %vm102, %v4622, 0
    %v4739 = vsel %vm102, %v4624, 0
    %v4742 = vsel %vm102, %v4626, 0
    %v4745 = vsel %vm102, %v4628, 0
    %v4748 = vsel %vm102, %v4630, 0
    %v4751 = vsel %vm102, %v4632, 0
    %v4754 = vsel %vm102, %v4634, 0
    %v4757 = vsel %vm102, %v4636, 0
    %v4760 = vsel %vm102, %v4638, 0
    %v4763 = vsel %vm102, %v4640, 0
    %4765 = vmatprep.subr.bf16.mxu0 %v4670
    %4766 = vmatpush1.bf16.xpose.msra.mxu0 %v4577
    %4767 = vmatprep.subr.bf16.mxu0 %v4673
    %4768 = vmatpush1.bf16.xpose.msra.mxu0 %v4579
    %4769 = vmatprep.subr.bf16.mxu0 %v4676
    %4770 = vmatpush1.bf16.xpose.msra.mxu0 %v4581
    %4771 = vmatprep.subr.bf16.mxu0 %v4679
    %4772 = vmatpush1.bf16.xpose.msra.mxu0 %v4583
    %4773 = vmatprep.subr.bf16.mxu0 %v4682
    %4774 = vmatpush1.bf16.xpose.msra.mxu0 %v4585
    %4775 = vmatprep.subr.bf16.mxu0 %v4685
    %4776 = vmatpush1.bf16.xpose.msra.mxu0 %v4587
    %4777 = vmatprep.subr.bf16.mxu0 %v4688
    %4778 = vmatpush1.bf16.xpose.msra.mxu0 %v4589
    %4779 = vmatprep.subr.bf16.mxu0 %v4691
    %4780 = vmatpush1.bf16.xpose.msra.mxu0 %v4591
    %4781 = vmatprep.subr.bf16.mxu0 %v4694
    %4782 = vmatpush1.bf16.xpose.msra.mxu0 %v4593
    %4783 = vmatprep.subr.bf16.mxu0 %v4697
    %4784 = vmatpush1.bf16.xpose.msra.mxu0 %v4595
    %4785 = vmatprep.subr.bf16.mxu0 %v4700
    %4786 = vmatpush1.bf16.xpose.msra.mxu0 %v4597
    %4787 = vmatprep.subr.bf16.mxu0 %v4703
    %4788 = vmatpush1.bf16.xpose.msra.mxu0 %v4599
    %4789 = vmatprep.subr.bf16.mxu0 %v4706
    %4790 = vmatpush1.bf16.xpose.msra.mxu0 %v4601
    %4791 = vmatprep.subr.bf16.mxu0 %v4709
    %4792 = vmatpush1.bf16.xpose.msra.mxu0 %v4603
    %4793 = vmatprep.subr.bf16.mxu0 %v4712
    %4794 = vmatpush1.bf16.xpose.msra.mxu0 %v4605
    %4795 = vmatprep.subr.bf16.mxu0 %v4715
    %4796 = vmatpush1.bf16.xpose.msra.mxu0 %v4607
    %4797 = vmatprep.mubr.bf16.mxu0 %v4664
    %4798 = vmatmul.mubr.bf16.gmra.mrb[0].mxu0 %v4657
    %v4799 = vpop.f32.mrb[0].mxu0
    %v4800 = vadd.f32 0.0, %v4799
    %v4801 = vpop.f32.mrb[0].mxu0
    %v4802 = vadd.f32 0.0, %v4801
    %v4803 = vpop.f32.mrb[0].mxu0
    %v4804 = vadd.f32 0.0, %v4803
    %v4805 = vpop.f32.mrb[0].mxu0
    %v4806 = vadd.f32 0.0, %v4805
    %4807 = vmatprep.mubr.bf16.mxu0 %v4667
    %4808 = vmatmul.mubr.bf16.gmra.mrb[0].mxu0 %v4659
    %v4809 = vpop.f32.mrb[0].mxu0
    %v4810 = vadd.f32 0.0, %v4809
    %v4811 = vpop.f32.mrb[0].mxu0
    %v4812 = vadd.f32 0.0, %v4811
    %v4813 = vpop.f32.mrb[0].mxu0
    %v4814 = vadd.f32 0.0, %v4813
    %v4815 = vpop.f32.mrb[0].mxu0
    %v4816 = vadd.f32 0.0, %v4815
    %4817 = vdwg.mxu0
    %4818 = vmatprep.subr.bf16.mxu0 %v4718
    %4819 = vmatpush1.bf16.xpose.msra.mxu0 %v4609
    %4820 = vmatprep.subr.bf16.mxu0 %v4721
    %4821 = vmatpush1.bf16.xpose.msra.mxu0 %v4611
    %4822 = vmatprep.subr.bf16.mxu0 %v4724
    %4823 = vmatpush1.bf16.xpose.msra.mxu0 %v4613
    %4824 = vmatprep.subr.bf16.mxu0 %v4727
    %4825 = vmatpush1.bf16.xpose.msra.mxu0 %v4615
    %4826 = vmatprep.subr.bf16.mxu0 %v4730
    %4827 = vmatpush1.bf16.xpose.msra.mxu0 %v4617
    %4828 = vmatprep.subr.bf16.mxu0 %v4733
    %4829 = vmatpush1.bf16.xpose.msra.mxu0 %v4619
    %4830 = vmatprep.subr.bf16.mxu0 %v4736
    %4831 = vmatpush1.bf16.xpose.msra.mxu0 %v4621
    %4832 = vmatprep.subr.bf16.mxu0 %v4739
    %4833 = vmatpush1.bf16.xpose.msra.mxu0 %v4623
    %4834 = vmatprep.subr.bf16.mxu0 %v4742
    %4835 = vmatpush1.bf16.xpose.msra.mxu0 %v4625
    %4836 = vmatprep.subr.bf16.mxu0 %v4745
    %4837 = vmatpush1.bf16.xpose.msra.mxu0 %v4627
    %4838 = vmatprep.subr.bf16.mxu0 %v4748
    %4839 = vmatpush1.bf16.xpose.msra.mxu0 %v4629
    %4840 = vmatprep.subr.bf16.mxu0 %v4751
    %4841 = vmatpush1.bf16.xpose.msra.mxu0 %v4631
    %4842 = vmatprep.subr.bf16.mxu0 %v4754
    %4843 = vmatpush1.bf16.xpose.msra.mxu0 %v4633
    %4844 = vmatprep.subr.bf16.mxu0 %v4757
    %4845 = vmatpush1.bf16.xpose.msra.mxu0 %v4635
    %4846 = vmatprep.subr.bf16.mxu0 %v4760
    %4847 = vmatpush1.bf16.xpose.msra.mxu0 %v4637
    %4848 = vmatprep.subr.bf16.mxu0 %v4763
    %4849 = vmatpush1.bf16.xpose.msra.mxu0 %v4639
    %4850 = vmatprep.mubr.bf16.mxu0 %v4664
    %4851 = vmatmul.mubr.bf16.gmra.mrb[0].mxu0 %v4657
    %v4852 = vpop.f32.mrb[0].mxu0
    %v4853 = vadd.f32 0.0, %v4852
    %v4854 = vpop.f32.mrb[0].mxu0
    %v4855 = vadd.f32 0.0, %v4854
    %v4856 = vpop.f32.mrb[0].mxu0
    %v4857 = vadd.f32 0.0, %v4856
    %v4858 = vpop.f32.mrb[0].mxu0
    %v4859 = vadd.f32 0.0, %v4858
    %4860 = vmatprep.mubr.bf16.mxu0 %v4667
    %4861 = vmatmul.mubr.bf16.gmra.mrb[0].mxu0 %v4659
    %v4862 = vpop.f32.mrb[0].mxu0
    %v4863 = vadd.f32 0.0, %v4862
    %v4864 = vpop.f32.mrb[0].mxu0
    %v4865 = vadd.f32 0.0, %v4864
    %v4866 = vpop.f32.mrb[0].mxu0
    %v4867 = vadd.f32 0.0, %v4866
    %v4868 = vpop.f32.mrb[0].mxu0
    %v4869 = vadd.f32 0.0, %v4868
    %4870 = vdwg.mxu0
    %v4871 = vld [vmem:[%s4] sm:$0xff]
    %v4872 = vld [vmem:[%s4 + $0x8] sm:$0xff]
    %v4873 = vld [vmem:[%s4 + $0x10] sm:$0xff]
    %v4874 = vld [vmem:[%s4 + $0x18] sm:$0xff]
    %v4875 = vld [vmem:[%s5] sm:$0xff]
    %v4876 = vld [vmem:[%s5 + $0x8] sm:$0xff]
    %v4877 = vld [vmem:[%s5 + $0x10] sm:$0xff]
    %v4878 = vld [vmem:[%s5 + $0x18] sm:$0xff]
    %4880 = vset.pattern.permute.xlu0 0
    %4881 = vperm.xlu0 %4880, %v4871
    %v4882 = vpop.permute.xlu0 %4881
    %4885 = vset.pattern.permute.xlu0 0
    %4886 = vperm.xlu0 %4885, %v4872
    %v4887 = vpop.permute.xlu0 %4886
    %4890 = vset.pattern.permute.xlu0 0
    %4891 = vperm.xlu0 %4890, %v4873
    %v4892 = vpop.permute.xlu0 %4891
    %4895 = vset.pattern.permute.xlu0 0
    %4896 = vperm.xlu0 %4895, %v4874
    %v4897 = vpop.permute.xlu0 %4896
    %v4899 = vmul.f32 %v4800, %v4882
    %v4900 = vmul.f32 %v4802, %v4882
    %v4901 = vmul.f32 %v4804, %v4887
    %v4902 = vmul.f32 %v4806, %v4887
    %v4903 = vmul.f32 %v4810, %v4892
    %v4904 = vmul.f32 %v4812, %v4892
    %v4905 = vmul.f32 %v4814, %v4897
    %v4906 = vmul.f32 %v4816, %v4897
    %4908 = vset.pattern.permute.xlu0 0
    %4909 = vperm.xlu0 %4908, %v4875
    %v4910 = vpop.permute.xlu0 %4909
    %4913 = vset.pattern.permute.xlu0 0
    %4914 = vperm.xlu0 %4913, %v4876
    %v4915 = vpop.permute.xlu0 %4914
    %4918 = vset.pattern.permute.xlu0 0
    %4919 = vperm.xlu0 %4918, %v4877
    %v4920 = vpop.permute.xlu0 %4919
    %4923 = vset.pattern.permute.xlu0 0
    %4924 = vperm.xlu0 %4923, %v4878
    %v4925 = vpop.permute.xlu0 %4924
    %v4927 = vadd.f32 %v4899, %v4910
    %v4928 = vadd.f32 %v4900, %v4910
    %v4929 = vadd.f32 %v4901, %v4915
    %v4930 = vadd.f32 %v4902, %v4915
    %v4931 = vadd.f32 %v4903, %v4920
    %v4932 = vadd.f32 %v4904, %v4920
    %v4933 = vadd.f32 %v4905, %v4925
    %v4934 = vadd.f32 %v4906, %v4925
    %4935 = vst [vmem:[#allocation6] sm:$0xff] %v4927
    %4936 = vst [vmem:[#allocation6 + $0x8] sm:$0xff] %v4928
    %4937 = vst [vmem:[#allocation6 + $0x10] sm:$0xff] %v4929
    %4938 = vst [vmem:[#allocation6 + $0x18] sm:$0xff] %v4930
    %4939 = vst [vmem:[#allocation6 + $0x20] sm:$0xff] %v4931
    %4940 = vst [vmem:[#allocation6 + $0x28] sm:$0xff] %v4932
    %4941 = vst [vmem:[#allocation6 + $0x30] sm:$0xff] %v4933
    %4942 = vst [vmem:[#allocation6 + $0x38] sm:$0xff] %v4934
    %4943 = vset.pattern.permute.xlu0 1
    %4944 = vperm.xlu0 %4943, %v4871
    %v4945 = vpop.permute.xlu0 %4944
    %4947 = vset.pattern.permute.xlu0 1
    %4948 = vperm.xlu0 %4947, %v4872
    %v4949 = vpop.permute.xlu0 %4948
    %4951 = vset.pattern.permute.xlu0 1
    %4952 = vperm.xlu0 %4951, %v4873
    %v4953 = vpop.permute.xlu0 %4952
    %4955 = vset.pattern.permute.xlu0 1
    %4956 = vperm.xlu0 %4955, %v4874
    %v4957 = vpop.permute.xlu0 %4956
    %v4959 = vmul.f32 %v4853, %v4945
    %v4960 = vmul.f32 %v4855, %v4945
    %v4961 = vmul.f32 %v4857, %v4949
    %v4962 = vmul.f32 %v4859, %v4949
    %v4963 = vmul.f32 %v4863, %v4953
    %v4964 = vmul.f32 %v4865, %v4953
    %v4965 = vmul.f32 %v4867, %v4957
    %v4966 = vmul.f32 %v4869, %v4957
    %4967 = vset.pattern.permute.xlu0 1
    %4968 = vperm.xlu0 %4967, %v4875
    %v4969 = vpop.permute.xlu0 %4968
    %4971 = vset.pattern.permute.xlu0 1
    %4972 = vperm.xlu0 %4971, %v4876
    %v4973 = vpop.permute.xlu0 %4972
    %4975 = vset.pattern.permute.xlu0 1
    %4976 = vperm.xlu0 %4975, %v4877
    %v4977 = vpop.permute.xlu0 %4976
    %4979 = vset.pattern.permute.xlu0 1
    %4980 = vperm.xlu0 %4979, %v4878
    %v4981 = vpop.permute.xlu0 %4980
    %v4983 = vadd.f32 %v4959, %v4969
    %v4984 = vadd.f32 %v4960, %v4969
    %v4985 = vadd.f32 %v4961, %v4973
    %v4986 = vadd.f32 %v4962, %v4973
    %v4987 = vadd.f32 %v4963, %v4977
    %v4988 = vadd.f32 %v4964, %v4977
    %v4989 = vadd.f32 %v4965, %v4981
    %v4990 = vadd.f32 %v4966, %v4981
    %s4991 = scalar_lea.vmem [#allocation6], 64
    %4992 = vst [vmem:[%s4991] sm:$0xff] %v4983
    %4993 = vst [vmem:[%s4991 + $0x8] sm:$0xff] %v4984
    %4994 = vst [vmem:[%s4991 + $0x10] sm:$0xff] %v4985
    %4995 = vst [vmem:[%s4991 + $0x18] sm:$0xff] %v4986
    %4996 = vst [vmem:[%s4991 + $0x20] sm:$0xff] %v4987
    %4997 = vst [vmem:[%s4991 + $0x28] sm:$0xff] %v4988
    %4998 = vst [vmem:[%s4991 + $0x30] sm:$0xff] %v4989
    %4999 = vst [vmem:[%s4991 + $0x38] sm:$0xff] %v4990
    // Predicated region
    $region30: #{tpu_custom_call.1} parent=1 // pred_check
      _
    $region31: #{tpu_custom_call.1} parent=1 // pred_check_branch
      %5001 = sbr.rel (0) target = $region33
    $region32: #{tpu_custom_call.1} parent=1 // pred_region
      %s5003 = ssub.s32 2048, 2048
      %5004 = vsyncadd [#allocation5], %s5003
      %s5005 = sshll.u32 [#allocation6], 4
      %s5006 = int_to_ptr.vmem [resolvable:$true] %s5005
      %5011 = dma.vmem_to_hbm [thread:$0]  %s5006, 2048, %s6, [#allocation5], 256, 256, 16
    $region33: #{tpu_custom_call.1} parent=1 // pred_fallthru
      _
    // Predicated region
    $region34: #{tpu_custom_call.1} parent=1 // pred_check
      _
    $region35: #{tpu_custom_call.1} parent=1 // pred_check_branch
      %5013 = sbr.rel (0) target = $region37
    $region36: #{tpu_custom_call.1} parent=1 // pred_region
      %5014 = dma.done [#allocation5], 2048
    $region37: #{tpu_custom_call.1} parent=1 // pred_fallthru
      _
    %5015 = vsyncpa [#allocation4], 1
    %5016 = vsyncpa [#allocation5], 1

</llo_original>
